<compile_context>
chip_gen: v7x
topology: tpu7x:2x2x1
jax: 0.10.0
libtpu: 0.0.40
codegen_flags: <defaults>
</compile_context>

<pallas_src>
import functools

import jax
import jax.numpy as jnp
from jax.experimental import pallas as pl
from jax.experimental.pallas import tpu as pltpu

BN_EPS = 1e-5


# ----------------------------------------------------------------------------
# Fused kernel:
#   y   = relu( BN1( conv3x3(x) ) )           (kept in aligned padded VMEM scratch, bf16)
#   out = relu( BN2( conv3x3(y) ) + BNsc( conv1x1(x) ) )   stored as (Cout, H*W)
# ----------------------------------------------------------------------------
def _residual_block_kernel(x_ref, w1_ref, w2_ref, wsc_ref, sb_ref,
                           out_ref, xpad_ref, ypad_ref,
                           *, H, W, Cin, Cout, C0, WBUF):
    HB = H + 2

    # ---- stage x into the aligned padded scratch; zero ONLY the halo the taps read ----
    x = x_ref[0]                                            # (H, W, Cin) bf16
    zrow_x = jnp.zeros((1, WBUF, Cin), jnp.bfloat16)
    zcol_x = jnp.zeros((HB, 1, Cin), jnp.bfloat16)
    xpad_ref[0:1, :, :] = zrow_x                            # top border row
    xpad_ref[H + 1:H + 2, :, :] = zrow_x                    # bottom border row
    xpad_ref[:, C0 - 1:C0, :] = zcol_x                      # left border column
    xpad_ref[:, C0 + W:C0 + W + 1, :] = zcol_x              # right border column
    xpad_ref[1:H + 1, C0:C0 + W, :] = x                     # sublane-aligned interior store

    # ---- conv1: im2col (H*W, 9*Cin) @ (9*Cin, Cout), bf16 -> f32 ----
    cols1 = [xpad_ref[dy:dy + H, C0 - 1 + dx:C0 - 1 + dx + W, :].reshape(H * W, Cin)
             for dy in range(3) for dx in range(3)]
    col1 = jnp.concatenate(cols1, axis=-1)                  # (H*W, 9*Cin) bf16
    acc1 = jnp.dot(col1, w1_ref[...], preferred_element_type=jnp.float32)

    sb = sb_ref[...]                                        # (8, Cout) f32, rows: s1,b1,s2,b2,ssc,bsc
    y = jnp.maximum(acc1 * sb[0:1, :] + sb[1:2, :], 0.0)    # BN1 + ReLU, f32 epilogue

    # ---- stage conv1 activation into the second padded scratch (halo-only zeroing) ----
    zrow_y = jnp.zeros((1, WBUF, Cout), jnp.bfloat16)
    zcol_y = jnp.zeros((HB, 1, Cout), jnp.bfloat16)
    ypad_ref[0:1, :, :] = zrow_y
    ypad_ref[H + 1:H + 2, :, :] = zrow_y
    ypad_ref[:, C0 - 1:C0, :] = zcol_y
    ypad_ref[:, C0 + W:C0 + W + 1, :] = zcol_y
    ypad_ref[1:H + 1, C0:C0 + W, :] = y.reshape(H, W, Cout).astype(jnp.bfloat16)

    # ---- conv2: im2col (H*W, 9*Cout) @ (9*Cout, Cout), bf16 -> f32 ----
    cols2 = [ypad_ref[dy:dy + H, C0 - 1 + dx:C0 - 1 + dx + W, :].reshape(H * W, Cout)
             for dy in range(3) for dx in range(3)]
    col2 = jnp.concatenate(cols2, axis=-1)                  # (H*W, 9*Cout) bf16
    acc2 = jnp.dot(col2, w2_ref[...], preferred_element_type=jnp.float32)
    main = acc2 * sb[2:3, :] + sb[3:4, :]                   # BN2

    # ---- shortcut: 1x1 conv + BNsc on the (aligned, unpadded) input block ----
    xs = x.reshape(H * W, Cin)
    sc = jnp.dot(xs, wsc_ref[...], preferred_element_type=jnp.float32)
    sc = sc * sb[4:5, :] + sb[5:6, :]

    o = jnp.maximum(main + sc, 0.0)                         # (H*W, Cout) f32

    # ---- transpose to (Cout, H*W) with a tiny MXU identity matmul:
    #      lane-dense HBM store (H*W multiple of 128) + directly NCHW-reshapeable ----
    rows = jax.lax.broadcasted_iota(jnp.int32, (Cout, Cout), 0)
    cols = jax.lax.broadcasted_iota(jnp.int32, (Cout, Cout), 1)
    eye = (rows == cols).astype(jnp.float32)
    o_t = jax.lax.dot_general(eye, o, (((1,), (1,)), ((), ())),
                              preferred_element_type=jnp.float32)   # (Cout, H*W)
    out_ref[0] = o_t.astype(out_ref.dtype)


def residual_block_pallas(x_nchw, p):
    Cout, Cin = p["w1_oihw"].shape[0], p["w1_oihw"].shape[1]
    N, _, H, W = x_nchw.shape

    # conv weights: OIHW -> (KH*KW*Cin, Cout), bf16 for the MXU
    w1 = jnp.transpose(p["w1_oihw"], (2, 3, 1, 0)).reshape(9 * Cin, Cout).astype(jnp.bfloat16)
    w2 = jnp.transpose(p["w2_oihw"], (2, 3, 1, 0)).reshape(9 * Cout, Cout).astype(jnp.bfloat16)
    wsc = jnp.transpose(p["wsc_oihw"][:, :, 0, 0], (1, 0)).astype(jnp.bfloat16)   # (Cin, Cout)

    # fold BN (+ conv bias) into per-channel scale/shift, packed into ONE (8, Cout) input
    s1, b1 = _fold_bn(p["b1"], *p["bn1"])
    s2, b2 = _fold_bn(p["b2"], *p["bn2"])
    ssc, bsc = _fold_bn(p["bsc"], *p["bnsc"])
    zeros = jnp.zeros((Cout,), jnp.float32)
    sb = jnp.stack([s1, b1, s2, b2, ssc, bsc, zeros, zeros], axis=0)   # (8, Cout) f32

    # NCHW -> NHWC bf16 (unpadded; padding happens inside the kernel's VMEM scratch)
    x = jnp.transpose(x_nchw, (0, 2, 3, 1)).astype(jnp.bfloat16)

    C0 = 8                                         # interior starts at a sublane-aligned column
    WBUF = C0 + ((W + 1 + 7) // 8) * 8             # padded scratch width, multiple of 8
    HBUF = H + 2

    kernel = functools.partial(_residual_block_kernel,
                               H=H, W=W, Cin=Cin, Cout=Cout, C0=C0, WBUF=WBUF)
    out_t = pl.pallas_call(
        kernel,
        out_shape=jax.ShapeDtypeStruct((N, Cout, H * W), jnp.float32),
        grid=(N,),
        in_specs=[
            pl.BlockSpec((1, H, W, Cin), lambda n: (n, 0, 0, 0)),     # unpadded input image
            pl.BlockSpec((9 * Cin, Cout), lambda n: (0, 0)),          # w1
            pl.BlockSpec((9 * Cout, Cout), lambda n: (0, 0)),         # w2
            pl.BlockSpec((Cin, Cout), lambda n: (0, 0)),              # wsc
            pl.BlockSpec((8, Cout), lambda n: (0, 0)),                # packed BN scale/shift
        ],
        out_specs=pl.BlockSpec((1, Cout, H * W), lambda n: (n, 0, 0)),
        scratch_shapes=[
            pltpu.VMEM((HBUF, WBUF, Cin), jnp.bfloat16),              # aligned padded input
            pltpu.VMEM((HBUF, WBUF, Cout), jnp.bfloat16),             # aligned padded conv1 act.
        ],
        compiler_params=pltpu.CompilerParams(dimension_semantics=("parallel",)),
    )(x, w1, w2, wsc, sb)

    # (N, Cout, H*W) is already channel-major: a pure reshape yields NCHW (no transpose pass)
    return out_t.reshape(N, Cout, H, W)


# ----------------------------------------------------------------------------
# BN folding + deterministic parameter construction
# ----------------------------------------------------------------------------
def _fold_bn(conv_bias, gamma, beta, mean, var):
    scale = gamma / jnp.sqrt(var + BN_EPS)
    shift = (conv_bias - mean) * scale + beta
    return scale.astype(jnp.float32), shift.astype(jnp.float32)


def make_params(in_channels, out_channels, key):
    ks = jax.random.split(key, 16)

    def bn_params(k, c):
        k0, k1, k2, k3 = jax.random.split(k, 4)
        gamma = 1.0 + 0.1 * jax.random.normal(k0, (c,), jnp.float32)
        beta = 0.1 * jax.random.normal(k1, (c,), jnp.float32)
        mean = 0.1 * jax.random.normal(k2, (c,), jnp.float32)
        var = jax.random.uniform(k3, (c,), jnp.float32, 0.5, 1.5)
        return gamma, beta, mean, var

    p = {}
    p["w1_oihw"] = 0.1 * jax.random.normal(ks[0], (out_channels, in_channels, 3, 3), jnp.float32)
    p["b1"] = 0.1 * jax.random.normal(ks[1], (out_channels,), jnp.float32)
    p["bn1"] = bn_params(ks[2], out_channels)

    p["w2_oihw"] = 0.1 * jax.random.normal(ks[3], (out_channels, out_channels, 3, 3), jnp.float32)
    p["b2"] = 0.1 * jax.random.normal(ks[4], (out_channels,), jnp.float32)
    p["bn2"] = bn_params(ks[5], out_channels)

    p["wsc_oihw"] = 0.1 * jax.random.normal(ks[6], (out_channels, in_channels, 1, 1), jnp.float32)
    p["bsc"] = 0.1 * jax.random.normal(ks[7], (out_channels,), jnp.float32)
    p["bnsc"] = bn_params(ks[8], out_channels)
    return p


# ----------------------------------------------------------------------------
# Pure-JAX f32 reference (inference-mode BN), mirrors the PyTorch forward
# ----------------------------------------------------------------------------
def residual_block_ref(x, p):
    def conv(x, w, b, pad):
        y = jax.lax.conv_general_dilated(
            x, w, (1, 1), [(pad, pad), (pad, pad)],
            dimension_numbers=("NCHW", "OIHW", "NCHW"))
        return y + b[None, :, None, None]

    def bn(y, bnp):
        g, be, m, v = bnp
        return (y - m[None, :, None, None]) / jnp.sqrt(v[None, :, None, None] + BN_EPS) \
            * g[None, :, None, None] + be[None, :, None, None]

    residual = bn(conv(x, p["wsc_oihw"], p["bsc"], 0), p["bnsc"])
    out = jax.nn.relu(bn(conv(x, p["w1_oihw"], p["b1"], 1), p["bn1"]))
    out = bn(conv(out, p["w2_oihw"], p["b2"], 1), p["bn2"])
    return jax.nn.relu(out + residual)


if __name__ == "__main__":
    N, Cin, Cout, HW = 2, 4, 8, 16
    key = jax.random.PRNGKey(0)
    kx, kp = jax.random.split(key)

    x = jax.random.normal(kx, (N, Cin, HW, HW), jnp.float32)
    params = make_params(Cin, Cout, kp)

    out = jax.jit(residual_block_pallas)(x, params)
    out = jax.block_until_ready(out)

    ref = residual_block_ref(x, params)
    assert out.shape == (N, Cout, HW, HW), out.shape
    # bf16 matmul inputs + bf16 intermediate activation -> bf16-level tolerance vs f32 ref
    assert jnp.allclose(out, ref, rtol=5e-2, atol=5e-2), float(jnp.max(jnp.abs(out - ref)))

    print("KERNEL_OK")
</pallas_src>

<mosaic_0001>
module attributes {stable_mosaic.version = 11 : i64} {
  func.func @_residual_block_kernel(%arg0: i32, %arg1: memref<1x16x16x4xbf16, #tpu.memory_space<vmem>>, %arg2: memref<36x8xbf16, #tpu.memory_space<vmem>>, %arg3: memref<72x8xbf16, #tpu.memory_space<vmem>>, %arg4: memref<4x8xbf16, #tpu.memory_space<vmem>>, %arg5: memref<8x8xf32, #tpu.memory_space<vmem>>, %arg6: memref<1x8x256xf32, #tpu.memory_space<vmem>>, %arg7: memref<18x32x4xbf16, #tpu.memory_space<vmem>>, %arg8: memref<18x32x8xbf16, #tpu.memory_space<vmem>>) attributes {dimension_semantics = [#tpu.dimension_semantics<parallel>], iteration_bounds = array<i64: 2>, scalar_prefetch = 0 : i64, scratch_operands = 2 : i64, tpu.core_type = #tpu.core_type<tc>, window_params = [{transform_indices = @transform_0, window_bounds = array<i64: 1, 16, 16, 4>}, {pipeline_mode = #tpu.pipeline_mode<synchronous>, transform_indices = @transform_1, window_bounds = array<i64: 36, 8>}, {pipeline_mode = #tpu.pipeline_mode<synchronous>, transform_indices = @transform_2, window_bounds = array<i64: 72, 8>}, {pipeline_mode = #tpu.pipeline_mode<synchronous>, transform_indices = @transform_3, window_bounds = array<i64: 4, 8>}, {pipeline_mode = #tpu.pipeline_mode<synchronous>, transform_indices = @transform_4, window_bounds = array<i64: 8, 8>}, {transform_indices = @transform_5, window_bounds = array<i64: 1, 8, 256>}]} {
    %c0 = arith.constant 0 : index
    %c0_0 = arith.constant 0 : index
    %c0_1 = arith.constant 0 : index
    %c0_2 = arith.constant 0 : index
    %0 = vector.load %arg1[%c0, %c0_0, %c0_1, %c0_2] : memref<1x16x16x4xbf16, #tpu.memory_space<vmem>>, vector<1x16x16x4xbf16>
    %1 = vector.shape_cast %0 : vector<1x16x16x4xbf16> to vector<16x16x4xbf16>
    %cst = arith.constant 0.000000e+00 : bf16
    %2 = vector.broadcast %cst : bf16 to vector<1x32x4xbf16>
    %cst_3 = arith.constant 0.000000e+00 : bf16
    %3 = vector.broadcast %cst_3 : bf16 to vector<18x1x4xbf16>
    %c0_4 = arith.constant 0 : index
    %c0_5 = arith.constant 0 : index
    %c0_6 = arith.constant 0 : index
    %4 = vector.load %arg7[%c0_4, %c0_5, %c0_6] : memref<18x32x4xbf16, #tpu.memory_space<vmem>>, vector<1x32x4xbf16>
    tpu.vector_store %arg7[%c0_4, %c0_5, %c0_6], %2 {strides = array<i32>} : memref<18x32x4xbf16, #tpu.memory_space<vmem>>, vector<1x32x4xbf16>,
    %c17 = arith.constant 17 : index
    %c0_7 = arith.constant 0 : index
    %c0_8 = arith.constant 0 : index
    %5 = vector.load %arg7[%c17, %c0_7, %c0_8] : memref<18x32x4xbf16, #tpu.memory_space<vmem>>, vector<1x32x4xbf16>
    tpu.vector_store %arg7[%c17, %c0_7, %c0_8], %2 {strides = array<i32>} : memref<18x32x4xbf16, #tpu.memory_space<vmem>>, vector<1x32x4xbf16>,
    %c0_9 = arith.constant 0 : index
    %c7 = arith.constant 7 : index
    %c0_10 = arith.constant 0 : index
    %6 = vector.load %arg7[%c0_9, %c7, %c0_10] : memref<18x32x4xbf16, #tpu.memory_space<vmem>>, vector<18x1x4xbf16>
    tpu.vector_store %arg7[%c0_9, %c7, %c0_10], %3 {strides = array<i32>} : memref<18x32x4xbf16, #tpu.memory_space<vmem>>, vector<18x1x4xbf16>,
    %c0_11 = arith.constant 0 : index
    %c24 = arith.constant 24 : index
    %c0_12 = arith.constant 0 : index
    %7 = vector.load %arg7[%c0_11, %c24, %c0_12] : memref<18x32x4xbf16, #tpu.memory_space<vmem>>, vector<18x1x4xbf16>
    tpu.vector_store %arg7[%c0_11, %c24, %c0_12], %3 {strides = array<i32>} : memref<18x32x4xbf16, #tpu.memory_space<vmem>>, vector<18x1x4xbf16>,
    %c1 = arith.constant 1 : index
    %c8 = arith.constant 8 : index
    %c0_13 = arith.constant 0 : index
    %8 = vector.load %arg7[%c1, %c8, %c0_13] : memref<18x32x4xbf16, #tpu.memory_space<vmem>>, vector<16x16x4xbf16>
    tpu.vector_store %arg7[%c1, %c8, %c0_13], %1 {strides = array<i32>} : memref<18x32x4xbf16, #tpu.memory_space<vmem>>, vector<16x16x4xbf16>,
    %c0_14 = arith.constant 0 : index
    %c7_15 = arith.constant 7 : index
    %c0_16 = arith.constant 0 : index
    %9 = vector.load %arg7[%c0_14, %c7_15, %c0_16] : memref<18x32x4xbf16, #tpu.memory_space<vmem>>, vector<16x16x4xbf16>
    %10 = vector.shape_cast %9 : vector<16x16x4xbf16> to vector<256x4xbf16>
    %c0_17 = arith.constant 0 : index
    %c8_18 = arith.constant 8 : index
    %c0_19 = arith.constant 0 : index
    %11 = vector.load %arg7[%c0_17, %c8_18, %c0_19] : memref<18x32x4xbf16, #tpu.memory_space<vmem>>, vector<16x16x4xbf16>
    %12 = vector.shape_cast %11 : vector<16x16x4xbf16> to vector<256x4xbf16>
    %c0_20 = arith.constant 0 : index
    %c9 = arith.constant 9 : index
    %c0_21 = arith.constant 0 : index
    %13 = vector.load %arg7[%c0_20, %c9, %c0_21] : memref<18x32x4xbf16, #tpu.memory_space<vmem>>, vector<16x16x4xbf16>
    %14 = vector.shape_cast %13 : vector<16x16x4xbf16> to vector<256x4xbf16>
    %c1_22 = arith.constant 1 : index
    %c7_23 = arith.constant 7 : index
    %c0_24 = arith.constant 0 : index
    %15 = vector.load %arg7[%c1_22, %c7_23, %c0_24] : memref<18x32x4xbf16, #tpu.memory_space<vmem>>, vector<16x16x4xbf16>
    %16 = vector.shape_cast %15 : vector<16x16x4xbf16> to vector<256x4xbf16>
    %c1_25 = arith.constant 1 : index
    %c8_26 = arith.constant 8 : index
    %c0_27 = arith.constant 0 : index
    %17 = vector.load %arg7[%c1_25, %c8_26, %c0_27] : memref<18x32x4xbf16, #tpu.memory_space<vmem>>, vector<16x16x4xbf16>
    %18 = vector.shape_cast %17 : vector<16x16x4xbf16> to vector<256x4xbf16>
    %c1_28 = arith.constant 1 : index
    %c9_29 = arith.constant 9 : index
    %c0_30 = arith.constant 0 : index
    %19 = vector.load %arg7[%c1_28, %c9_29, %c0_30] : memref<18x32x4xbf16, #tpu.memory_space<vmem>>, vector<16x16x4xbf16>
    %20 = vector.shape_cast %19 : vector<16x16x4xbf16> to vector<256x4xbf16>
    %c2 = arith.constant 2 : index
    %c7_31 = arith.constant 7 : index
    %c0_32 = arith.constant 0 : index
    %21 = vector.load %arg7[%c2, %c7_31, %c0_32] : memref<18x32x4xbf16, #tpu.memory_space<vmem>>, vector<16x16x4xbf16>
    %22 = vector.shape_cast %21 : vector<16x16x4xbf16> to vector<256x4xbf16>
    %c2_33 = arith.constant 2 : index
    %c8_34 = arith.constant 8 : index
    %c0_35 = arith.constant 0 : index
    %23 = vector.load %arg7[%c2_33, %c8_34, %c0_35] : memref<18x32x4xbf16, #tpu.memory_space<vmem>>, vector<16x16x4xbf16>
    %24 = vector.shape_cast %23 : vector<16x16x4xbf16> to vector<256x4xbf16>
    %c2_36 = arith.constant 2 : index
    %c9_37 = arith.constant 9 : index
    %c0_38 = arith.constant 0 : index
    %25 = vector.load %arg7[%c2_36, %c9_37, %c0_38] : memref<18x32x4xbf16, #tpu.memory_space<vmem>>, vector<16x16x4xbf16>
    %26 = vector.shape_cast %25 : vector<16x16x4xbf16> to vector<256x4xbf16>
    %27 = tpu.concatenate %10, %12, %14, %16, %18, %20, %22, %24, %26 in 1 : vector<256x4xbf16>, vector<256x4xbf16>, vector<256x4xbf16>, vector<256x4xbf16>, vector<256x4xbf16>, vector<256x4xbf16>, vector<256x4xbf16>, vector<256x4xbf16>, vector<256x4xbf16> -> vector<256x36xbf16>
    %c0_39 = arith.constant 0 : index
    %c0_40 = arith.constant 0 : index
    %28 = vector.load %arg2[%c0_39, %c0_40] : memref<36x8xbf16, #tpu.memory_space<vmem>>, vector<36x8xbf16>
    %cst_41 = arith.constant dense<0.000000e+00> : vector<256x8xf32>
    %29 = tpu.matmul %27, %28, %cst_41 {dimension_numbers = #tpu.dot_dimension_numbers<[1], [0], [0], [1], [0, 0, 1, 1], [], []>} : vector<256x36xbf16>, vector<36x8xbf16>, vector<256x8xf32> -> vector<256x8xf32>
    %c0_42 = arith.constant 0 : index
    %c0_43 = arith.constant 0 : index
    %30 = vector.load %arg5[%c0_42, %c0_43] : memref<8x8xf32, #tpu.memory_space<vmem>>, vector<8x8xf32>
    %31 = vector.extract_strided_slice %30 {offsets = [0, 0], sizes = [1, 8], strides = [1, 1]} : vector<8x8xf32> to vector<1x8xf32>
    %32 = vector.broadcast %31 : vector<1x8xf32> to vector<256x8xf32>
    %33 = arith.mulf %29, %32 : vector<256x8xf32>
    %34 = vector.extract_strided_slice %30 {offsets = [1, 0], sizes = [1, 8], strides = [1, 1]} : vector<8x8xf32> to vector<1x8xf32>
    %35 = vector.broadcast %34 : vector<1x8xf32> to vector<256x8xf32>
    %36 = arith.addf %33, %35 : vector<256x8xf32>
    %cst_44 = arith.constant 0.000000e+00 : f32
    %37 = vector.broadcast %cst_44 : f32 to vector<256x8xf32>
    %38 = arith.maximumf %36, %37 : vector<256x8xf32>
    %cst_45 = arith.constant 0.000000e+00 : bf16
    %39 = vector.broadcast %cst_45 : bf16 to vector<1x32x8xbf16>
    %cst_46 = arith.constant 0.000000e+00 : bf16
    %40 = vector.broadcast %cst_46 : bf16 to vector<18x1x8xbf16>
    %c0_47 = arith.constant 0 : index
    %c0_48 = arith.constant 0 : index
    %c0_49 = arith.constant 0 : index
    %41 = vector.load %arg8[%c0_47, %c0_48, %c0_49] : memref<18x32x8xbf16, #tpu.memory_space<vmem>>, vector<1x32x8xbf16>
    tpu.vector_store %arg8[%c0_47, %c0_48, %c0_49], %39 {strides = array<i32>} : memref<18x32x8xbf16, #tpu.memory_space<vmem>>, vector<1x32x8xbf16>,
    %c17_50 = arith.constant 17 : index
    %c0_51 = arith.constant 0 : index
    %c0_52 = arith.constant 0 : index
    %42 = vector.load %arg8[%c17_50, %c0_51, %c0_52] : memref<18x32x8xbf16, #tpu.memory_space<vmem>>, vector<1x32x8xbf16>
    tpu.vector_store %arg8[%c17_50, %c0_51, %c0_52], %39 {strides = array<i32>} : memref<18x32x8xbf16, #tpu.memory_space<vmem>>, vector<1x32x8xbf16>,
    %c0_53 = arith.constant 0 : index
    %c7_54 = arith.constant 7 : index
    %c0_55 = arith.constant 0 : index
    %43 = vector.load %arg8[%c0_53, %c7_54, %c0_55] : memref<18x32x8xbf16, #tpu.memory_space<vmem>>, vector<18x1x8xbf16>
    tpu.vector_store %arg8[%c0_53, %c7_54, %c0_55], %40 {strides = array<i32>} : memref<18x32x8xbf16, #tpu.memory_space<vmem>>, vector<18x1x8xbf16>,
    %c0_56 = arith.constant 0 : index
    %c24_57 = arith.constant 24 : index
    %c0_58 = arith.constant 0 : index
    %44 = vector.load %arg8[%c0_56, %c24_57, %c0_58] : memref<18x32x8xbf16, #tpu.memory_space<vmem>>, vector<18x1x8xbf16>
    tpu.vector_store %arg8[%c0_56, %c24_57, %c0_58], %40 {strides = array<i32>} : memref<18x32x8xbf16, #tpu.memory_space<vmem>>, vector<18x1x8xbf16>,
    %45 = vector.shape_cast %38 : vector<256x8xf32> to vector<16x16x8xf32>
    %46 = arith.truncf %45 : vector<16x16x8xf32> to vector<16x16x8xbf16>
    %c1_59 = arith.constant 1 : index
    %c8_60 = arith.constant 8 : index
    %c0_61 = arith.constant 0 : index
    %47 = vector.load %arg8[%c1_59, %c8_60, %c0_61] : memref<18x32x8xbf16, #tpu.memory_space<vmem>>, vector<16x16x8xbf16>
    tpu.vector_store %arg8[%c1_59, %c8_60, %c0_61], %46 {strides = array<i32>} : memref<18x32x8xbf16, #tpu.memory_space<vmem>>, vector<16x16x8xbf16>,
    %c0_62 = arith.constant 0 : index
    %c7_63 = arith.constant 7 : index
    %c0_64 = arith.constant 0 : index
    %48 = vector.load %arg8[%c0_62, %c7_63, %c0_64] : memref<18x32x8xbf16, #tpu.memory_space<vmem>>, vector<16x16x8xbf16>
    %49 = vector.shape_cast %48 : vector<16x16x8xbf16> to vector<256x8xbf16>
    %c0_65 = arith.constant 0 : index
    %c8_66 = arith.constant 8 : index
    %c0_67 = arith.constant 0 : index
    %50 = vector.load %arg8[%c0_65, %c8_66, %c0_67] : memref<18x32x8xbf16, #tpu.memory_space<vmem>>, vector<16x16x8xbf16>
    %51 = vector.shape_cast %50 : vector<16x16x8xbf16> to vector<256x8xbf16>
    %c0_68 = arith.constant 0 : index
    %c9_69 = arith.constant 9 : index
    %c0_70 = arith.constant 0 : index
    %52 = vector.load %arg8[%c0_68, %c9_69, %c0_70] : memref<18x32x8xbf16, #tpu.memory_space<vmem>>, vector<16x16x8xbf16>
    %53 = vector.shape_cast %52 : vector<16x16x8xbf16> to vector<256x8xbf16>
    %c1_71 = arith.constant 1 : index
    %c7_72 = arith.constant 7 : index
    %c0_73 = arith.constant 0 : index
    %54 = vector.load %arg8[%c1_71, %c7_72, %c0_73] : memref<18x32x8xbf16, #tpu.memory_space<vmem>>, vector<16x16x8xbf16>
    %55 = vector.shape_cast %54 : vector<16x16x8xbf16> to vector<256x8xbf16>
    %c1_74 = arith.constant 1 : index
    %c8_75 = arith.constant 8 : index
    %c0_76 = arith.constant 0 : index
    %56 = vector.load %arg8[%c1_74, %c8_75, %c0_76] : memref<18x32x8xbf16, #tpu.memory_space<vmem>>, vector<16x16x8xbf16>
    %57 = vector.shape_cast %56 : vector<16x16x8xbf16> to vector<256x8xbf16>
    %c1_77 = arith.constant 1 : index
    %c9_78 = arith.constant 9 : index
    %c0_79 = arith.constant 0 : index
    %58 = vector.load %arg8[%c1_77, %c9_78, %c0_79] : memref<18x32x8xbf16, #tpu.memory_space<vmem>>, vector<16x16x8xbf16>
    %59 = vector.shape_cast %58 : vector<16x16x8xbf16> to vector<256x8xbf16>
    %c2_80 = arith.constant 2 : index
    %c7_81 = arith.constant 7 : index
    %c0_82 = arith.constant 0 : index
    %60 = vector.load %arg8[%c2_80, %c7_81, %c0_82] : memref<18x32x8xbf16, #tpu.memory_space<vmem>>, vector<16x16x8xbf16>
    %61 = vector.shape_cast %60 : vector<16x16x8xbf16> to vector<256x8xbf16>
    %c2_83 = arith.constant 2 : index
    %c8_84 = arith.constant 8 : index
    %c0_85 = arith.constant 0 : index
    %62 = vector.load %arg8[%c2_83, %c8_84, %c0_85] : memref<18x32x8xbf16, #tpu.memory_space<vmem>>, vector<16x16x8xbf16>
    %63 = vector.shape_cast %62 : vector<16x16x8xbf16> to vector<256x8xbf16>
    %c2_86 = arith.constant 2 : index
    %c9_87 = arith.constant 9 : index
    %c0_88 = arith.constant 0 : index
    %64 = vector.load %arg8[%c2_86, %c9_87, %c0_88] : memref<18x32x8xbf16, #tpu.memory_space<vmem>>, vector<16x16x8xbf16>
    %65 = vector.shape_cast %64 : vector<16x16x8xbf16> to vector<256x8xbf16>
    %66 = tpu.concatenate %49, %51, %53, %55, %57, %59, %61, %63, %65 in 1 : vector<256x8xbf16>, vector<256x8xbf16>, vector<256x8xbf16>, vector<256x8xbf16>, vector<256x8xbf16>, vector<256x8xbf16>, vector<256x8xbf16>, vector<256x8xbf16>, vector<256x8xbf16> -> vector<256x72xbf16>
    %c0_89 = arith.constant 0 : index
    %c0_90 = arith.constant 0 : index
    %67 = vector.load %arg3[%c0_89, %c0_90] : memref<72x8xbf16, #tpu.memory_space<vmem>>, vector<72x8xbf16>
    %cst_91 = arith.constant dense<0.000000e+00> : vector<256x8xf32>
    %68 = tpu.matmul %66, %67, %cst_91 {dimension_numbers = #tpu.dot_dimension_numbers<[1], [0], [0], [1], [0, 0, 1, 1], [], []>} : vector<256x72xbf16>, vector<72x8xbf16>, vector<256x8xf32> -> vector<256x8xf32>
    %69 = vector.extract_strided_slice %30 {offsets = [2, 0], sizes = [1, 8], strides = [1, 1]} : vector<8x8xf32> to vector<1x8xf32>
    %70 = vector.broadcast %69 : vector<1x8xf32> to vector<256x8xf32>
    %71 = arith.mulf %68, %70 : vector<256x8xf32>
    %72 = vector.extract_strided_slice %30 {offsets = [3, 0], sizes = [1, 8], strides = [1, 1]} : vector<8x8xf32> to vector<1x8xf32>
    %73 = vector.broadcast %72 : vector<1x8xf32> to vector<256x8xf32>
    %74 = arith.addf %71, %73 : vector<256x8xf32>
    %75 = vector.shape_cast %1 : vector<16x16x4xbf16> to vector<256x4xbf16>
    %c0_92 = arith.constant 0 : index
    %c0_93 = arith.constant 0 : index
    %76 = vector.load %arg4[%c0_92, %c0_93] : memref<4x8xbf16, #tpu.memory_space<vmem>>, vector<4x8xbf16>
    %cst_94 = arith.constant dense<0.000000e+00> : vector<256x8xf32>
    %77 = tpu.matmul %75, %76, %cst_94 {dimension_numbers = #tpu.dot_dimension_numbers<[1], [0], [0], [1], [0, 0, 1, 1], [], []>} : vector<256x4xbf16>, vector<4x8xbf16>, vector<256x8xf32> -> vector<256x8xf32>
    %78 = vector.extract_strided_slice %30 {offsets = [4, 0], sizes = [1, 8], strides = [1, 1]} : vector<8x8xf32> to vector<1x8xf32>
    %79 = vector.broadcast %78 : vector<1x8xf32> to vector<256x8xf32>
    %80 = arith.mulf %77, %79 : vector<256x8xf32>
    %81 = vector.extract_strided_slice %30 {offsets = [5, 0], sizes = [1, 8], strides = [1, 1]} : vector<8x8xf32> to vector<1x8xf32>
    %82 = vector.broadcast %81 : vector<1x8xf32> to vector<256x8xf32>
    %83 = arith.addf %80, %82 : vector<256x8xf32>
    %84 = arith.addf %74, %83 : vector<256x8xf32>
    %cst_95 = arith.constant 0.000000e+00 : f32
    %85 = vector.broadcast %cst_95 : f32 to vector<256x8xf32>
    %86 = arith.maximumf %84, %85 : vector<256x8xf32>
    %87 = tpu.iota {dimensions = array<i32: 0>} : vector<8x8xi32>
    %88 = tpu.iota {dimensions = array<i32: 1>} : vector<8x8xi32>
    %89 = arith.cmpi eq, %87, %88 : vector<8x8xi32>
    %90 = arith.extui %89 : vector<8x8xi1> to vector<8x8xi32>
    %91 = arith.sitofp %90 : vector<8x8xi32> to vector<8x8xf32>
    %cst_96 = arith.constant dense<0.000000e+00> : vector<8x256xf32>
    %92 = tpu.matmul %91, %86, %cst_96 {dimension_numbers = #tpu.dot_dimension_numbers<[1], [1], [0], [0], [0, 0, 1, 0], [], []>} : vector<8x8xf32>, vector<256x8xf32>, vector<8x256xf32> -> vector<8x256xf32>
    %c0_97 = arith.constant 0 : index
    %c0_98 = arith.constant 0 : index
    %c0_99 = arith.constant 0 : index
    %93 = vector.load %arg6[%c0_97, %c0_98, %c0_99] : memref<1x8x256xf32, #tpu.memory_space<vmem>>, vector<1x8x256xf32>
    %94 = vector.shape_cast %93 : vector<1x8x256xf32> to vector<8x256xf32>
    %95 = vector.shape_cast %92 : vector<8x256xf32> to vector<1x8x256xf32>
    tpu.vector_store %arg6[%c0_97, %c0_98, %c0_99], %95 {strides = array<i32>} : memref<1x8x256xf32, #tpu.memory_space<vmem>>, vector<1x8x256xf32>,
    return
  }
  func.func @transform_0(%arg0: i32) -> (i32, i32, i32, i32) {
    %c0_i32 = arith.constant 0 : i32
    %c0_i32_0 = arith.constant 0 : i32
    %c0_i32_1 = arith.constant 0 : i32
    %c0_i32_2 = arith.constant 0 : i32
    return %arg0, %c0_i32, %c0_i32_0, %c0_i32_1 : i32, i32, i32, i32
  }
  func.func @transform_1(%arg0: i32) -> (i32, i32) {
    %c0_i32 = arith.constant 0 : i32
    %c0_i32_0 = arith.constant 0 : i32
    %c0_i32_1 = arith.constant 0 : i32
    return %c0_i32, %c0_i32_0 : i32, i32
  }
  func.func @transform_2(%arg0: i32) -> (i32, i32) {
    %c0_i32 = arith.constant 0 : i32
    %c0_i32_0 = arith.constant 0 : i32
    %c0_i32_1 = arith.constant 0 : i32
    return %c0_i32, %c0_i32_0 : i32, i32
  }
  func.func @transform_3(%arg0: i32) -> (i32, i32) {
    %c0_i32 = arith.constant 0 : i32
    %c0_i32_0 = arith.constant 0 : i32
    %c0_i32_1 = arith.constant 0 : i32
    return %c0_i32, %c0_i32_0 : i32, i32
  }
  func.func @transform_4(%arg0: i32) -> (i32, i32) {
    %c0_i32 = arith.constant 0 : i32
    %c0_i32_0 = arith.constant 0 : i32
    %c0_i32_1 = arith.constant 0 : i32
    return %c0_i32, %c0_i32_0 : i32, i32
  }
  func.func @transform_5(%arg0: i32) -> (i32, i32, i32) {
    %c0_i32 = arith.constant 0 : i32
    %c0_i32_0 = arith.constant 0 : i32
    %c0_i32_1 = arith.constant 0 : i32
    return %arg0, %c0_i32, %c0_i32_0 : i32, i32, i32
  }
}

</mosaic_0001>

<llo_original>
// kernel: residual_block_pallas.1
$region0: #{residual_block_pallas.1}
  #allocation0 [shape = 'u32[]', space=smem, size = 0x4, offset = 0x4, fixed_abs, tag = 'smem constant byte address 0x4 - core index']
  #allocation1 [shape = 'u32[144,128]{1,0:T(1,128)}', space=vmem, size = 0x12000, scoped, tag = 'internal scratch']
  #allocation2 [shape = 'bf16[18,32,4]{2,1,0:T(16,128)(2,1)}', space=vmem, size = 0x24000, scoped, tag = 'scratch operand']
  #allocation3 [shape = 'bf16[18,32,8]{2,1,0:T(16,128)(2,1)}', space=vmem, size = 0x24000, scoped, tag = 'scratch operand']
  %s0 = inlined_call_operand.vmem [shape: bf16[2,16,16,4], index: 0, kind: input, shape index: {}]
  %s1 = inlined_call_operand.vmem [shape: bf16[36,8], index: 1, kind: input, shape index: {}]
  %s2 = inlined_call_operand.vmem [shape: bf16[72,8], index: 2, kind: input, shape index: {}]
  %s3 = inlined_call_operand.vmem [shape: bf16[4,8], index: 3, kind: input, shape index: {}]
  %s4 = inlined_call_operand.vmem [shape: f32[8,8], index: 4, kind: input, shape index: {}]
  %s5 = inlined_call_operand.vmem [shape: f32[2,8,256], index: 5, kind: output, shape index: {}]
  %s6 = sld [smem:[#allocation0]]
  $region53: #{residual_block_pallas.1} parent=0
    _
  %s8 = ssub.s32 1, %s6
  %s9 = scalar_select 0, %s8, %s6
  loop: start=0, step=1, limit=4
  $region2: #{residual_block_pallas.1} parent=0 // loop_pre_header
    _
  $region3: #{residual_block_pallas.1} parent=0 // loop_header
    %s11 = sphi 0, %s15
    %p12 = scmp.ge.s32.totalorder %s11, 4
    %s21 = sphi 0, %s23
    %s24 = sphi 0, %s21
    %s25 = sphi 0, %s24
    %s41 = sphi 0, %s25
    %s45 = sphi 0, %s45
    %s47 = sphi 0, %s45
    %s48 = sphi 0, %s47
    %s62 = sphi 0, %s48
    %s66 = sphi 0, %s66
    %s68 = sphi 0, %s66
    %s69 = sphi 0, %s68
    %s83 = sphi 0, %s69
    %s87 = sphi 0, %s87
    %s89 = sphi 0, %s87
    %s90 = sphi 0, %s89
    %s104 = sphi 0, %s90
    %s108 = sphi 0, %s108
    %s110 = sphi 0, %s108
    %s111 = sphi 0, %s110
    %s125 = sphi 0, %s111
    %s131 = sphi 0, %s133
    %s134 = sphi 0, %s131
    %s135 = sphi 0, %s134
    %s151 = sphi 0, %s135
  $region4: #{residual_block_pallas.1} parent=0 // loop_header_branch
    %14 = sbr.rel (%p12) target = $region8
  $region5: #{residual_block_pallas.1} parent=0 // loop_body
    %s16 = ssub.s32 %s11, 1
    %s17 = ssub.s32 %s11, 2
    %s18 = sadd.s32 %s11, 1
    %s19 = ssub.s32 %s11, %s18
    %p20 = scmp.eq.s32.totalorder %s19, 0
    %s22 = sadd.s32 %s21, 1
    %s23 = scalar_select %p20, %s21, %s22
    %p26 = pneg %p20
    %p27 = scmp.eq.s32.totalorder %s11, 1
    %p28 = por %p26, %p27
    %p29 = scmp.ne.s32.totalorder %s21, %s24
    %p30 = scmp.eq.s32.totalorder %s11, 0
    %p31 = por %p29, %p30
    %p32 = scmp.ne.s32.totalorder %s21, %s24
    %p33 = scmp.eq.s32.totalorder %s16, 1
    %p34 = por %p32, %p33
    %p35 = scmp.ne.s32.totalorder %s24, %s25
    %p36 = scmp.eq.s32.totalorder %s16, 0
    %p37 = por %p35, %p36
    %p38 = scmp.ne.s32.totalorder %s24, %s25
    %p39 = scmp.eq.s32.totalorder %s17, 1
    %p40 = por %p38, %p39
    %p42 = scmp.ne.s32.totalorder %s25, %s41
    %p43 = scmp.eq.s32.totalorder %s17, 0
    %p44 = por %p42, %p43
    %s46 = sadd.s32 %s45, 1
    %p49 = scmp.eq.s32.totalorder %s11, 1
    %p50 = scmp.ne.s32.totalorder %s45, %s47
    %p51 = scmp.eq.s32.totalorder %s11, 0
    %p52 = por %p50, %p51
    %p53 = scmp.ne.s32.totalorder %s45, %s47
    %p54 = scmp.eq.s32.totalorder %s16, 1
    %p55 = por %p53, %p54
    %p56 = scmp.ne.s32.totalorder %s47, %s48
    %p57 = scmp.eq.s32.totalorder %s16, 0
    %p58 = por %p56, %p57
    %p59 = scmp.ne.s32.totalorder %s47, %s48
    %p60 = scmp.eq.s32.totalorder %s17, 1
    %p61 = por %p59, %p60
    %p63 = scmp.ne.s32.totalorder %s48, %s62
    %p64 = scmp.eq.s32.totalorder %s17, 0
    %p65 = por %p63, %p64
    %s67 = sadd.s32 %s66, 1
    %p70 = scmp.eq.s32.totalorder %s11, 1
    %p71 = scmp.ne.s32.totalorder %s66, %s68
    %p72 = scmp.eq.s32.totalorder %s11, 0
    %p73 = por %p71, %p72
    %p74 = scmp.ne.s32.totalorder %s66, %s68
    %p75 = scmp.eq.s32.totalorder %s16, 1
    %p76 = por %p74, %p75
    %p77 = scmp.ne.s32.totalorder %s68, %s69
    %p78 = scmp.eq.s32.totalorder %s16, 0
    %p79 = por %p77, %p78
    %p80 = scmp.ne.s32.totalorder %s68, %s69
    %p81 = scmp.eq.s32.totalorder %s17, 1
    %p82 = por %p80, %p81
    %p84 = scmp.ne.s32.totalorder %s69, %s83
    %p85 = scmp.eq.s32.totalorder %s17, 0
    %p86 = por %p84, %p85
    %s88 = sadd.s32 %s87, 1
    %p91 = scmp.eq.s32.totalorder %s11, 1
    %p92 = scmp.ne.s32.totalorder %s87, %s89
    %p93 = scmp.eq.s32.totalorder %s11, 0
    %p94 = por %p92, %p93
    %p95 = scmp.ne.s32.totalorder %s87, %s89
    %p96 = scmp.eq.s32.totalorder %s16, 1
    %p97 = por %p95, %p96
    %p98 = scmp.ne.s32.totalorder %s89, %s90
    %p99 = scmp.eq.s32.totalorder %s16, 0
    %p100 = por %p98, %p99
    %p101 = scmp.ne.s32.totalorder %s89, %s90
    %p102 = scmp.eq.s32.totalorder %s17, 1
    %p103 = por %p101, %p102
    %p105 = scmp.ne.s32.totalorder %s90, %s104
    %p106 = scmp.eq.s32.totalorder %s17, 0
    %p107 = por %p105, %p106
    %s109 = sadd.s32 %s108, 1
    %p112 = scmp.eq.s32.totalorder %s11, 1
    %p113 = scmp.ne.s32.totalorder %s108, %s110
    %p114 = scmp.eq.s32.totalorder %s11, 0
    %p115 = por %p113, %p114
    %p116 = scmp.ne.s32.totalorder %s108, %s110
    %p117 = scmp.eq.s32.totalorder %s16, 1
    %p118 = por %p116, %p117
    %p119 = scmp.ne.s32.totalorder %s110, %s111
    %p120 = scmp.eq.s32.totalorder %s16, 0
    %p121 = por %p119, %p120
    %p122 = scmp.ne.s32.totalorder %s110, %s111
    %p123 = scmp.eq.s32.totalorder %s17, 1
    %p124 = por %p122, %p123
    %p126 = scmp.ne.s32.totalorder %s111, %s125
    %p127 = scmp.eq.s32.totalorder %s17, 0
    %p128 = por %p126, %p127
    %s129 = ssub.s32 %s11, %s18
    %p130 = scmp.eq.s32.totalorder %s129, 0
    %s132 = sadd.s32 %s131, 1
    %s133 = scalar_select %p130, %s131, %s132
    %p136 = pneg %p130
    %p137 = scmp.eq.s32.totalorder %s11, 1
    %p138 = por %p136, %p137
    %p139 = scmp.ne.s32.totalorder %s131, %s134
    %p140 = scmp.eq.s32.totalorder %s11, 0
    %p141 = por %p139, %p140
    %p142 = scmp.ne.s32.totalorder %s131, %s134
    %p143 = scmp.eq.s32.totalorder %s16, 1
    %p144 = por %p142, %p143
    %p145 = scmp.ne.s32.totalorder %s134, %s135
    %p146 = scmp.eq.s32.totalorder %s16, 0
    %p147 = por %p145, %p146
    %p148 = scmp.ne.s32.totalorder %s134, %s135
    %p149 = scmp.eq.s32.totalorder %s17, 1
    %p150 = por %p148, %p149
    %p152 = scmp.ne.s32.totalorder %s135, %s151
    %p153 = scmp.eq.s32.totalorder %s17, 0
    %p154 = por %p152, %p153
    %p155 = scmp.le.s32.totalorder 1, %s11
    %p156 = scmp.lt.s32.totalorder %s11, 3
    %p157 = pnand %p155, %p156
    %p158 = pneg %p157
    // Predicated region
    $region9: #{residual_block_pallas.1} parent=5 // pred_check
      _
    $region10: #{residual_block_pallas.1} parent=5 // pred_check_branch
      %160 = sbr.rel (%p157) target = $region12
    $region11: #{residual_block_pallas.1} parent=5 // pred_region
      %s161 = ssub.s32 %s11, 1
      // Predicated region
      $region13: #{residual_block_pallas.1} parent=11 // pred_check
        %p162 = pneg %p58
      $region14: #{residual_block_pallas.1} parent=11 // pred_check_branch
        %164 = sbr.rel (%p162) target = $region16
      $region15: #{residual_block_pallas.1} parent=11 // pred_region
        _
      $region16: #{residual_block_pallas.1} parent=11 // pred_fallthru
        _
      // Predicated region
      $region17: #{residual_block_pallas.1} parent=11 // pred_check
        %p165 = pneg %p79
      $region18: #{residual_block_pallas.1} parent=11 // pred_check_branch
        %167 = sbr.rel (%p165) target = $region20
      $region19: #{residual_block_pallas.1} parent=11 // pred_region
        _
      $region20: #{residual_block_pallas.1} parent=11 // pred_fallthru
        _
      // Predicated region
      $region21: #{residual_block_pallas.1} parent=11 // pred_check
        %p168 = pneg %p100
      $region22: #{residual_block_pallas.1} parent=11 // pred_check_branch
        %170 = sbr.rel (%p168) target = $region24
      $region23: #{residual_block_pallas.1} parent=11 // pred_region
        _
      $region24: #{residual_block_pallas.1} parent=11 // pred_fallthru
        _
      // Predicated region
      $region25: #{residual_block_pallas.1} parent=11 // pred_check
        %p171 = pneg %p121
      $region26: #{residual_block_pallas.1} parent=11 // pred_check_branch
        %173 = sbr.rel (%p171) target = $region28
      $region27: #{residual_block_pallas.1} parent=11 // pred_region
        _
      $region28: #{residual_block_pallas.1} parent=11 // pred_fallthru
        _
    $region12: #{residual_block_pallas.1} parent=5 // pred_fallthru
      _
    %p174 = scmp.lt.s32.totalorder %s11, 2
    // Predicated region
    $region29: #{residual_block_pallas.1} parent=5 // pred_check
      %p175 = pneg %p174
    $region30: #{residual_block_pallas.1} parent=5 // pred_check_branch
      %177 = sbr.rel (%p175) target = $region32
    $region31: #{residual_block_pallas.1} parent=5 // pred_region
      // Predicated region
      $region33: #{residual_block_pallas.1} parent=31 // pred_check
        %p178 = pneg %p31
      $region34: #{residual_block_pallas.1} parent=31 // pred_check_branch
        %180 = sbr.rel (%p178) target = $region36
      $region35: #{residual_block_pallas.1} parent=31 // pred_region
        %p181 = scmp.lt.s32.totalorder %s11, 1
        %s182 = scalar_select %p181, %s11, 1
        %s183 = smul.addr %s182, 32
        %s184 = smul.addr %s183, 4
        %s185 = scalar_lea.vmem %s0, %s184
      $region36: #{residual_block_pallas.1} parent=31 // pred_fallthru
        _
    $region32: #{residual_block_pallas.1} parent=5 // pred_fallthru
      _
    %p186 = scmp.le.s32.totalorder 1, %s11
    %p187 = scmp.lt.s32.totalorder %s11, 3
    %p188 = pnand %p186, %p187
    %p189 = pneg %p188
    // Predicated region
    $region37: #{residual_block_pallas.1} parent=5 // pred_check
      _
    $region38: #{residual_block_pallas.1} parent=5 // pred_check_branch
      %191 = sbr.rel (%p188) target = $region40
    $region39: #{residual_block_pallas.1} parent=5 // pred_region
      %s192 = ssub.s32 %s11, 1
      %p193 = scmp.lt.s32.totalorder %s16, 1
      %s194 = scalar_select %p193, %s16, 1
      %s195 = smul.addr %s194, 32
      %s196 = smul.addr %s195, 4
      %s197 = scalar_lea.vmem %s0, %s196
      %p198 = pneg %p37
      %p199 = pneg %p34
      %p200 = pneg %p58
      %p201 = pneg %p55
      %p202 = pneg %p79
      %p203 = pneg %p76
      %p204 = pneg %p100
      %p205 = pneg %p97
      %p206 = pneg %p121
      %p207 = pneg %p118
      %p208 = pneg %p147
      %p209 = pneg %p144
      %p210 = scmp.lt.s32.totalorder %s16, 1
      %s211 = scalar_select %p210, %s16, 1
      %s212 = smul.addr %s211, 2
      %s213 = smul.addr %s212, 8
      %s214 = scalar_lea.vmem %s5, %s213
      %p215 = scmp.lt.s32.totalorder %s16, 1
      %s216 = scalar_select %p215, %s16, 1
      %s217 = smul.addr %s216, 32
      %s218 = smul.addr %s217, 4
      %s219 = scalar_lea.vmem %s0, %s218
      %p220 = scmp.lt.s32.totalorder %s16, 1
      %s221 = scalar_select %p220, %s16, 1
      %s222 = smul.addr %s221, 2
      %s223 = smul.addr %s222, 8
      %s224 = scalar_lea.vmem %s5, %s223
      %v226 = vld [vmem:[%s219] sm:$0xf]
      %v227 = vld [vmem:[%s219 + $0x4] sm:$0xf]
      %v228 = vld [vmem:[%s219 + $0x8] sm:$0xf]
      %v229 = vld [vmem:[%s219 + $0xc] sm:$0xf]
      %v230 = vld [vmem:[%s219 + $0x10] sm:$0xf]
      %v231 = vld [vmem:[%s219 + $0x14] sm:$0xf]
      %v232 = vld [vmem:[%s219 + $0x18] sm:$0xf]
      %v233 = vld [vmem:[%s219 + $0x1c] sm:$0xf]
      %v234 = vld [vmem:[%s219 + $0x20] sm:$0xf]
      %v235 = vld [vmem:[%s219 + $0x24] sm:$0xf]
      %v236 = vld [vmem:[%s219 + $0x28] sm:$0xf]
      %v237 = vld [vmem:[%s219 + $0x2c] sm:$0xf]
      %v238 = vld [vmem:[%s219 + $0x30] sm:$0xf]
      %v239 = vld [vmem:[%s219 + $0x34] sm:$0xf]
      %v240 = vld [vmem:[%s219 + $0x38] sm:$0xf]
      %v241 = vld [vmem:[%s219 + $0x3c] sm:$0xf]
      %v242 = vld [vmem:[%s219 + $0x40] sm:$0xf]
      %v243 = vld [vmem:[%s219 + $0x44] sm:$0xf]
      %v244 = vld [vmem:[%s219 + $0x48] sm:$0xf]
      %v245 = vld [vmem:[%s219 + $0x4c] sm:$0xf]
      %v246 = vld [vmem:[%s219 + $0x50] sm:$0xf]
      %v247 = vld [vmem:[%s219 + $0x54] sm:$0xf]
      %v248 = vld [vmem:[%s219 + $0x58] sm:$0xf]
      %v249 = vld [vmem:[%s219 + $0x5c] sm:$0xf]
      %v250 = vld [vmem:[%s219 + $0x60] sm:$0xf]
      %v251 = vld [vmem:[%s219 + $0x64] sm:$0xf]
      %v252 = vld [vmem:[%s219 + $0x68] sm:$0xf]
      %v253 = vld [vmem:[%s219 + $0x6c] sm:$0xf]
      %v254 = vld [vmem:[%s219 + $0x70] sm:$0xf]
      %v255 = vld [vmem:[%s219 + $0x74] sm:$0xf]
      %v256 = vld [vmem:[%s219 + $0x78] sm:$0xf]
      %v257 = vld [vmem:[%s219 + $0x7c] sm:$0xf]
      %vm258 = vcmask 31744
      %259 = vst.msk [vmem:[#allocation2] sm:$0xff] %vm258, 0
      %260 = vst.msk [vmem:[#allocation2 + $0x8] sm:$0xff] %vm258, 0
      %s261 = scalar_lea.vmem [#allocation2], 272
      %262 = vst.msk [vmem:[%s261] sm:$0xff] %vm258, 0
      %263 = vst.msk [vmem:[%s261 + $0x8] sm:$0xff] %vm258, 0
      %vm264 = vcmask 27651
      %vm265 = vsmask.f32 7950
      %vm266 = vmand %vm264, %vm265
      %v267 = vld [vmem:[#allocation2] sm:$0x8]
      %v268 = vsel %vm266, 0, %v267
      %269 = vst [vmem:[#allocation2] sm:$0x8] %v268
      %v270 = vld [vmem:[#allocation2 + $0x10] sm:$0x8]
      %v271 = vsel %vm266, 0, %v270
      %272 = vst [vmem:[#allocation2 + $0x10] sm:$0x8] %v271
      %v273 = vld [vmem:[#allocation2 + $0x20] sm:$0x8]
      %v274 = vsel %vm266, 0, %v273
      %275 = vst [vmem:[#allocation2 + $0x20] sm:$0x8] %v274
      %v276 = vld [vmem:[#allocation2 + $0x30] sm:$0x8]
      %v277 = vsel %vm266, 0, %v276
      %278 = vst [vmem:[#allocation2 + $0x30] sm:$0x8] %v277
      %v279 = vld [vmem:[#allocation2 + $0x40] sm:$0x8]
      %v280 = vsel %vm266, 0, %v279
      %281 = vst [vmem:[#allocation2 + $0x40] sm:$0x8] %v280
      %v282 = vld [vmem:[#allocation2 + $0x50] sm:$0x8]
      %v283 = vsel %vm266, 0, %v282
      %284 = vst [vmem:[#allocation2 + $0x50] sm:$0x8] %v283
      %v285 = vld [vmem:[#allocation2 + $0x60] sm:$0x8]
      %v286 = vsel %vm266, 0, %v285
      %287 = vst [vmem:[#allocation2 + $0x60] sm:$0x8] %v286
      %v288 = vld [vmem:[#allocation2 + $0x70] sm:$0x8]
      %v289 = vsel %vm266, 0, %v288
      %290 = vst [vmem:[#allocation2 + $0x70] sm:$0x8] %v289
      %v291 = vld [vmem:[#allocation2 + $0x80] sm:$0x8]
      %v292 = vsel %vm266, 0, %v291
      %293 = vst [vmem:[#allocation2 + $0x80] sm:$0x8] %v292
      %v294 = vld [vmem:[#allocation2 + $0x90] sm:$0x8]
      %v295 = vsel %vm266, 0, %v294
      %296 = vst [vmem:[#allocation2 + $0x90] sm:$0x8] %v295
      %v297 = vld [vmem:[#allocation2 + $0xa0] sm:$0x8]
      %v298 = vsel %vm266, 0, %v297
      %299 = vst [vmem:[#allocation2 + $0xa0] sm:$0x8] %v298
      %v300 = vld [vmem:[#allocation2 + $0xb0] sm:$0x8]
      %v301 = vsel %vm266, 0, %v300
      %302 = vst [vmem:[#allocation2 + $0xb0] sm:$0x8] %v301
      %v303 = vld [vmem:[#allocation2 + $0xc0] sm:$0x8]
      %v304 = vsel %vm266, 0, %v303
      %305 = vst [vmem:[#allocation2 + $0xc0] sm:$0x8] %v304
      %v306 = vld [vmem:[#allocation2 + $0xd0] sm:$0x8]
      %v307 = vsel %vm266, 0, %v306
      %308 = vst [vmem:[#allocation2 + $0xd0] sm:$0x8] %v307
      %v309 = vld [vmem:[#allocation2 + $0xe0] sm:$0x8]
      %v310 = vsel %vm266, 0, %v309
      %311 = vst [vmem:[#allocation2 + $0xe0] sm:$0x8] %v310
      %v312 = vld [vmem:[#allocation2 + $0xf0] sm:$0x8]
      %v313 = vsel %vm266, 0, %v312
      %314 = vst [vmem:[#allocation2 + $0xf0] sm:$0x8] %v313
      %v315 = vld [vmem:[#allocation2 + $0x100] sm:$0x8]
      %v316 = vsel %vm266, 0, %v315
      %317 = vst [vmem:[#allocation2 + $0x100] sm:$0x8] %v316
      %v318 = vld [vmem:[#allocation2 + $0x110] sm:$0x8]
      %v319 = vsel %vm266, 0, %v318
      %320 = vst [vmem:[#allocation2 + $0x110] sm:$0x8] %v319
      %vm321 = vcmask 28676
      %vm322 = vsmask.f32 4352
      %vm323 = vmand %vm321, %vm322
      %v324 = vld [vmem:[#allocation2 + $0x8] sm:$0x10]
      %v325 = vsel %vm323, 0, %v324
      %326 = vst [vmem:[#allocation2 + $0x8] sm:$0x10] %v325
      %v327 = vld [vmem:[#allocation2 + $0x18] sm:$0x10]
      %v328 = vsel %vm323, 0, %v327
      %329 = vst [vmem:[#allocation2 + $0x18] sm:$0x10] %v328
      %v330 = vld [vmem:[#allocation2 + $0x28] sm:$0x10]
      %v331 = vsel %vm323, 0, %v330
      %332 = vst [vmem:[#allocation2 + $0x28] sm:$0x10] %v331
      %v333 = vld [vmem:[#allocation2 + $0x38] sm:$0x10]
      %v334 = vsel %vm323, 0, %v333
      %335 = vst [vmem:[#allocation2 + $0x38] sm:$0x10] %v334
      %v336 = vld [vmem:[#allocation2 + $0x48] sm:$0x10]
      %v337 = vsel %vm323, 0, %v336
      %338 = vst [vmem:[#allocation2 + $0x48] sm:$0x10] %v337
      %v339 = vld [vmem:[#allocation2 + $0x58] sm:$0x10]
      %v340 = vsel %vm323, 0, %v339
      %341 = vst [vmem:[#allocation2 + $0x58] sm:$0x10] %v340
      %v342 = vld [vmem:[#allocation2 + $0x68] sm:$0x10]
      %v343 = vsel %vm323, 0, %v342
      %344 = vst [vmem:[#allocation2 + $0x68] sm:$0x10] %v343
      %v345 = vld [vmem:[#allocation2 + $0x78] sm:$0x10]
      %v346 = vsel %vm323, 0, %v345
      %347 = vst [vmem:[#allocation2 + $0x78] sm:$0x10] %v346
      %v348 = vld [vmem:[#allocation2 + $0x88] sm:$0x10]
      %v349 = vsel %vm323, 0, %v348
      %350 = vst [vmem:[#allocation2 + $0x88] sm:$0x10] %v349
      %v351 = vld [vmem:[#allocation2 + $0x98] sm:$0x10]
      %v352 = vsel %vm323, 0, %v351
      %353 = vst [vmem:[#allocation2 + $0x98] sm:$0x10] %v352
      %v354 = vld [vmem:[#allocation2 + $0xa8] sm:$0x10]
      %v355 = vsel %vm323, 0, %v354
      %356 = vst [vmem:[#allocation2 + $0xa8] sm:$0x10] %v355
      %v357 = vld [vmem:[#allocation2 + $0xb8] sm:$0x10]
      %v358 = vsel %vm323, 0, %v357
      %359 = vst [vmem:[#allocation2 + $0xb8] sm:$0x10] %v358
      %v360 = vld [vmem:[#allocation2 + $0xc8] sm:$0x10]
      %v361 = vsel %vm323, 0, %v360
      %362 = vst [vmem:[#allocation2 + $0xc8] sm:$0x10] %v361
      %v363 = vld [vmem:[#allocation2 + $0xd8] sm:$0x10]
      %v364 = vsel %vm323, 0, %v363
      %365 = vst [vmem:[#allocation2 + $0xd8] sm:$0x10] %v364
      %v366 = vld [vmem:[#allocation2 + $0xe8] sm:$0x10]
      %v367 = vsel %vm323, 0, %v366
      %368 = vst [vmem:[#allocation2 + $0xe8] sm:$0x10] %v367
      %v369 = vld [vmem:[#allocation2 + $0xf8] sm:$0x10]
      %v370 = vsel %vm323, 0, %v369
      %371 = vst [vmem:[#allocation2 + $0xf8] sm:$0x10] %v370
      %v372 = vld [vmem:[#allocation2 + $0x108] sm:$0x10]
      %v373 = vsel %vm323, 0, %v372
      %374 = vst [vmem:[#allocation2 + $0x108] sm:$0x10] %v373
      %v375 = vld [vmem:[#allocation2 + $0x118] sm:$0x10]
      %v376 = vsel %vm323, 0, %v375
      %377 = vst [vmem:[#allocation2 + $0x118] sm:$0x10] %v376
      %v410 = vunpack.c.l.b16 %v226
      %v411 = vunpack.c.l.b16 %v227
      %v412 = vunpack.c.l.b16 %v228
      %v413 = vunpack.c.l.b16 %v229
      %v414 = vunpack.c.l.b16 %v230
      %v415 = vunpack.c.l.b16 %v231
      %v416 = vunpack.c.l.b16 %v232
      %v417 = vunpack.c.l.b16 %v233
      %v418 = vunpack.c.l.b16 %v234
      %v419 = vunpack.c.l.b16 %v235
      %v420 = vunpack.c.l.b16 %v236
      %v421 = vunpack.c.l.b16 %v237
      %v422 = vunpack.c.l.b16 %v238
      %v423 = vunpack.c.l.b16 %v239
      %v424 = vunpack.c.l.b16 %v240
      %v425 = vunpack.c.l.b16 %v241
      %v426 = vunpack.c.l.b16 %v242
      %v427 = vunpack.c.l.b16 %v243
      %v428 = vunpack.c.l.b16 %v244
      %v429 = vunpack.c.l.b16 %v245
      %v430 = vunpack.c.l.b16 %v246
      %v431 = vunpack.c.l.b16 %v247
      %v432 = vunpack.c.l.b16 %v248
      %v433 = vunpack.c.l.b16 %v249
      %v434 = vunpack.c.l.b16 %v250
      %v435 = vunpack.c.l.b16 %v251
      %v436 = vunpack.c.l.b16 %v252
      %v437 = vunpack.c.l.b16 %v253
      %v438 = vunpack.c.l.b16 %v254
      %v439 = vunpack.c.l.b16 %v255
      %v440 = vunpack.c.l.b16 %v256
      %v441 = vunpack.c.l.b16 %v257
      %v442 = vpack.c.b16 %v410, %v410
      %v443 = vpack.c.b16 %v411, %v411
      %v444 = vpack.c.b16 %v412, %v412
      %v445 = vpack.c.b16 %v413, %v413
      %v446 = vpack.c.b16 %v414, %v414
      %v447 = vpack.c.b16 %v415, %v415
      %v448 = vpack.c.b16 %v416, %v416
      %v449 = vpack.c.b16 %v417, %v417
      %v450 = vpack.c.b16 %v418, %v418
      %v451 = vpack.c.b16 %v419, %v419
      %v452 = vpack.c.b16 %v420, %v420
      %v453 = vpack.c.b16 %v421, %v421
      %v454 = vpack.c.b16 %v422, %v422
      %v455 = vpack.c.b16 %v423, %v423
      %v456 = vpack.c.b16 %v424, %v424
      %v457 = vpack.c.b16 %v425, %v425
      %v458 = vpack.c.b16 %v426, %v426
      %v459 = vpack.c.b16 %v427, %v427
      %v460 = vpack.c.b16 %v428, %v428
      %v461 = vpack.c.b16 %v429, %v429
      %v462 = vpack.c.b16 %v430, %v430
      %v463 = vpack.c.b16 %v431, %v431
      %v464 = vpack.c.b16 %v432, %v432
      %v465 = vpack.c.b16 %v433, %v433
      %v466 = vpack.c.b16 %v434, %v434
      %v467 = vpack.c.b16 %v435, %v435
      %v468 = vpack.c.b16 %v436, %v436
      %v469 = vpack.c.b16 %v437, %v437
      %v470 = vpack.c.b16 %v438, %v438
      %v471 = vpack.c.b16 %v439, %v439
      %v472 = vpack.c.b16 %v440, %v440
      %v473 = vpack.c.b16 %v441, %v441
      %s506 = scalar_lea.vmem [#allocation2], 16
      %vm507 = vcmask 31748
      %508 = vst.msk [vmem:[%s506] sm:$0xf0] %vm507, %v442
      %vm509 = vcmask 27648
      %510 = vst.msk [vmem:[%s506 + $0x8] sm:$0xf] %vm509, %v443
      %511 = vst.msk [vmem:[%s506 + $0x10] sm:$0xf0] %vm507, %v444
      %512 = vst.msk [vmem:[%s506 + $0x18] sm:$0xf] %vm509, %v445
      %513 = vst.msk [vmem:[%s506 + $0x20] sm:$0xf0] %vm507, %v446
      %514 = vst.msk [vmem:[%s506 + $0x28] sm:$0xf] %vm509, %v447
      %515 = vst.msk [vmem:[%s506 + $0x30] sm:$0xf0] %vm507, %v448
      %516 = vst.msk [vmem:[%s506 + $0x38] sm:$0xf] %vm509, %v449
      %517 = vst.msk [vmem:[%s506 + $0x40] sm:$0xf0] %vm507, %v450
      %518 = vst.msk [vmem:[%s506 + $0x48] sm:$0xf] %vm509, %v451
      %519 = vst.msk [vmem:[%s506 + $0x50] sm:$0xf0] %vm507, %v452
      %520 = vst.msk [vmem:[%s506 + $0x58] sm:$0xf] %vm509, %v453
      %521 = vst.msk [vmem:[%s506 + $0x60] sm:$0xf0] %vm507, %v454
      %522 = vst.msk [vmem:[%s506 + $0x68] sm:$0xf] %vm509, %v455
      %523 = vst.msk [vmem:[%s506 + $0x70] sm:$0xf0] %vm507, %v456
      %524 = vst.msk [vmem:[%s506 + $0x78] sm:$0xf] %vm509, %v457
      %525 = vst.msk [vmem:[%s506 + $0x80] sm:$0xf0] %vm507, %v458
      %526 = vst.msk [vmem:[%s506 + $0x88] sm:$0xf] %vm509, %v459
      %527 = vst.msk [vmem:[%s506 + $0x90] sm:$0xf0] %vm507, %v460
      %528 = vst.msk [vmem:[%s506 + $0x98] sm:$0xf] %vm509, %v461
      %529 = vst.msk [vmem:[%s506 + $0xa0] sm:$0xf0] %vm507, %v462
      %530 = vst.msk [vmem:[%s506 + $0xa8] sm:$0xf] %vm509, %v463
      %531 = vst.msk [vmem:[%s506 + $0xb0] sm:$0xf0] %vm507, %v464
      %532 = vst.msk [vmem:[%s506 + $0xb8] sm:$0xf] %vm509, %v465
      %533 = vst.msk [vmem:[%s506 + $0xc0] sm:$0xf0] %vm507, %v466
      %534 = vst.msk [vmem:[%s506 + $0xc8] sm:$0xf] %vm509, %v467
      %535 = vst.msk [vmem:[%s506 + $0xd0] sm:$0xf0] %vm507, %v468
      %536 = vst.msk [vmem:[%s506 + $0xd8] sm:$0xf] %vm509, %v469
      %537 = vst.msk [vmem:[%s506 + $0xe0] sm:$0xf0] %vm507, %v470
      %538 = vst.msk [vmem:[%s506 + $0xe8] sm:$0xf] %vm509, %v471
      %539 = vst.msk [vmem:[%s506 + $0xf0] sm:$0xf0] %vm507, %v472
      %540 = vst.msk [vmem:[%s506 + $0xf8] sm:$0xf] %vm509, %v473
      %v541 = vld [vmem:[#allocation2] sm:$0xf8]
      %v542 = vld [vmem:[#allocation2 + $0x8] sm:$0xf]
      %v543 = vld [vmem:[#allocation2 + $0x10] sm:$0xf8]
      %v544 = vld [vmem:[#allocation2 + $0x18] sm:$0xf]
      %v545 = vld [vmem:[#allocation2 + $0x20] sm:$0xf8]
      %v546 = vld [vmem:[#allocation2 + $0x28] sm:$0xf]
      %v547 = vld [vmem:[#allocation2 + $0x30] sm:$0xf8]
      %v548 = vld [vmem:[#allocation2 + $0x38] sm:$0xf]
      %v549 = vld [vmem:[#allocation2 + $0x40] sm:$0xf8]
      %v550 = vld [vmem:[#allocation2 + $0x48] sm:$0xf]
      %v551 = vld [vmem:[#allocation2 + $0x50] sm:$0xf8]
      %v552 = vld [vmem:[#allocation2 + $0x58] sm:$0xf]
      %v553 = vld [vmem:[#allocation2 + $0x60] sm:$0xf8]
      %v554 = vld [vmem:[#allocation2 + $0x68] sm:$0xf]
      %v555 = vld [vmem:[#allocation2 + $0x70] sm:$0xf8]
      %v556 = vld [vmem:[#allocation2 + $0x78] sm:$0xf]
      %v557 = vld [vmem:[#allocation2 + $0x80] sm:$0xf8]
      %v558 = vld [vmem:[#allocation2 + $0x88] sm:$0xf]
      %v559 = vld [vmem:[#allocation2 + $0x90] sm:$0xf8]
      %v560 = vld [vmem:[#allocation2 + $0x98] sm:$0xf]
      %v561 = vld [vmem:[#allocation2 + $0xa0] sm:$0xf8]
      %v562 = vld [vmem:[#allocation2 + $0xa8] sm:$0xf]
      %v563 = vld [vmem:[#allocation2 + $0xb0] sm:$0xf8]
      %v564 = vld [vmem:[#allocation2 + $0xb8] sm:$0xf]
      %v565 = vld [vmem:[#allocation2 + $0xc0] sm:$0xf8]
      %v566 = vld [vmem:[#allocation2 + $0xc8] sm:$0xf]
      %v567 = vld [vmem:[#allocation2 + $0xd0] sm:$0xf8]
      %v568 = vld [vmem:[#allocation2 + $0xd8] sm:$0xf]
      %v569 = vld [vmem:[#allocation2 + $0xe0] sm:$0xf8]
      %v570 = vld [vmem:[#allocation2 + $0xe8] sm:$0xf]
      %v571 = vld [vmem:[#allocation2 + $0xf0] sm:$0xf8]
      %v572 = vld [vmem:[#allocation2 + $0xf8] sm:$0xf]
      %v574 = vshrl.u32 %v541, 16
      %v576 = vrot.slane %v574, 3
      %v577 = vshll.u32 %v541, 16
      %v579 = vrot.slane %v577, 4
      %v580 = vor.u32 %v576, %v579
      %v582 = vshrl.u32 %v542, 16
      %v584 = vrot.slane %v582, 3
      %v585 = vshll.u32 %v542, 16
      %v587 = vrot.slane %v585, 4
      %v588 = vor.u32 %v584, %v587
      %v589 = vsel %vm322, %v580, %v588
      %v591 = vshrl.u32 %v543, 16
      %v593 = vrot.slane %v591, 3
      %v594 = vshll.u32 %v543, 16
      %v596 = vrot.slane %v594, 4
      %v597 = vor.u32 %v593, %v596
      %v599 = vshrl.u32 %v544, 16
      %v601 = vrot.slane %v599, 3
      %v602 = vshll.u32 %v544, 16
      %v604 = vrot.slane %v602, 4
      %v605 = vor.u32 %v601, %v604
      %v606 = vsel %vm322, %v597, %v605
      %v608 = vshrl.u32 %v545, 16
      %v610 = vrot.slane %v608, 3
      %v611 = vshll.u32 %v545, 16
      %v613 = vrot.slane %v611, 4
      %v614 = vor.u32 %v610, %v613
      %v616 = vshrl.u32 %v546, 16
      %v618 = vrot.slane %v616, 3
      %v619 = vshll.u32 %v546, 16
      %v621 = vrot.slane %v619, 4
      %v622 = vor.u32 %v618, %v621
      %v623 = vsel %vm322, %v614, %v622
      %v625 = vshrl.u32 %v547, 16
      %v627 = vrot.slane %v625, 3
      %v628 = vshll.u32 %v547, 16
      %v630 = vrot.slane %v628, 4
      %v631 = vor.u32 %v627, %v630
      %v633 = vshrl.u32 %v548, 16
      %v635 = vrot.slane %v633, 3
      %v636 = vshll.u32 %v548, 16
      %v638 = vrot.slane %v636, 4
      %v639 = vor.u32 %v635, %v638
      %v640 = vsel %vm322, %v631, %v639
      %v642 = vshrl.u32 %v549, 16
      %v644 = vrot.slane %v642, 3
      %v645 = vshll.u32 %v549, 16
      %v647 = vrot.slane %v645, 4
      %v648 = vor.u32 %v644, %v647
      %v650 = vshrl.u32 %v550, 16
      %v652 = vrot.slane %v650, 3
      %v653 = vshll.u32 %v550, 16
      %v655 = vrot.slane %v653, 4
      %v656 = vor.u32 %v652, %v655
      %v657 = vsel %vm322, %v648, %v656
      %v659 = vshrl.u32 %v551, 16
      %v661 = vrot.slane %v659, 3
      %v662 = vshll.u32 %v551, 16
      %v664 = vrot.slane %v662, 4
      %v665 = vor.u32 %v661, %v664
      %v667 = vshrl.u32 %v552, 16
      %v669 = vrot.slane %v667, 3
      %v670 = vshll.u32 %v552, 16
      %v672 = vrot.slane %v670, 4
      %v673 = vor.u32 %v669, %v672
      %v674 = vsel %vm322, %v665, %v673
      %v676 = vshrl.u32 %v553, 16
      %v678 = vrot.slane %v676, 3
      %v679 = vshll.u32 %v553, 16
      %v681 = vrot.slane %v679, 4
      %v682 = vor.u32 %v678, %v681
      %v684 = vshrl.u32 %v554, 16
      %v686 = vrot.slane %v684, 3
      %v687 = vshll.u32 %v554, 16
      %v689 = vrot.slane %v687, 4
      %v690 = vor.u32 %v686, %v689
      %v691 = vsel %vm322, %v682, %v690
      %v693 = vshrl.u32 %v555, 16
      %v695 = vrot.slane %v693, 3
      %v696 = vshll.u32 %v555, 16
      %v698 = vrot.slane %v696, 4
      %v699 = vor.u32 %v695, %v698
      %v701 = vshrl.u32 %v556, 16
      %v703 = vrot.slane %v701, 3
      %v704 = vshll.u32 %v556, 16
      %v706 = vrot.slane %v704, 4
      %v707 = vor.u32 %v703, %v706
      %v708 = vsel %vm322, %v699, %v707
      %v710 = vshrl.u32 %v557, 16
      %v712 = vrot.slane %v710, 3
      %v713 = vshll.u32 %v557, 16
      %v715 = vrot.slane %v713, 4
      %v716 = vor.u32 %v712, %v715
      %v718 = vshrl.u32 %v558, 16
      %v720 = vrot.slane %v718, 3
      %v721 = vshll.u32 %v558, 16
      %v723 = vrot.slane %v721, 4
      %v724 = vor.u32 %v720, %v723
      %v725 = vsel %vm322, %v716, %v724
      %v727 = vshrl.u32 %v559, 16
      %v729 = vrot.slane %v727, 3
      %v730 = vshll.u32 %v559, 16
      %v732 = vrot.slane %v730, 4
      %v733 = vor.u32 %v729, %v732
      %v735 = vshrl.u32 %v560, 16
      %v737 = vrot.slane %v735, 3
      %v738 = vshll.u32 %v560, 16
      %v740 = vrot.slane %v738, 4
      %v741 = vor.u32 %v737, %v740
      %v742 = vsel %vm322, %v733, %v741
      %v744 = vshrl.u32 %v561, 16
      %v746 = vrot.slane %v744, 3
      %v747 = vshll.u32 %v561, 16
      %v749 = vrot.slane %v747, 4
      %v750 = vor.u32 %v746, %v749
      %v752 = vshrl.u32 %v562, 16
      %v754 = vrot.slane %v752, 3
      %v755 = vshll.u32 %v562, 16
      %v757 = vrot.slane %v755, 4
      %v758 = vor.u32 %v754, %v757
      %v759 = vsel %vm322, %v750, %v758
      %v761 = vshrl.u32 %v563, 16
      %v763 = vrot.slane %v761, 3
      %v764 = vshll.u32 %v563, 16
      %v766 = vrot.slane %v764, 4
      %v767 = vor.u32 %v763, %v766
      %v769 = vshrl.u32 %v564, 16
      %v771 = vrot.slane %v769, 3
      %v772 = vshll.u32 %v564, 16
      %v774 = vrot.slane %v772, 4
      %v775 = vor.u32 %v771, %v774
      %v776 = vsel %vm322, %v767, %v775
      %v778 = vshrl.u32 %v565, 16
      %v780 = vrot.slane %v778, 3
      %v781 = vshll.u32 %v565, 16
      %v783 = vrot.slane %v781, 4
      %v784 = vor.u32 %v780, %v783
      %v786 = vshrl.u32 %v566, 16
      %v788 = vrot.slane %v786, 3
      %v789 = vshll.u32 %v566, 16
      %v791 = vrot.slane %v789, 4
      %v792 = vor.u32 %v788, %v791
      %v793 = vsel %vm322, %v784, %v792
      %v795 = vshrl.u32 %v567, 16
      %v797 = vrot.slane %v795, 3
      %v798 = vshll.u32 %v567, 16
      %v800 = vrot.slane %v798, 4
      %v801 = vor.u32 %v797, %v800
      %v803 = vshrl.u32 %v568, 16
      %v805 = vrot.slane %v803, 3
      %v806 = vshll.u32 %v568, 16
      %v808 = vrot.slane %v806, 4
      %v809 = vor.u32 %v805, %v808
      %v810 = vsel %vm322, %v801, %v809
      %v812 = vshrl.u32 %v569, 16
      %v814 = vrot.slane %v812, 3
      %v815 = vshll.u32 %v569, 16
      %v817 = vrot.slane %v815, 4
      %v818 = vor.u32 %v814, %v817
      %v820 = vshrl.u32 %v570, 16
      %v822 = vrot.slane %v820, 3
      %v823 = vshll.u32 %v570, 16
      %v825 = vrot.slane %v823, 4
      %v826 = vor.u32 %v822, %v825
      %v827 = vsel %vm322, %v818, %v826
      %v829 = vshrl.u32 %v571, 16
      %v831 = vrot.slane %v829, 3
      %v832 = vshll.u32 %v571, 16
      %v834 = vrot.slane %v832, 4
      %v835 = vor.u32 %v831, %v834
      %v837 = vshrl.u32 %v572, 16
      %v839 = vrot.slane %v837, 3
      %v840 = vshll.u32 %v572, 16
      %v842 = vrot.slane %v840, 4
      %v843 = vor.u32 %v839, %v842
      %v844 = vsel %vm322, %v835, %v843
      %v845 = vld [vmem:[#allocation2] sm:$0xf0]
      %v846 = vld [vmem:[#allocation2 + $0x10] sm:$0xf0]
      %v847 = vld [vmem:[#allocation2 + $0x20] sm:$0xf0]
      %v848 = vld [vmem:[#allocation2 + $0x30] sm:$0xf0]
      %v849 = vld [vmem:[#allocation2 + $0x40] sm:$0xf0]
      %v850 = vld [vmem:[#allocation2 + $0x50] sm:$0xf0]
      %v851 = vld [vmem:[#allocation2 + $0x60] sm:$0xf0]
      %v852 = vld [vmem:[#allocation2 + $0x70] sm:$0xf0]
      %v853 = vld [vmem:[#allocation2 + $0x80] sm:$0xf0]
      %v854 = vld [vmem:[#allocation2 + $0x90] sm:$0xf0]
      %v855 = vld [vmem:[#allocation2 + $0xa0] sm:$0xf0]
      %v856 = vld [vmem:[#allocation2 + $0xb0] sm:$0xf0]
      %v857 = vld [vmem:[#allocation2 + $0xc0] sm:$0xf0]
      %v858 = vld [vmem:[#allocation2 + $0xd0] sm:$0xf0]
      %v859 = vld [vmem:[#allocation2 + $0xe0] sm:$0xf0]
      %v860 = vld [vmem:[#allocation2 + $0xf0] sm:$0xf0]
      %vm893 = vcmask 1043456
      %v894 = vrot.slane %v845, 4
      %v895 = vrot.slane %v542, 4
      %v896 = vsel %vm893, %v894, %v895
      %v897 = vrot.slane %v846, 4
      %v898 = vrot.slane %v544, 4
      %v899 = vsel %vm893, %v897, %v898
      %v900 = vrot.slane %v847, 4
      %v901 = vrot.slane %v546, 4
      %v902 = vsel %vm893, %v900, %v901
      %v903 = vrot.slane %v848, 4
      %v904 = vrot.slane %v548, 4
      %v905 = vsel %vm893, %v903, %v904
      %v906 = vrot.slane %v849, 4
      %v907 = vrot.slane %v550, 4
      %v908 = vsel %vm893, %v906, %v907
      %v909 = vrot.slane %v850, 4
      %v910 = vrot.slane %v552, 4
      %v911 = vsel %vm893, %v909, %v910
      %v912 = vrot.slane %v851, 4
      %v913 = vrot.slane %v554, 4
      %v914 = vsel %vm893, %v912, %v913
      %v915 = vrot.slane %v852, 4
      %v916 = vrot.slane %v556, 4
      %v917 = vsel %vm893, %v915, %v916
      %v918 = vrot.slane %v853, 4
      %v919 = vrot.slane %v558, 4
      %v920 = vsel %vm893, %v918, %v919
      %v921 = vrot.slane %v854, 4
      %v922 = vrot.slane %v560, 4
      %v923 = vsel %vm893, %v921, %v922
      %v924 = vrot.slane %v855, 4
      %v925 = vrot.slane %v562, 4
      %v926 = vsel %vm893, %v924, %v925
      %v927 = vrot.slane %v856, 4
      %v928 = vrot.slane %v564, 4
      %v929 = vsel %vm893, %v927, %v928
      %v930 = vrot.slane %v857, 4
      %v931 = vrot.slane %v566, 4
      %v932 = vsel %vm893, %v930, %v931
      %v933 = vrot.slane %v858, 4
      %v934 = vrot.slane %v568, 4
      %v935 = vsel %vm893, %v933, %v934
      %v936 = vrot.slane %v859, 4
      %v937 = vrot.slane %v570, 4
      %v938 = vsel %vm893, %v936, %v937
      %v939 = vrot.slane %v860, 4
      %v940 = vrot.slane %v572, 4
      %v941 = vsel %vm893, %v939, %v940
      %v942 = vld [vmem:[#allocation2 + $0x8] sm:$0x1f]
      %v943 = vld [vmem:[#allocation2 + $0x18] sm:$0x1f]
      %v944 = vld [vmem:[#allocation2 + $0x28] sm:$0x1f]
      %v945 = vld [vmem:[#allocation2 + $0x38] sm:$0x1f]
      %v946 = vld [vmem:[#allocation2 + $0x48] sm:$0x1f]
      %v947 = vld [vmem:[#allocation2 + $0x58] sm:$0x1f]
      %v948 = vld [vmem:[#allocation2 + $0x68] sm:$0x1f]
      %v949 = vld [vmem:[#allocation2 + $0x78] sm:$0x1f]
      %v950 = vld [vmem:[#allocation2 + $0x88] sm:$0x1f]
      %v951 = vld [vmem:[#allocation2 + $0x98] sm:$0x1f]
      %v952 = vld [vmem:[#allocation2 + $0xa8] sm:$0x1f]
      %v953 = vld [vmem:[#allocation2 + $0xb8] sm:$0x1f]
      %v954 = vld [vmem:[#allocation2 + $0xc8] sm:$0x1f]
      %v955 = vld [vmem:[#allocation2 + $0xd8] sm:$0x1f]
      %v956 = vld [vmem:[#allocation2 + $0xe8] sm:$0x1f]
      %v957 = vld [vmem:[#allocation2 + $0xf8] sm:$0x1f]
      %vm958 = vsmask.f32 3328
      %v960 = vshrl.u32 %v845, 16
      %v962 = vrot.slane %v960, 4
      %v963 = vshll.u32 %v845, 16
      %v965 = vrot.slane %v963, 5
      %v966 = vor.u32 %v962, %v965
      %v968 = vshrl.u32 %v942, 16
      %v970 = vrot.slane %v968, 4
      %v971 = vshll.u32 %v942, 16
      %v973 = vrot.slane %v971, 5
      %v974 = vor.u32 %v970, %v973
      %v975 = vsel %vm958, %v966, %v974
      %v977 = vshrl.u32 %v846, 16
      %v979 = vrot.slane %v977, 4
      %v980 = vshll.u32 %v846, 16
      %v982 = vrot.slane %v980, 5
      %v983 = vor.u32 %v979, %v982
      %v985 = vshrl.u32 %v943, 16
      %v987 = vrot.slane %v985, 4
      %v988 = vshll.u32 %v943, 16
      %v990 = vrot.slane %v988, 5
      %v991 = vor.u32 %v987, %v990
      %v992 = vsel %vm958, %v983, %v991
      %v994 = vshrl.u32 %v847, 16
      %v996 = vrot.slane %v994, 4
      %v997 = vshll.u32 %v847, 16
      %v999 = vrot.slane %v997, 5
      %v1000 = vor.u32 %v996, %v999
      %v1002 = vshrl.u32 %v944, 16
      %v1004 = vrot.slane %v1002, 4
      %v1005 = vshll.u32 %v944, 16
      %v1007 = vrot.slane %v1005, 5
      %v1008 = vor.u32 %v1004, %v1007
      %v1009 = vsel %vm958, %v1000, %v1008
      %v1011 = vshrl.u32 %v848, 16
      %v1013 = vrot.slane %v1011, 4
      %v1014 = vshll.u32 %v848, 16
      %v1016 = vrot.slane %v1014, 5
      %v1017 = vor.u32 %v1013, %v1016
      %v1019 = vshrl.u32 %v945, 16
      %v1021 = vrot.slane %v1019, 4
      %v1022 = vshll.u32 %v945, 16
      %v1024 = vrot.slane %v1022, 5
      %v1025 = vor.u32 %v1021, %v1024
      %v1026 = vsel %vm958, %v1017, %v1025
      %v1028 = vshrl.u32 %v849, 16
      %v1030 = vrot.slane %v1028, 4
      %v1031 = vshll.u32 %v849, 16
      %v1033 = vrot.slane %v1031, 5
      %v1034 = vor.u32 %v1030, %v1033
      %v1036 = vshrl.u32 %v946, 16
      %v1038 = vrot.slane %v1036, 4
      %v1039 = vshll.u32 %v946, 16
      %v1041 = vrot.slane %v1039, 5
      %v1042 = vor.u32 %v1038, %v1041
      %v1043 = vsel %vm958, %v1034, %v1042
      %v1045 = vshrl.u32 %v850, 16
      %v1047 = vrot.slane %v1045, 4
      %v1048 = vshll.u32 %v850, 16
      %v1050 = vrot.slane %v1048, 5
      %v1051 = vor.u32 %v1047, %v1050
      %v1053 = vshrl.u32 %v947, 16
      %v1055 = vrot.slane %v1053, 4
      %v1056 = vshll.u32 %v947, 16
      %v1058 = vrot.slane %v1056, 5
      %v1059 = vor.u32 %v1055, %v1058
      %v1060 = vsel %vm958, %v1051, %v1059
      %v1062 = vshrl.u32 %v851, 16
      %v1064 = vrot.slane %v1062, 4
      %v1065 = vshll.u32 %v851, 16
      %v1067 = vrot.slane %v1065, 5
      %v1068 = vor.u32 %v1064, %v1067
      %v1070 = vshrl.u32 %v948, 16
      %v1072 = vrot.slane %v1070, 4
      %v1073 = vshll.u32 %v948, 16
      %v1075 = vrot.slane %v1073, 5
      %v1076 = vor.u32 %v1072, %v1075
      %v1077 = vsel %vm958, %v1068, %v1076
      %v1079 = vshrl.u32 %v852, 16
      %v1081 = vrot.slane %v1079, 4
      %v1082 = vshll.u32 %v852, 16
      %v1084 = vrot.slane %v1082, 5
      %v1085 = vor.u32 %v1081, %v1084
      %v1087 = vshrl.u32 %v949, 16
      %v1089 = vrot.slane %v1087, 4
      %v1090 = vshll.u32 %v949, 16
      %v1092 = vrot.slane %v1090, 5
      %v1093 = vor.u32 %v1089, %v1092
      %v1094 = vsel %vm958, %v1085, %v1093
      %v1096 = vshrl.u32 %v853, 16
      %v1098 = vrot.slane %v1096, 4
      %v1099 = vshll.u32 %v853, 16
      %v1101 = vrot.slane %v1099, 5
      %v1102 = vor.u32 %v1098, %v1101
      %v1104 = vshrl.u32 %v950, 16
      %v1106 = vrot.slane %v1104, 4
      %v1107 = vshll.u32 %v950, 16
      %v1109 = vrot.slane %v1107, 5
      %v1110 = vor.u32 %v1106, %v1109
      %v1111 = vsel %vm958, %v1102, %v1110
      %v1113 = vshrl.u32 %v854, 16
      %v1115 = vrot.slane %v1113, 4
      %v1116 = vshll.u32 %v854, 16
      %v1118 = vrot.slane %v1116, 5
      %v1119 = vor.u32 %v1115, %v1118
      %v1121 = vshrl.u32 %v951, 16
      %v1123 = vrot.slane %v1121, 4
      %v1124 = vshll.u32 %v951, 16
      %v1126 = vrot.slane %v1124, 5
      %v1127 = vor.u32 %v1123, %v1126
      %v1128 = vsel %vm958, %v1119, %v1127
      %v1130 = vshrl.u32 %v855, 16
      %v1132 = vrot.slane %v1130, 4
      %v1133 = vshll.u32 %v855, 16
      %v1135 = vrot.slane %v1133, 5
      %v1136 = vor.u32 %v1132, %v1135
      %v1138 = vshrl.u32 %v952, 16
      %v1140 = vrot.slane %v1138, 4
      %v1141 = vshll.u32 %v952, 16
      %v1143 = vrot.slane %v1141, 5
      %v1144 = vor.u32 %v1140, %v1143
      %v1145 = vsel %vm958, %v1136, %v1144
      %v1147 = vshrl.u32 %v856, 16
      %v1149 = vrot.slane %v1147, 4
      %v1150 = vshll.u32 %v856, 16
      %v1152 = vrot.slane %v1150, 5
      %v1153 = vor.u32 %v1149, %v1152
      %v1155 = vshrl.u32 %v953, 16
      %v1157 = vrot.slane %v1155, 4
      %v1158 = vshll.u32 %v953, 16
      %v1160 = vrot.slane %v1158, 5
      %v1161 = vor.u32 %v1157, %v1160
      %v1162 = vsel %vm958, %v1153, %v1161
      %v1164 = vshrl.u32 %v857, 16
      %v1166 = vrot.slane %v1164, 4
      %v1167 = vshll.u32 %v857, 16
      %v1169 = vrot.slane %v1167, 5
      %v1170 = vor.u32 %v1166, %v1169
      %v1172 = vshrl.u32 %v954, 16
      %v1174 = vrot.slane %v1172, 4
      %v1175 = vshll.u32 %v954, 16
      %v1177 = vrot.slane %v1175, 5
      %v1178 = vor.u32 %v1174, %v1177
      %v1179 = vsel %vm958, %v1170, %v1178
      %v1181 = vshrl.u32 %v858, 16
      %v1183 = vrot.slane %v1181, 4
      %v1184 = vshll.u32 %v858, 16
      %v1186 = vrot.slane %v1184, 5
      %v1187 = vor.u32 %v1183, %v1186
      %v1189 = vshrl.u32 %v955, 16
      %v1191 = vrot.slane %v1189, 4
      %v1192 = vshll.u32 %v955, 16
      %v1194 = vrot.slane %v1192, 5
      %v1195 = vor.u32 %v1191, %v1194
      %v1196 = vsel %vm958, %v1187, %v1195
      %v1198 = vshrl.u32 %v859, 16
      %v1200 = vrot.slane %v1198, 4
      %v1201 = vshll.u32 %v859, 16
      %v1203 = vrot.slane %v1201, 5
      %v1204 = vor.u32 %v1200, %v1203
      %v1206 = vshrl.u32 %v956, 16
      %v1208 = vrot.slane %v1206, 4
      %v1209 = vshll.u32 %v956, 16
      %v1211 = vrot.slane %v1209, 5
      %v1212 = vor.u32 %v1208, %v1211
      %v1213 = vsel %vm958, %v1204, %v1212
      %v1215 = vshrl.u32 %v860, 16
      %v1217 = vrot.slane %v1215, 4
      %v1218 = vshll.u32 %v860, 16
      %v1220 = vrot.slane %v1218, 5
      %v1221 = vor.u32 %v1217, %v1220
      %v1223 = vshrl.u32 %v957, 16
      %v1225 = vrot.slane %v1223, 4
      %v1226 = vshll.u32 %v957, 16
      %v1228 = vrot.slane %v1226, 5
      %v1229 = vor.u32 %v1225, %v1228
      %v1230 = vsel %vm958, %v1221, %v1229
      %v1231 = vld [vmem:[%s506] sm:$0xf8]
      %v1232 = vld [vmem:[%s506 + $0x8] sm:$0xf]
      %v1233 = vld [vmem:[%s506 + $0x10] sm:$0xf8]
      %v1234 = vld [vmem:[%s506 + $0x18] sm:$0xf]
      %v1235 = vld [vmem:[%s506 + $0x20] sm:$0xf8]
      %v1236 = vld [vmem:[%s506 + $0x28] sm:$0xf]
      %v1237 = vld [vmem:[%s506 + $0x30] sm:$0xf8]
      %v1238 = vld [vmem:[%s506 + $0x38] sm:$0xf]
      %v1239 = vld [vmem:[%s506 + $0x40] sm:$0xf8]
      %v1240 = vld [vmem:[%s506 + $0x48] sm:$0xf]
      %v1241 = vld [vmem:[%s506 + $0x50] sm:$0xf8]
      %v1242 = vld [vmem:[%s506 + $0x58] sm:$0xf]
      %v1243 = vld [vmem:[%s506 + $0x60] sm:$0xf8]
      %v1244 = vld [vmem:[%s506 + $0x68] sm:$0xf]
      %v1245 = vld [vmem:[%s506 + $0x70] sm:$0xf8]
      %v1246 = vld [vmem:[%s506 + $0x78] sm:$0xf]
      %v1247 = vld [vmem:[%s506 + $0x80] sm:$0xf8]
      %v1248 = vld [vmem:[%s506 + $0x88] sm:$0xf]
      %v1249 = vld [vmem:[%s506 + $0x90] sm:$0xf8]
      %v1250 = vld [vmem:[%s506 + $0x98] sm:$0xf]
      %v1251 = vld [vmem:[%s506 + $0xa0] sm:$0xf8]
      %v1252 = vld [vmem:[%s506 + $0xa8] sm:$0xf]
      %v1253 = vld [vmem:[%s506 + $0xb0] sm:$0xf8]
      %v1254 = vld [vmem:[%s506 + $0xb8] sm:$0xf]
      %v1255 = vld [vmem:[%s506 + $0xc0] sm:$0xf8]
      %v1256 = vld [vmem:[%s506 + $0xc8] sm:$0xf]
      %v1257 = vld [vmem:[%s506 + $0xd0] sm:$0xf8]
      %v1258 = vld [vmem:[%s506 + $0xd8] sm:$0xf]
      %v1259 = vld [vmem:[%s506 + $0xe0] sm:$0xf8]
      %v1260 = vld [vmem:[%s506 + $0xe8] sm:$0xf]
      %v1261 = vld [vmem:[%s506 + $0xf0] sm:$0xf8]
      %v1262 = vld [vmem:[%s506 + $0xf8] sm:$0xf]
      %v1264 = vshrl.u32 %v1231, 16
      %v1266 = vrot.slane %v1264, 3
      %v1267 = vshll.u32 %v1231, 16
      %v1269 = vrot.slane %v1267, 4
      %v1270 = vor.u32 %v1266, %v1269
      %v1272 = vshrl.u32 %v1232, 16
      %v1274 = vrot.slane %v1272, 3
      %v1275 = vshll.u32 %v1232, 16
      %v1277 = vrot.slane %v1275, 4
      %v1278 = vor.u32 %v1274, %v1277
      %v1279 = vsel %vm322, %v1270, %v1278
      %v1281 = vshrl.u32 %v1233, 16
      %v1283 = vrot.slane %v1281, 3
      %v1284 = vshll.u32 %v1233, 16
      %v1286 = vrot.slane %v1284, 4
      %v1287 = vor.u32 %v1283, %v1286
      %v1289 = vshrl.u32 %v1234, 16
      %v1291 = vrot.slane %v1289, 3
      %v1292 = vshll.u32 %v1234, 16
      %v1294 = vrot.slane %v1292, 4
      %v1295 = vor.u32 %v1291, %v1294
      %v1296 = vsel %vm322, %v1287, %v1295
      %v1298 = vshrl.u32 %v1235, 16
      %v1300 = vrot.slane %v1298, 3
      %v1301 = vshll.u32 %v1235, 16
      %v1303 = vrot.slane %v1301, 4
      %v1304 = vor.u32 %v1300, %v1303
      %v1306 = vshrl.u32 %v1236, 16
      %v1308 = vrot.slane %v1306, 3
      %v1309 = vshll.u32 %v1236, 16
      %v1311 = vrot.slane %v1309, 4
      %v1312 = vor.u32 %v1308, %v1311
      %v1313 = vsel %vm322, %v1304, %v1312
      %v1315 = vshrl.u32 %v1237, 16
      %v1317 = vrot.slane %v1315, 3
      %v1318 = vshll.u32 %v1237, 16
      %v1320 = vrot.slane %v1318, 4
      %v1321 = vor.u32 %v1317, %v1320
      %v1323 = vshrl.u32 %v1238, 16
      %v1325 = vrot.slane %v1323, 3
      %v1326 = vshll.u32 %v1238, 16
      %v1328 = vrot.slane %v1326, 4
      %v1329 = vor.u32 %v1325, %v1328
      %v1330 = vsel %vm322, %v1321, %v1329
      %v1332 = vshrl.u32 %v1239, 16
      %v1334 = vrot.slane %v1332, 3
      %v1335 = vshll.u32 %v1239, 16
      %v1337 = vrot.slane %v1335, 4
      %v1338 = vor.u32 %v1334, %v1337
      %v1340 = vshrl.u32 %v1240, 16
      %v1342 = vrot.slane %v1340, 3
      %v1343 = vshll.u32 %v1240, 16
      %v1345 = vrot.slane %v1343, 4
      %v1346 = vor.u32 %v1342, %v1345
      %v1347 = vsel %vm322, %v1338, %v1346
      %v1349 = vshrl.u32 %v1241, 16
      %v1351 = vrot.slane %v1349, 3
      %v1352 = vshll.u32 %v1241, 16
      %v1354 = vrot.slane %v1352, 4
      %v1355 = vor.u32 %v1351, %v1354
      %v1357 = vshrl.u32 %v1242, 16
      %v1359 = vrot.slane %v1357, 3
      %v1360 = vshll.u32 %v1242, 16
      %v1362 = vrot.slane %v1360, 4
      %v1363 = vor.u32 %v1359, %v1362
      %v1364 = vsel %vm322, %v1355, %v1363
      %v1366 = vshrl.u32 %v1243, 16
      %v1368 = vrot.slane %v1366, 3
      %v1369 = vshll.u32 %v1243, 16
      %v1371 = vrot.slane %v1369, 4
      %v1372 = vor.u32 %v1368, %v1371
      %v1374 = vshrl.u32 %v1244, 16
      %v1376 = vrot.slane %v1374, 3
      %v1377 = vshll.u32 %v1244, 16
      %v1379 = vrot.slane %v1377, 4
      %v1380 = vor.u32 %v1376, %v1379
      %v1381 = vsel %vm322, %v1372, %v1380
      %v1383 = vshrl.u32 %v1245, 16
      %v1385 = vrot.slane %v1383, 3
      %v1386 = vshll.u32 %v1245, 16
      %v1388 = vrot.slane %v1386, 4
      %v1389 = vor.u32 %v1385, %v1388
      %v1391 = vshrl.u32 %v1246, 16
      %v1393 = vrot.slane %v1391, 3
      %v1394 = vshll.u32 %v1246, 16
      %v1396 = vrot.slane %v1394, 4
      %v1397 = vor.u32 %v1393, %v1396
      %v1398 = vsel %vm322, %v1389, %v1397
      %v1400 = vshrl.u32 %v1247, 16
      %v1402 = vrot.slane %v1400, 3
      %v1403 = vshll.u32 %v1247, 16
      %v1405 = vrot.slane %v1403, 4
      %v1406 = vor.u32 %v1402, %v1405
      %v1408 = vshrl.u32 %v1248, 16
      %v1410 = vrot.slane %v1408, 3
      %v1411 = vshll.u32 %v1248, 16
      %v1413 = vrot.slane %v1411, 4
      %v1414 = vor.u32 %v1410, %v1413
      %v1415 = vsel %vm322, %v1406, %v1414
      %v1417 = vshrl.u32 %v1249, 16
      %v1419 = vrot.slane %v1417, 3
      %v1420 = vshll.u32 %v1249, 16
      %v1422 = vrot.slane %v1420, 4
      %v1423 = vor.u32 %v1419, %v1422
      %v1425 = vshrl.u32 %v1250, 16
      %v1427 = vrot.slane %v1425, 3
      %v1428 = vshll.u32 %v1250, 16
      %v1430 = vrot.slane %v1428, 4
      %v1431 = vor.u32 %v1427, %v1430
      %v1432 = vsel %vm322, %v1423, %v1431
      %v1434 = vshrl.u32 %v1251, 16
      %v1436 = vrot.slane %v1434, 3
      %v1437 = vshll.u32 %v1251, 16
      %v1439 = vrot.slane %v1437, 4
      %v1440 = vor.u32 %v1436, %v1439
      %v1442 = vshrl.u32 %v1252, 16
      %v1444 = vrot.slane %v1442, 3
      %v1445 = vshll.u32 %v1252, 16
      %v1447 = vrot.slane %v1445, 4
      %v1448 = vor.u32 %v1444, %v1447
      %v1449 = vsel %vm322, %v1440, %v1448
      %v1451 = vshrl.u32 %v1253, 16
      %v1453 = vrot.slane %v1451, 3
      %v1454 = vshll.u32 %v1253, 16
      %v1456 = vrot.slane %v1454, 4
      %v1457 = vor.u32 %v1453, %v1456
      %v1459 = vshrl.u32 %v1254, 16
      %v1461 = vrot.slane %v1459, 3
      %v1462 = vshll.u32 %v1254, 16
      %v1464 = vrot.slane %v1462, 4
      %v1465 = vor.u32 %v1461, %v1464
      %v1466 = vsel %vm322, %v1457, %v1465
      %v1468 = vshrl.u32 %v1255, 16
      %v1470 = vrot.slane %v1468, 3
      %v1471 = vshll.u32 %v1255, 16
      %v1473 = vrot.slane %v1471, 4
      %v1474 = vor.u32 %v1470, %v1473
      %v1476 = vshrl.u32 %v1256, 16
      %v1478 = vrot.slane %v1476, 3
      %v1479 = vshll.u32 %v1256, 16
      %v1481 = vrot.slane %v1479, 4
      %v1482 = vor.u32 %v1478, %v1481
      %v1483 = vsel %vm322, %v1474, %v1482
      %v1485 = vshrl.u32 %v1257, 16
      %v1487 = vrot.slane %v1485, 3
      %v1488 = vshll.u32 %v1257, 16
      %v1490 = vrot.slane %v1488, 4
      %v1491 = vor.u32 %v1487, %v1490
      %v1493 = vshrl.u32 %v1258, 16
      %v1495 = vrot.slane %v1493, 3
      %v1496 = vshll.u32 %v1258, 16
      %v1498 = vrot.slane %v1496, 4
      %v1499 = vor.u32 %v1495, %v1498
      %v1500 = vsel %vm322, %v1491, %v1499
      %v1502 = vshrl.u32 %v1259, 16
      %v1504 = vrot.slane %v1502, 3
      %v1505 = vshll.u32 %v1259, 16
      %v1507 = vrot.slane %v1505, 4
      %v1508 = vor.u32 %v1504, %v1507
      %v1510 = vshrl.u32 %v1260, 16
      %v1512 = vrot.slane %v1510, 3
      %v1513 = vshll.u32 %v1260, 16
      %v1515 = vrot.slane %v1513, 4
      %v1516 = vor.u32 %v1512, %v1515
      %v1517 = vsel %vm322, %v1508, %v1516
      %v1519 = vshrl.u32 %v1261, 16
      %v1521 = vrot.slane %v1519, 3
      %v1522 = vshll.u32 %v1261, 16
      %v1524 = vrot.slane %v1522, 4
      %v1525 = vor.u32 %v1521, %v1524
      %v1527 = vshrl.u32 %v1262, 16
      %v1529 = vrot.slane %v1527, 3
      %v1530 = vshll.u32 %v1262, 16
      %v1532 = vrot.slane %v1530, 4
      %v1533 = vor.u32 %v1529, %v1532
      %v1534 = vsel %vm322, %v1525, %v1533
      %v1535 = vld [vmem:[%s506] sm:$0xf0]
      %v1536 = vld [vmem:[%s506 + $0x10] sm:$0xf0]
      %v1537 = vld [vmem:[%s506 + $0x20] sm:$0xf0]
      %v1538 = vld [vmem:[%s506 + $0x30] sm:$0xf0]
      %v1539 = vld [vmem:[%s506 + $0x40] sm:$0xf0]
      %v1540 = vld [vmem:[%s506 + $0x50] sm:$0xf0]
      %v1541 = vld [vmem:[%s506 + $0x60] sm:$0xf0]
      %v1542 = vld [vmem:[%s506 + $0x70] sm:$0xf0]
      %v1543 = vld [vmem:[%s506 + $0x80] sm:$0xf0]
      %v1544 = vld [vmem:[%s506 + $0x90] sm:$0xf0]
      %v1545 = vld [vmem:[%s506 + $0xa0] sm:$0xf0]
      %v1546 = vld [vmem:[%s506 + $0xb0] sm:$0xf0]
      %v1547 = vld [vmem:[%s506 + $0xc0] sm:$0xf0]
      %v1548 = vld [vmem:[%s506 + $0xd0] sm:$0xf0]
      %v1549 = vld [vmem:[%s506 + $0xe0] sm:$0xf0]
      %v1550 = vld [vmem:[%s506 + $0xf0] sm:$0xf0]
      %v1583 = vrot.slane %v1535, 4
      %v1584 = vrot.slane %v1232, 4
      %v1585 = vsel %vm893, %v1583, %v1584
      %v1586 = vrot.slane %v1536, 4
      %v1587 = vrot.slane %v1234, 4
      %v1588 = vsel %vm893, %v1586, %v1587
      %v1589 = vrot.slane %v1537, 4
      %v1590 = vrot.slane %v1236, 4
      %v1591 = vsel %vm893, %v1589, %v1590
      %v1592 = vrot.slane %v1538, 4
      %v1593 = vrot.slane %v1238, 4
      %v1594 = vsel %vm893, %v1592, %v1593
      %v1595 = vrot.slane %v1539, 4
      %v1596 = vrot.slane %v1240, 4
      %v1597 = vsel %vm893, %v1595, %v1596
      %v1598 = vrot.slane %v1540, 4
      %v1599 = vrot.slane %v1242, 4
      %v1600 = vsel %vm893, %v1598, %v1599
      %v1601 = vrot.slane %v1541, 4
      %v1602 = vrot.slane %v1244, 4
      %v1603 = vsel %vm893, %v1601, %v1602
      %v1604 = vrot.slane %v1542, 4
      %v1605 = vrot.slane %v1246, 4
      %v1606 = vsel %vm893, %v1604, %v1605
      %v1607 = vrot.slane %v1543, 4
      %v1608 = vrot.slane %v1248, 4
      %v1609 = vsel %vm893, %v1607, %v1608
      %v1610 = vrot.slane %v1544, 4
      %v1611 = vrot.slane %v1250, 4
      %v1612 = vsel %vm893, %v1610, %v1611
      %v1613 = vrot.slane %v1545, 4
      %v1614 = vrot.slane %v1252, 4
      %v1615 = vsel %vm893, %v1613, %v1614
      %v1616 = vrot.slane %v1546, 4
      %v1617 = vrot.slane %v1254, 4
      %v1618 = vsel %vm893, %v1616, %v1617
      %v1619 = vrot.slane %v1547, 4
      %v1620 = vrot.slane %v1256, 4
      %v1621 = vsel %vm893, %v1619, %v1620
      %v1622 = vrot.slane %v1548, 4
      %v1623 = vrot.slane %v1258, 4
      %v1624 = vsel %vm893, %v1622, %v1623
      %v1625 = vrot.slane %v1549, 4
      %v1626 = vrot.slane %v1260, 4
      %v1627 = vsel %vm893, %v1625, %v1626
      %v1628 = vrot.slane %v1550, 4
      %v1629 = vrot.slane %v1262, 4
      %v1630 = vsel %vm893, %v1628, %v1629
      %v1631 = vld [vmem:[%s506 + $0x8] sm:$0x1f]
      %v1632 = vld [vmem:[%s506 + $0x18] sm:$0x1f]
      %v1633 = vld [vmem:[%s506 + $0x28] sm:$0x1f]
      %v1634 = vld [vmem:[%s506 + $0x38] sm:$0x1f]
      %v1635 = vld [vmem:[%s506 + $0x48] sm:$0x1f]
      %v1636 = vld [vmem:[%s506 + $0x58] sm:$0x1f]
      %v1637 = vld [vmem:[%s506 + $0x68] sm:$0x1f]
      %v1638 = vld [vmem:[%s506 + $0x78] sm:$0x1f]
      %v1639 = vld [vmem:[%s506 + $0x88] sm:$0x1f]
      %v1640 = vld [vmem:[%s506 + $0x98] sm:$0x1f]
      %v1641 = vld [vmem:[%s506 + $0xa8] sm:$0x1f]
      %v1642 = vld [vmem:[%s506 + $0xb8] sm:$0x1f]
      %v1643 = vld [vmem:[%s506 + $0xc8] sm:$0x1f]
      %v1644 = vld [vmem:[%s506 + $0xd8] sm:$0x1f]
      %v1645 = vld [vmem:[%s506 + $0xe8] sm:$0x1f]
      %v1646 = vld [vmem:[%s506 + $0xf8] sm:$0x1f]
      %v1648 = vshrl.u32 %v1535, 16
      %v1650 = vrot.slane %v1648, 4
      %v1651 = vshll.u32 %v1535, 16
      %v1653 = vrot.slane %v1651, 5
      %v1654 = vor.u32 %v1650, %v1653
      %v1656 = vshrl.u32 %v1631, 16
      %v1658 = vrot.slane %v1656, 4
      %v1659 = vshll.u32 %v1631, 16
      %v1661 = vrot.slane %v1659, 5
      %v1662 = vor.u32 %v1658, %v1661
      %v1663 = vsel %vm958, %v1654, %v1662
      %v1665 = vshrl.u32 %v1536, 16
      %v1667 = vrot.slane %v1665, 4
      %v1668 = vshll.u32 %v1536, 16
      %v1670 = vrot.slane %v1668, 5
      %v1671 = vor.u32 %v1667, %v1670
      %v1673 = vshrl.u32 %v1632, 16
      %v1675 = vrot.slane %v1673, 4
      %v1676 = vshll.u32 %v1632, 16
      %v1678 = vrot.slane %v1676, 5
      %v1679 = vor.u32 %v1675, %v1678
      %v1680 = vsel %vm958, %v1671, %v1679
      %v1682 = vshrl.u32 %v1537, 16
      %v1684 = vrot.slane %v1682, 4
      %v1685 = vshll.u32 %v1537, 16
      %v1687 = vrot.slane %v1685, 5
      %v1688 = vor.u32 %v1684, %v1687
      %v1690 = vshrl.u32 %v1633, 16
      %v1692 = vrot.slane %v1690, 4
      %v1693 = vshll.u32 %v1633, 16
      %v1695 = vrot.slane %v1693, 5
      %v1696 = vor.u32 %v1692, %v1695
      %v1697 = vsel %vm958, %v1688, %v1696
      %v1699 = vshrl.u32 %v1538, 16
      %v1701 = vrot.slane %v1699, 4
      %v1702 = vshll.u32 %v1538, 16
      %v1704 = vrot.slane %v1702, 5
      %v1705 = vor.u32 %v1701, %v1704
      %v1707 = vshrl.u32 %v1634, 16
      %v1709 = vrot.slane %v1707, 4
      %v1710 = vshll.u32 %v1634, 16
      %v1712 = vrot.slane %v1710, 5
      %v1713 = vor.u32 %v1709, %v1712
      %v1714 = vsel %vm958, %v1705, %v1713
      %v1716 = vshrl.u32 %v1539, 16
      %v1718 = vrot.slane %v1716, 4
      %v1719 = vshll.u32 %v1539, 16
      %v1721 = vrot.slane %v1719, 5
      %v1722 = vor.u32 %v1718, %v1721
      %v1724 = vshrl.u32 %v1635, 16
      %v1726 = vrot.slane %v1724, 4
      %v1727 = vshll.u32 %v1635, 16
      %v1729 = vrot.slane %v1727, 5
      %v1730 = vor.u32 %v1726, %v1729
      %v1731 = vsel %vm958, %v1722, %v1730
      %v1733 = vshrl.u32 %v1540, 16
      %v1735 = vrot.slane %v1733, 4
      %v1736 = vshll.u32 %v1540, 16
      %v1738 = vrot.slane %v1736, 5
      %v1739 = vor.u32 %v1735, %v1738
      %v1741 = vshrl.u32 %v1636, 16
      %v1743 = vrot.slane %v1741, 4
      %v1744 = vshll.u32 %v1636, 16
      %v1746 = vrot.slane %v1744, 5
      %v1747 = vor.u32 %v1743, %v1746
      %v1748 = vsel %vm958, %v1739, %v1747
      %v1750 = vshrl.u32 %v1541, 16
      %v1752 = vrot.slane %v1750, 4
      %v1753 = vshll.u32 %v1541, 16
      %v1755 = vrot.slane %v1753, 5
      %v1756 = vor.u32 %v1752, %v1755
      %v1758 = vshrl.u32 %v1637, 16
      %v1760 = vrot.slane %v1758, 4
      %v1761 = vshll.u32 %v1637, 16
      %v1763 = vrot.slane %v1761, 5
      %v1764 = vor.u32 %v1760, %v1763
      %v1765 = vsel %vm958, %v1756, %v1764
      %v1767 = vshrl.u32 %v1542, 16
      %v1769 = vrot.slane %v1767, 4
      %v1770 = vshll.u32 %v1542, 16
      %v1772 = vrot.slane %v1770, 5
      %v1773 = vor.u32 %v1769, %v1772
      %v1775 = vshrl.u32 %v1638, 16
      %v1777 = vrot.slane %v1775, 4
      %v1778 = vshll.u32 %v1638, 16
      %v1780 = vrot.slane %v1778, 5
      %v1781 = vor.u32 %v1777, %v1780
      %v1782 = vsel %vm958, %v1773, %v1781
      %v1784 = vshrl.u32 %v1543, 16
      %v1786 = vrot.slane %v1784, 4
      %v1787 = vshll.u32 %v1543, 16
      %v1789 = vrot.slane %v1787, 5
      %v1790 = vor.u32 %v1786, %v1789
      %v1792 = vshrl.u32 %v1639, 16
      %v1794 = vrot.slane %v1792, 4
      %v1795 = vshll.u32 %v1639, 16
      %v1797 = vrot.slane %v1795, 5
      %v1798 = vor.u32 %v1794, %v1797
      %v1799 = vsel %vm958, %v1790, %v1798
      %v1801 = vshrl.u32 %v1544, 16
      %v1803 = vrot.slane %v1801, 4
      %v1804 = vshll.u32 %v1544, 16
      %v1806 = vrot.slane %v1804, 5
      %v1807 = vor.u32 %v1803, %v1806
      %v1809 = vshrl.u32 %v1640, 16
      %v1811 = vrot.slane %v1809, 4
      %v1812 = vshll.u32 %v1640, 16
      %v1814 = vrot.slane %v1812, 5
      %v1815 = vor.u32 %v1811, %v1814
      %v1816 = vsel %vm958, %v1807, %v1815
      %v1818 = vshrl.u32 %v1545, 16
      %v1820 = vrot.slane %v1818, 4
      %v1821 = vshll.u32 %v1545, 16
      %v1823 = vrot.slane %v1821, 5
      %v1824 = vor.u32 %v1820, %v1823
      %v1826 = vshrl.u32 %v1641, 16
      %v1828 = vrot.slane %v1826, 4
      %v1829 = vshll.u32 %v1641, 16
      %v1831 = vrot.slane %v1829, 5
      %v1832 = vor.u32 %v1828, %v1831
      %v1833 = vsel %vm958, %v1824, %v1832
      %v1835 = vshrl.u32 %v1546, 16
      %v1837 = vrot.slane %v1835, 4
      %v1838 = vshll.u32 %v1546, 16
      %v1840 = vrot.slane %v1838, 5
      %v1841 = vor.u32 %v1837, %v1840
      %v1843 = vshrl.u32 %v1642, 16
      %v1845 = vrot.slane %v1843, 4
      %v1846 = vshll.u32 %v1642, 16
      %v1848 = vrot.slane %v1846, 5
      %v1849 = vor.u32 %v1845, %v1848
      %v1850 = vsel %vm958, %v1841, %v1849
      %v1852 = vshrl.u32 %v1547, 16
      %v1854 = vrot.slane %v1852, 4
      %v1855 = vshll.u32 %v1547, 16
      %v1857 = vrot.slane %v1855, 5
      %v1858 = vor.u32 %v1854, %v1857
      %v1860 = vshrl.u32 %v1643, 16
      %v1862 = vrot.slane %v1860, 4
      %v1863 = vshll.u32 %v1643, 16
      %v1865 = vrot.slane %v1863, 5
      %v1866 = vor.u32 %v1862, %v1865
      %v1867 = vsel %vm958, %v1858, %v1866
      %v1869 = vshrl.u32 %v1548, 16
      %v1871 = vrot.slane %v1869, 4
      %v1872 = vshll.u32 %v1548, 16
      %v1874 = vrot.slane %v1872, 5
      %v1875 = vor.u32 %v1871, %v1874
      %v1877 = vshrl.u32 %v1644, 16
      %v1879 = vrot.slane %v1877, 4
      %v1880 = vshll.u32 %v1644, 16
      %v1882 = vrot.slane %v1880, 5
      %v1883 = vor.u32 %v1879, %v1882
      %v1884 = vsel %vm958, %v1875, %v1883
      %v1886 = vshrl.u32 %v1549, 16
      %v1888 = vrot.slane %v1886, 4
      %v1889 = vshll.u32 %v1549, 16
      %v1891 = vrot.slane %v1889, 5
      %v1892 = vor.u32 %v1888, %v1891
      %v1894 = vshrl.u32 %v1645, 16
      %v1896 = vrot.slane %v1894, 4
      %v1897 = vshll.u32 %v1645, 16
      %v1899 = vrot.slane %v1897, 5
      %v1900 = vor.u32 %v1896, %v1899
      %v1901 = vsel %vm958, %v1892, %v1900
      %v1903 = vshrl.u32 %v1550, 16
      %v1905 = vrot.slane %v1903, 4
      %v1906 = vshll.u32 %v1550, 16
      %v1908 = vrot.slane %v1906, 5
      %v1909 = vor.u32 %v1905, %v1908
      %v1911 = vshrl.u32 %v1646, 16
      %v1913 = vrot.slane %v1911, 4
      %v1914 = vshll.u32 %v1646, 16
      %v1916 = vrot.slane %v1914, 5
      %v1917 = vor.u32 %v1913, %v1916
      %v1918 = vsel %vm958, %v1909, %v1917
      %s1919 = scalar_lea.vmem [#allocation2], 32
      %v1920 = vld [vmem:[%s1919] sm:$0xf8]
      %v1921 = vld [vmem:[%s1919 + $0x8] sm:$0xf]
      %v1922 = vld [vmem:[%s1919 + $0x10] sm:$0xf8]
      %v1923 = vld [vmem:[%s1919 + $0x18] sm:$0xf]
      %v1924 = vld [vmem:[%s1919 + $0x20] sm:$0xf8]
      %v1925 = vld [vmem:[%s1919 + $0x28] sm:$0xf]
      %v1926 = vld [vmem:[%s1919 + $0x30] sm:$0xf8]
      %v1927 = vld [vmem:[%s1919 + $0x38] sm:$0xf]
      %v1928 = vld [vmem:[%s1919 + $0x40] sm:$0xf8]
      %v1929 = vld [vmem:[%s1919 + $0x48] sm:$0xf]
      %v1930 = vld [vmem:[%s1919 + $0x50] sm:$0xf8]
      %v1931 = vld [vmem:[%s1919 + $0x58] sm:$0xf]
      %v1932 = vld [vmem:[%s1919 + $0x60] sm:$0xf8]
      %v1933 = vld [vmem:[%s1919 + $0x68] sm:$0xf]
      %v1934 = vld [vmem:[%s1919 + $0x70] sm:$0xf8]
      %v1935 = vld [vmem:[%s1919 + $0x78] sm:$0xf]
      %v1936 = vld [vmem:[%s1919 + $0x80] sm:$0xf8]
      %v1937 = vld [vmem:[%s1919 + $0x88] sm:$0xf]
      %v1938 = vld [vmem:[%s1919 + $0x90] sm:$0xf8]
      %v1939 = vld [vmem:[%s1919 + $0x98] sm:$0xf]
      %v1940 = vld [vmem:[%s1919 + $0xa0] sm:$0xf8]
      %v1941 = vld [vmem:[%s1919 + $0xa8] sm:$0xf]
      %v1942 = vld [vmem:[%s1919 + $0xb0] sm:$0xf8]
      %v1943 = vld [vmem:[%s1919 + $0xb8] sm:$0xf]
      %v1944 = vld [vmem:[%s1919 + $0xc0] sm:$0xf8]
      %v1945 = vld [vmem:[%s1919 + $0xc8] sm:$0xf]
      %v1946 = vld [vmem:[%s1919 + $0xd0] sm:$0xf8]
      %v1947 = vld [vmem:[%s1919 + $0xd8] sm:$0xf]
      %v1948 = vld [vmem:[%s1919 + $0xe0] sm:$0xf8]
      %v1949 = vld [vmem:[%s1919 + $0xe8] sm:$0xf]
      %v1950 = vld [vmem:[%s1919 + $0xf0] sm:$0xf8]
      %v1951 = vld [vmem:[%s1919 + $0xf8] sm:$0xf]
      %v1953 = vshrl.u32 %v1920, 16
      %v1955 = vrot.slane %v1953, 3
      %v1956 = vshll.u32 %v1920, 16
      %v1958 = vrot.slane %v1956, 4
      %v1959 = vor.u32 %v1955, %v1958
      %v1961 = vshrl.u32 %v1921, 16
      %v1963 = vrot.slane %v1961, 3
      %v1964 = vshll.u32 %v1921, 16
      %v1966 = vrot.slane %v1964, 4
      %v1967 = vor.u32 %v1963, %v1966
      %v1968 = vsel %vm322, %v1959, %v1967
      %v1970 = vshrl.u32 %v1922, 16
      %v1972 = vrot.slane %v1970, 3
      %v1973 = vshll.u32 %v1922, 16
      %v1975 = vrot.slane %v1973, 4
      %v1976 = vor.u32 %v1972, %v1975
      %v1978 = vshrl.u32 %v1923, 16
      %v1980 = vrot.slane %v1978, 3
      %v1981 = vshll.u32 %v1923, 16
      %v1983 = vrot.slane %v1981, 4
      %v1984 = vor.u32 %v1980, %v1983
      %v1985 = vsel %vm322, %v1976, %v1984
      %v1987 = vshrl.u32 %v1924, 16
      %v1989 = vrot.slane %v1987, 3
      %v1990 = vshll.u32 %v1924, 16
      %v1992 = vrot.slane %v1990, 4
      %v1993 = vor.u32 %v1989, %v1992
      %v1995 = vshrl.u32 %v1925, 16
      %v1997 = vrot.slane %v1995, 3
      %v1998 = vshll.u32 %v1925, 16
      %v2000 = vrot.slane %v1998, 4
      %v2001 = vor.u32 %v1997, %v2000
      %v2002 = vsel %vm322, %v1993, %v2001
      %v2004 = vshrl.u32 %v1926, 16
      %v2006 = vrot.slane %v2004, 3
      %v2007 = vshll.u32 %v1926, 16
      %v2009 = vrot.slane %v2007, 4
      %v2010 = vor.u32 %v2006, %v2009
      %v2012 = vshrl.u32 %v1927, 16
      %v2014 = vrot.slane %v2012, 3
      %v2015 = vshll.u32 %v1927, 16
      %v2017 = vrot.slane %v2015, 4
      %v2018 = vor.u32 %v2014, %v2017
      %v2019 = vsel %vm322, %v2010, %v2018
      %v2021 = vshrl.u32 %v1928, 16
      %v2023 = vrot.slane %v2021, 3
      %v2024 = vshll.u32 %v1928, 16
      %v2026 = vrot.slane %v2024, 4
      %v2027 = vor.u32 %v2023, %v2026
      %v2029 = vshrl.u32 %v1929, 16
      %v2031 = vrot.slane %v2029, 3
      %v2032 = vshll.u32 %v1929, 16
      %v2034 = vrot.slane %v2032, 4
      %v2035 = vor.u32 %v2031, %v2034
      %v2036 = vsel %vm322, %v2027, %v2035
      %v2038 = vshrl.u32 %v1930, 16
      %v2040 = vrot.slane %v2038, 3
      %v2041 = vshll.u32 %v1930, 16
      %v2043 = vrot.slane %v2041, 4
      %v2044 = vor.u32 %v2040, %v2043
      %v2046 = vshrl.u32 %v1931, 16
      %v2048 = vrot.slane %v2046, 3
      %v2049 = vshll.u32 %v1931, 16
      %v2051 = vrot.slane %v2049, 4
      %v2052 = vor.u32 %v2048, %v2051
      %v2053 = vsel %vm322, %v2044, %v2052
      %v2055 = vshrl.u32 %v1932, 16
      %v2057 = vrot.slane %v2055, 3
      %v2058 = vshll.u32 %v1932, 16
      %v2060 = vrot.slane %v2058, 4
      %v2061 = vor.u32 %v2057, %v2060
      %v2063 = vshrl.u32 %v1933, 16
      %v2065 = vrot.slane %v2063, 3
      %v2066 = vshll.u32 %v1933, 16
      %v2068 = vrot.slane %v2066, 4
      %v2069 = vor.u32 %v2065, %v2068
      %v2070 = vsel %vm322, %v2061, %v2069
      %v2072 = vshrl.u32 %v1934, 16
      %v2074 = vrot.slane %v2072, 3
      %v2075 = vshll.u32 %v1934, 16
      %v2077 = vrot.slane %v2075, 4
      %v2078 = vor.u32 %v2074, %v2077
      %v2080 = vshrl.u32 %v1935, 16
      %v2082 = vrot.slane %v2080, 3
      %v2083 = vshll.u32 %v1935, 16
      %v2085 = vrot.slane %v2083, 4
      %v2086 = vor.u32 %v2082, %v2085
      %v2087 = vsel %vm322, %v2078, %v2086
      %v2089 = vshrl.u32 %v1936, 16
      %v2091 = vrot.slane %v2089, 3
      %v2092 = vshll.u32 %v1936, 16
      %v2094 = vrot.slane %v2092, 4
      %v2095 = vor.u32 %v2091, %v2094
      %v2097 = vshrl.u32 %v1937, 16
      %v2099 = vrot.slane %v2097, 3
      %v2100 = vshll.u32 %v1937, 16
      %v2102 = vrot.slane %v2100, 4
      %v2103 = vor.u32 %v2099, %v2102
      %v2104 = vsel %vm322, %v2095, %v2103
      %v2106 = vshrl.u32 %v1938, 16
      %v2108 = vrot.slane %v2106, 3
      %v2109 = vshll.u32 %v1938, 16
      %v2111 = vrot.slane %v2109, 4
      %v2112 = vor.u32 %v2108, %v2111
      %v2114 = vshrl.u32 %v1939, 16
      %v2116 = vrot.slane %v2114, 3
      %v2117 = vshll.u32 %v1939, 16
      %v2119 = vrot.slane %v2117, 4
      %v2120 = vor.u32 %v2116, %v2119
      %v2121 = vsel %vm322, %v2112, %v2120
      %v2123 = vshrl.u32 %v1940, 16
      %v2125 = vrot.slane %v2123, 3
      %v2126 = vshll.u32 %v1940, 16
      %v2128 = vrot.slane %v2126, 4
      %v2129 = vor.u32 %v2125, %v2128
      %v2131 = vshrl.u32 %v1941, 16
      %v2133 = vrot.slane %v2131, 3
      %v2134 = vshll.u32 %v1941, 16
      %v2136 = vrot.slane %v2134, 4
      %v2137 = vor.u32 %v2133, %v2136
      %v2138 = vsel %vm322, %v2129, %v2137
      %v2140 = vshrl.u32 %v1942, 16
      %v2142 = vrot.slane %v2140, 3
      %v2143 = vshll.u32 %v1942, 16
      %v2145 = vrot.slane %v2143, 4
      %v2146 = vor.u32 %v2142, %v2145
      %v2148 = vshrl.u32 %v1943, 16
      %v2150 = vrot.slane %v2148, 3
      %v2151 = vshll.u32 %v1943, 16
      %v2153 = vrot.slane %v2151, 4
      %v2154 = vor.u32 %v2150, %v2153
      %v2155 = vsel %vm322, %v2146, %v2154
      %v2157 = vshrl.u32 %v1944, 16
      %v2159 = vrot.slane %v2157, 3
      %v2160 = vshll.u32 %v1944, 16
      %v2162 = vrot.slane %v2160, 4
      %v2163 = vor.u32 %v2159, %v2162
      %v2165 = vshrl.u32 %v1945, 16
      %v2167 = vrot.slane %v2165, 3
      %v2168 = vshll.u32 %v1945, 16
      %v2170 = vrot.slane %v2168, 4
      %v2171 = vor.u32 %v2167, %v2170
      %v2172 = vsel %vm322, %v2163, %v2171
      %v2174 = vshrl.u32 %v1946, 16
      %v2176 = vrot.slane %v2174, 3
      %v2177 = vshll.u32 %v1946, 16
      %v2179 = vrot.slane %v2177, 4
      %v2180 = vor.u32 %v2176, %v2179
      %v2182 = vshrl.u32 %v1947, 16
      %v2184 = vrot.slane %v2182, 3
      %v2185 = vshll.u32 %v1947, 16
      %v2187 = vrot.slane %v2185, 4
      %v2188 = vor.u32 %v2184, %v2187
      %v2189 = vsel %vm322, %v2180, %v2188
      %v2191 = vshrl.u32 %v1948, 16
      %v2193 = vrot.slane %v2191, 3
      %v2194 = vshll.u32 %v1948, 16
      %v2196 = vrot.slane %v2194, 4
      %v2197 = vor.u32 %v2193, %v2196
      %v2199 = vshrl.u32 %v1949, 16
      %v2201 = vrot.slane %v2199, 3
      %v2202 = vshll.u32 %v1949, 16
      %v2204 = vrot.slane %v2202, 4
      %v2205 = vor.u32 %v2201, %v2204
      %v2206 = vsel %vm322, %v2197, %v2205
      %v2208 = vshrl.u32 %v1950, 16
      %v2210 = vrot.slane %v2208, 3
      %v2211 = vshll.u32 %v1950, 16
      %v2213 = vrot.slane %v2211, 4
      %v2214 = vor.u32 %v2210, %v2213
      %v2216 = vshrl.u32 %v1951, 16
      %v2218 = vrot.slane %v2216, 3
      %v2219 = vshll.u32 %v1951, 16
      %v2221 = vrot.slane %v2219, 4
      %v2222 = vor.u32 %v2218, %v2221
      %v2223 = vsel %vm322, %v2214, %v2222
      %v2224 = vld [vmem:[%s1919] sm:$0xf0]
      %v2225 = vld [vmem:[%s1919 + $0x10] sm:$0xf0]
      %v2226 = vld [vmem:[%s1919 + $0x20] sm:$0xf0]
      %v2227 = vld [vmem:[%s1919 + $0x30] sm:$0xf0]
      %v2228 = vld [vmem:[%s1919 + $0x40] sm:$0xf0]
      %v2229 = vld [vmem:[%s1919 + $0x50] sm:$0xf0]
      %v2230 = vld [vmem:[%s1919 + $0x60] sm:$0xf0]
      %v2231 = vld [vmem:[%s1919 + $0x70] sm:$0xf0]
      %v2232 = vld [vmem:[%s1919 + $0x80] sm:$0xf0]
      %v2233 = vld [vmem:[%s1919 + $0x90] sm:$0xf0]
      %v2234 = vld [vmem:[%s1919 + $0xa0] sm:$0xf0]
      %v2235 = vld [vmem:[%s1919 + $0xb0] sm:$0xf0]
      %v2236 = vld [vmem:[%s1919 + $0xc0] sm:$0xf0]
      %v2237 = vld [vmem:[%s1919 + $0xd0] sm:$0xf0]
      %v2238 = vld [vmem:[%s1919 + $0xe0] sm:$0xf0]
      %v2239 = vld [vmem:[%s1919 + $0xf0] sm:$0xf0]
      %v2272 = vrot.slane %v2224, 4
      %v2273 = vrot.slane %v1921, 4
      %v2274 = vsel %vm893, %v2272, %v2273
      %v2275 = vrot.slane %v2225, 4
      %v2276 = vrot.slane %v1923, 4
      %v2277 = vsel %vm893, %v2275, %v2276
      %v2278 = vrot.slane %v2226, 4
      %v2279 = vrot.slane %v1925, 4
      %v2280 = vsel %vm893, %v2278, %v2279
      %v2281 = vrot.slane %v2227, 4
      %v2282 = vrot.slane %v1927, 4
      %v2283 = vsel %vm893, %v2281, %v2282
      %v2284 = vrot.slane %v2228, 4
      %v2285 = vrot.slane %v1929, 4
      %v2286 = vsel %vm893, %v2284, %v2285
      %v2287 = vrot.slane %v2229, 4
      %v2288 = vrot.slane %v1931, 4
      %v2289 = vsel %vm893, %v2287, %v2288
      %v2290 = vrot.slane %v2230, 4
      %v2291 = vrot.slane %v1933, 4
      %v2292 = vsel %vm893, %v2290, %v2291
      %v2293 = vrot.slane %v2231, 4
      %v2294 = vrot.slane %v1935, 4
      %v2295 = vsel %vm893, %v2293, %v2294
      %v2296 = vrot.slane %v2232, 4
      %v2297 = vrot.slane %v1937, 4
      %v2298 = vsel %vm893, %v2296, %v2297
      %v2299 = vrot.slane %v2233, 4
      %v2300 = vrot.slane %v1939, 4
      %v2301 = vsel %vm893, %v2299, %v2300
      %v2302 = vrot.slane %v2234, 4
      %v2303 = vrot.slane %v1941, 4
      %v2304 = vsel %vm893, %v2302, %v2303
      %v2305 = vrot.slane %v2235, 4
      %v2306 = vrot.slane %v1943, 4
      %v2307 = vsel %vm893, %v2305, %v2306
      %v2308 = vrot.slane %v2236, 4
      %v2309 = vrot.slane %v1945, 4
      %v2310 = vsel %vm893, %v2308, %v2309
      %v2311 = vrot.slane %v2237, 4
      %v2312 = vrot.slane %v1947, 4
      %v2313 = vsel %vm893, %v2311, %v2312
      %v2314 = vrot.slane %v2238, 4
      %v2315 = vrot.slane %v1949, 4
      %v2316 = vsel %vm893, %v2314, %v2315
      %v2317 = vrot.slane %v2239, 4
      %v2318 = vrot.slane %v1951, 4
      %v2319 = vsel %vm893, %v2317, %v2318
      %v2320 = vld [vmem:[%s1919 + $0x8] sm:$0x1f]
      %v2321 = vld [vmem:[%s1919 + $0x18] sm:$0x1f]
      %v2322 = vld [vmem:[%s1919 + $0x28] sm:$0x1f]
      %v2323 = vld [vmem:[%s1919 + $0x38] sm:$0x1f]
      %v2324 = vld [vmem:[%s1919 + $0x48] sm:$0x1f]
      %v2325 = vld [vmem:[%s1919 + $0x58] sm:$0x1f]
      %v2326 = vld [vmem:[%s1919 + $0x68] sm:$0x1f]
      %v2327 = vld [vmem:[%s1919 + $0x78] sm:$0x1f]
      %v2328 = vld [vmem:[%s1919 + $0x88] sm:$0x1f]
      %v2329 = vld [vmem:[%s1919 + $0x98] sm:$0x1f]
      %v2330 = vld [vmem:[%s1919 + $0xa8] sm:$0x1f]
      %v2331 = vld [vmem:[%s1919 + $0xb8] sm:$0x1f]
      %v2332 = vld [vmem:[%s1919 + $0xc8] sm:$0x1f]
      %v2333 = vld [vmem:[%s1919 + $0xd8] sm:$0x1f]
      %v2334 = vld [vmem:[%s1919 + $0xe8] sm:$0x1f]
      %v2335 = vld [vmem:[%s1919 + $0xf8] sm:$0x1f]
      %v2337 = vshrl.u32 %v2224, 16
      %v2339 = vrot.slane %v2337, 4
      %v2340 = vshll.u32 %v2224, 16
      %v2342 = vrot.slane %v2340, 5
      %v2343 = vor.u32 %v2339, %v2342
      %v2345 = vshrl.u32 %v2320, 16
      %v2347 = vrot.slane %v2345, 4
      %v2348 = vshll.u32 %v2320, 16
      %v2350 = vrot.slane %v2348, 5
      %v2351 = vor.u32 %v2347, %v2350
      %v2352 = vsel %vm958, %v2343, %v2351
      %v2354 = vshrl.u32 %v2225, 16
      %v2356 = vrot.slane %v2354, 4
      %v2357 = vshll.u32 %v2225, 16
      %v2359 = vrot.slane %v2357, 5
      %v2360 = vor.u32 %v2356, %v2359
      %v2362 = vshrl.u32 %v2321, 16
      %v2364 = vrot.slane %v2362, 4
      %v2365 = vshll.u32 %v2321, 16
      %v2367 = vrot.slane %v2365, 5
      %v2368 = vor.u32 %v2364, %v2367
      %v2369 = vsel %vm958, %v2360, %v2368
      %v2371 = vshrl.u32 %v2226, 16
      %v2373 = vrot.slane %v2371, 4
      %v2374 = vshll.u32 %v2226, 16
      %v2376 = vrot.slane %v2374, 5
      %v2377 = vor.u32 %v2373, %v2376
      %v2379 = vshrl.u32 %v2322, 16
      %v2381 = vrot.slane %v2379, 4
      %v2382 = vshll.u32 %v2322, 16
      %v2384 = vrot.slane %v2382, 5
      %v2385 = vor.u32 %v2381, %v2384
      %v2386 = vsel %vm958, %v2377, %v2385
      %v2388 = vshrl.u32 %v2227, 16
      %v2390 = vrot.slane %v2388, 4
      %v2391 = vshll.u32 %v2227, 16
      %v2393 = vrot.slane %v2391, 5
      %v2394 = vor.u32 %v2390, %v2393
      %v2396 = vshrl.u32 %v2323, 16
      %v2398 = vrot.slane %v2396, 4
      %v2399 = vshll.u32 %v2323, 16
      %v2401 = vrot.slane %v2399, 5
      %v2402 = vor.u32 %v2398, %v2401
      %v2403 = vsel %vm958, %v2394, %v2402
      %v2405 = vshrl.u32 %v2228, 16
      %v2407 = vrot.slane %v2405, 4
      %v2408 = vshll.u32 %v2228, 16
      %v2410 = vrot.slane %v2408, 5
      %v2411 = vor.u32 %v2407, %v2410
      %v2413 = vshrl.u32 %v2324, 16
      %v2415 = vrot.slane %v2413, 4
      %v2416 = vshll.u32 %v2324, 16
      %v2418 = vrot.slane %v2416, 5
      %v2419 = vor.u32 %v2415, %v2418
      %v2420 = vsel %vm958, %v2411, %v2419
      %v2422 = vshrl.u32 %v2229, 16
      %v2424 = vrot.slane %v2422, 4
      %v2425 = vshll.u32 %v2229, 16
      %v2427 = vrot.slane %v2425, 5
      %v2428 = vor.u32 %v2424, %v2427
      %v2430 = vshrl.u32 %v2325, 16
      %v2432 = vrot.slane %v2430, 4
      %v2433 = vshll.u32 %v2325, 16
      %v2435 = vrot.slane %v2433, 5
      %v2436 = vor.u32 %v2432, %v2435
      %v2437 = vsel %vm958, %v2428, %v2436
      %v2439 = vshrl.u32 %v2230, 16
      %v2441 = vrot.slane %v2439, 4
      %v2442 = vshll.u32 %v2230, 16
      %v2444 = vrot.slane %v2442, 5
      %v2445 = vor.u32 %v2441, %v2444
      %v2447 = vshrl.u32 %v2326, 16
      %v2449 = vrot.slane %v2447, 4
      %v2450 = vshll.u32 %v2326, 16
      %v2452 = vrot.slane %v2450, 5
      %v2453 = vor.u32 %v2449, %v2452
      %v2454 = vsel %vm958, %v2445, %v2453
      %v2456 = vshrl.u32 %v2231, 16
      %v2458 = vrot.slane %v2456, 4
      %v2459 = vshll.u32 %v2231, 16
      %v2461 = vrot.slane %v2459, 5
      %v2462 = vor.u32 %v2458, %v2461
      %v2464 = vshrl.u32 %v2327, 16
      %v2466 = vrot.slane %v2464, 4
      %v2467 = vshll.u32 %v2327, 16
      %v2469 = vrot.slane %v2467, 5
      %v2470 = vor.u32 %v2466, %v2469
      %v2471 = vsel %vm958, %v2462, %v2470
      %v2473 = vshrl.u32 %v2232, 16
      %v2475 = vrot.slane %v2473, 4
      %v2476 = vshll.u32 %v2232, 16
      %v2478 = vrot.slane %v2476, 5
      %v2479 = vor.u32 %v2475, %v2478
      %v2481 = vshrl.u32 %v2328, 16
      %v2483 = vrot.slane %v2481, 4
      %v2484 = vshll.u32 %v2328, 16
      %v2486 = vrot.slane %v2484, 5
      %v2487 = vor.u32 %v2483, %v2486
      %v2488 = vsel %vm958, %v2479, %v2487
      %v2490 = vshrl.u32 %v2233, 16
      %v2492 = vrot.slane %v2490, 4
      %v2493 = vshll.u32 %v2233, 16
      %v2495 = vrot.slane %v2493, 5
      %v2496 = vor.u32 %v2492, %v2495
      %v2498 = vshrl.u32 %v2329, 16
      %v2500 = vrot.slane %v2498, 4
      %v2501 = vshll.u32 %v2329, 16
      %v2503 = vrot.slane %v2501, 5
      %v2504 = vor.u32 %v2500, %v2503
      %v2505 = vsel %vm958, %v2496, %v2504
      %v2507 = vshrl.u32 %v2234, 16
      %v2509 = vrot.slane %v2507, 4
      %v2510 = vshll.u32 %v2234, 16
      %v2512 = vrot.slane %v2510, 5
      %v2513 = vor.u32 %v2509, %v2512
      %v2515 = vshrl.u32 %v2330, 16
      %v2517 = vrot.slane %v2515, 4
      %v2518 = vshll.u32 %v2330, 16
      %v2520 = vrot.slane %v2518, 5
      %v2521 = vor.u32 %v2517, %v2520
      %v2522 = vsel %vm958, %v2513, %v2521
      %v2524 = vshrl.u32 %v2235, 16
      %v2526 = vrot.slane %v2524, 4
      %v2527 = vshll.u32 %v2235, 16
      %v2529 = vrot.slane %v2527, 5
      %v2530 = vor.u32 %v2526, %v2529
      %v2532 = vshrl.u32 %v2331, 16
      %v2534 = vrot.slane %v2532, 4
      %v2535 = vshll.u32 %v2331, 16
      %v2537 = vrot.slane %v2535, 5
      %v2538 = vor.u32 %v2534, %v2537
      %v2539 = vsel %vm958, %v2530, %v2538
      %v2541 = vshrl.u32 %v2236, 16
      %v2543 = vrot.slane %v2541, 4
      %v2544 = vshll.u32 %v2236, 16
      %v2546 = vrot.slane %v2544, 5
      %v2547 = vor.u32 %v2543, %v2546
      %v2549 = vshrl.u32 %v2332, 16
      %v2551 = vrot.slane %v2549, 4
      %v2552 = vshll.u32 %v2332, 16
      %v2554 = vrot.slane %v2552, 5
      %v2555 = vor.u32 %v2551, %v2554
      %v2556 = vsel %vm958, %v2547, %v2555
      %v2558 = vshrl.u32 %v2237, 16
      %v2560 = vrot.slane %v2558, 4
      %v2561 = vshll.u32 %v2237, 16
      %v2563 = vrot.slane %v2561, 5
      %v2564 = vor.u32 %v2560, %v2563
      %v2566 = vshrl.u32 %v2333, 16
      %v2568 = vrot.slane %v2566, 4
      %v2569 = vshll.u32 %v2333, 16
      %v2571 = vrot.slane %v2569, 5
      %v2572 = vor.u32 %v2568, %v2571
      %v2573 = vsel %vm958, %v2564, %v2572
      %v2575 = vshrl.u32 %v2238, 16
      %v2577 = vrot.slane %v2575, 4
      %v2578 = vshll.u32 %v2238, 16
      %v2580 = vrot.slane %v2578, 5
      %v2581 = vor.u32 %v2577, %v2580
      %v2583 = vshrl.u32 %v2334, 16
      %v2585 = vrot.slane %v2583, 4
      %v2586 = vshll.u32 %v2334, 16
      %v2588 = vrot.slane %v2586, 5
      %v2589 = vor.u32 %v2585, %v2588
      %v2590 = vsel %vm958, %v2581, %v2589
      %v2592 = vshrl.u32 %v2239, 16
      %v2594 = vrot.slane %v2592, 4
      %v2595 = vshll.u32 %v2239, 16
      %v2597 = vrot.slane %v2595, 5
      %v2598 = vor.u32 %v2594, %v2597
      %v2600 = vshrl.u32 %v2335, 16
      %v2602 = vrot.slane %v2600, 4
      %v2603 = vshll.u32 %v2335, 16
      %v2605 = vrot.slane %v2603, 5
      %v2606 = vor.u32 %v2602, %v2605
      %v2607 = vsel %vm958, %v2598, %v2606
      %2608 = vrot.lane.b32.xlu0 %v896, 4
      %v2609 = vpop.permute.xlu0 %2608
      %2610 = vrot.lane.b32.xlu0 %v899, 4
      %v2611 = vpop.permute.xlu0 %2610
      %2612 = vrot.lane.b32.xlu0 %v902, 4
      %v2613 = vpop.permute.xlu0 %2612
      %2614 = vrot.lane.b32.xlu0 %v905, 4
      %v2615 = vpop.permute.xlu0 %2614
      %2616 = vrot.lane.b32.xlu0 %v908, 4
      %v2617 = vpop.permute.xlu0 %2616
      %2618 = vrot.lane.b32.xlu0 %v911, 4
      %v2619 = vpop.permute.xlu0 %2618
      %2620 = vrot.lane.b32.xlu0 %v914, 4
      %v2621 = vpop.permute.xlu0 %2620
      %2622 = vrot.lane.b32.xlu0 %v917, 4
      %v2623 = vpop.permute.xlu0 %2622
      %2624 = vrot.lane.b32.xlu0 %v920, 4
      %v2625 = vpop.permute.xlu0 %2624
      %2626 = vrot.lane.b32.xlu0 %v923, 4
      %v2627 = vpop.permute.xlu0 %2626
      %2628 = vrot.lane.b32.xlu0 %v926, 4
      %v2629 = vpop.permute.xlu0 %2628
      %2630 = vrot.lane.b32.xlu0 %v929, 4
      %v2631 = vpop.permute.xlu0 %2630
      %2632 = vrot.lane.b32.xlu0 %v932, 4
      %v2633 = vpop.permute.xlu0 %2632
      %2634 = vrot.lane.b32.xlu0 %v935, 4
      %v2635 = vpop.permute.xlu0 %2634
      %2636 = vrot.lane.b32.xlu0 %v938, 4
      %v2637 = vpop.permute.xlu0 %2636
      %2638 = vrot.lane.b32.xlu0 %v941, 4
      %v2639 = vpop.permute.xlu0 %2638
      %2640 = vrot.lane.b32.xlu0 %v975, 8
      %v2641 = vpop.permute.xlu0 %2640
      %2642 = vrot.lane.b32.xlu0 %v992, 8
      %v2643 = vpop.permute.xlu0 %2642
      %2644 = vrot.lane.b32.xlu0 %v1009, 8
      %v2645 = vpop.permute.xlu0 %2644
      %2646 = vrot.lane.b32.xlu0 %v1026, 8
      %v2647 = vpop.permute.xlu0 %2646
      %2648 = vrot.lane.b32.xlu0 %v1043, 8
      %v2649 = vpop.permute.xlu0 %2648
      %2650 = vrot.lane.b32.xlu0 %v1060, 8
      %v2651 = vpop.permute.xlu0 %2650
      %2652 = vrot.lane.b32.xlu0 %v1077, 8
      %v2653 = vpop.permute.xlu0 %2652
      %2654 = vrot.lane.b32.xlu0 %v1094, 8
      %v2655 = vpop.permute.xlu0 %2654
      %2656 = vrot.lane.b32.xlu0 %v1111, 8
      %v2657 = vpop.permute.xlu0 %2656
      %2658 = vrot.lane.b32.xlu0 %v1128, 8
      %v2659 = vpop.permute.xlu0 %2658
      %2660 = vrot.lane.b32.xlu0 %v1145, 8
      %v2661 = vpop.permute.xlu0 %2660
      %2662 = vrot.lane.b32.xlu0 %v1162, 8
      %v2663 = vpop.permute.xlu0 %2662
      %2664 = vrot.lane.b32.xlu0 %v1179, 8
      %v2665 = vpop.permute.xlu0 %2664
      %2666 = vrot.lane.b32.xlu0 %v1196, 8
      %v2667 = vpop.permute.xlu0 %2666
      %2668 = vrot.lane.b32.xlu0 %v1213, 8
      %v2669 = vpop.permute.xlu0 %2668
      %2670 = vrot.lane.b32.xlu0 %v1230, 8
      %v2671 = vpop.permute.xlu0 %2670
      %2672 = vrot.lane.b32.xlu0 %v1279, 12
      %v2673 = vpop.permute.xlu0 %2672
      %2674 = vrot.lane.b32.xlu0 %v1296, 12
      %v2675 = vpop.permute.xlu0 %2674
      %2676 = vrot.lane.b32.xlu0 %v1313, 12
      %v2677 = vpop.permute.xlu0 %2676
      %2678 = vrot.lane.b32.xlu0 %v1330, 12
      %v2679 = vpop.permute.xlu0 %2678
      %2680 = vrot.lane.b32.xlu0 %v1347, 12
      %v2681 = vpop.permute.xlu0 %2680
      %2682 = vrot.lane.b32.xlu0 %v1364, 12
      %v2683 = vpop.permute.xlu0 %2682
      %2684 = vrot.lane.b32.xlu0 %v1381, 12
      %v2685 = vpop.permute.xlu0 %2684
      %2686 = vrot.lane.b32.xlu0 %v1398, 12
      %v2687 = vpop.permute.xlu0 %2686
      %2688 = vrot.lane.b32.xlu0 %v1415, 12
      %v2689 = vpop.permute.xlu0 %2688
      %2690 = vrot.lane.b32.xlu0 %v1432, 12
      %v2691 = vpop.permute.xlu0 %2690
      %2692 = vrot.lane.b32.xlu0 %v1449, 12
      %v2693 = vpop.permute.xlu0 %2692
      %2694 = vrot.lane.b32.xlu0 %v1466, 12
      %v2695 = vpop.permute.xlu0 %2694
      %2696 = vrot.lane.b32.xlu0 %v1483, 12
      %v2697 = vpop.permute.xlu0 %2696
      %2698 = vrot.lane.b32.xlu0 %v1500, 12
      %v2699 = vpop.permute.xlu0 %2698
      %2700 = vrot.lane.b32.xlu0 %v1517, 12
      %v2701 = vpop.permute.xlu0 %2700
      %2702 = vrot.lane.b32.xlu0 %v1534, 12
      %v2703 = vpop.permute.xlu0 %2702
      %2704 = vrot.lane.b32.xlu0 %v1585, 16
      %v2705 = vpop.permute.xlu0 %2704
      %2706 = vrot.lane.b32.xlu0 %v1588, 16
      %v2707 = vpop.permute.xlu0 %2706
      %2708 = vrot.lane.b32.xlu0 %v1591, 16
      %v2709 = vpop.permute.xlu0 %2708
      %2710 = vrot.lane.b32.xlu0 %v1594, 16
      %v2711 = vpop.permute.xlu0 %2710
      %2712 = vrot.lane.b32.xlu0 %v1597, 16
      %v2713 = vpop.permute.xlu0 %2712
      %2714 = vrot.lane.b32.xlu0 %v1600, 16
      %v2715 = vpop.permute.xlu0 %2714
      %2716 = vrot.lane.b32.xlu0 %v1603, 16
      %v2717 = vpop.permute.xlu0 %2716
      %2718 = vrot.lane.b32.xlu0 %v1606, 16
      %v2719 = vpop.permute.xlu0 %2718
      %2720 = vrot.lane.b32.xlu0 %v1609, 16
      %v2721 = vpop.permute.xlu0 %2720
      %2722 = vrot.lane.b32.xlu0 %v1612, 16
      %v2723 = vpop.permute.xlu0 %2722
      %2724 = vrot.lane.b32.xlu0 %v1615, 16
      %v2725 = vpop.permute.xlu0 %2724
      %2726 = vrot.lane.b32.xlu0 %v1618, 16
      %v2727 = vpop.permute.xlu0 %2726
      %2728 = vrot.lane.b32.xlu0 %v1621, 16
      %v2729 = vpop.permute.xlu0 %2728
      %2730 = vrot.lane.b32.xlu0 %v1624, 16
      %v2731 = vpop.permute.xlu0 %2730
      %2732 = vrot.lane.b32.xlu0 %v1627, 16
      %v2733 = vpop.permute.xlu0 %2732
      %2734 = vrot.lane.b32.xlu0 %v1630, 16
      %v2735 = vpop.permute.xlu0 %2734
      %2736 = vrot.lane.b32.xlu0 %v1663, 20
      %v2737 = vpop.permute.xlu0 %2736
      %2738 = vrot.lane.b32.xlu0 %v1680, 20
      %v2739 = vpop.permute.xlu0 %2738
      %2740 = vrot.lane.b32.xlu0 %v1697, 20
      %v2741 = vpop.permute.xlu0 %2740
      %2742 = vrot.lane.b32.xlu0 %v1714, 20
      %v2743 = vpop.permute.xlu0 %2742
      %2744 = vrot.lane.b32.xlu0 %v1731, 20
      %v2745 = vpop.permute.xlu0 %2744
      %2746 = vrot.lane.b32.xlu0 %v1748, 20
      %v2747 = vpop.permute.xlu0 %2746
      %2748 = vrot.lane.b32.xlu0 %v1765, 20
      %v2749 = vpop.permute.xlu0 %2748
      %2750 = vrot.lane.b32.xlu0 %v1782, 20
      %v2751 = vpop.permute.xlu0 %2750
      %2752 = vrot.lane.b32.xlu0 %v1799, 20
      %v2753 = vpop.permute.xlu0 %2752
      %2754 = vrot.lane.b32.xlu0 %v1816, 20
      %v2755 = vpop.permute.xlu0 %2754
      %2756 = vrot.lane.b32.xlu0 %v1833, 20
      %v2757 = vpop.permute.xlu0 %2756
      %2758 = vrot.lane.b32.xlu0 %v1850, 20
      %v2759 = vpop.permute.xlu0 %2758
      %2760 = vrot.lane.b32.xlu0 %v1867, 20
      %v2761 = vpop.permute.xlu0 %2760
      %2762 = vrot.lane.b32.xlu0 %v1884, 20
      %v2763 = vpop.permute.xlu0 %2762
      %2764 = vrot.lane.b32.xlu0 %v1901, 20
      %v2765 = vpop.permute.xlu0 %2764
      %2766 = vrot.lane.b32.xlu0 %v1918, 20
      %v2767 = vpop.permute.xlu0 %2766
      %2768 = vrot.lane.b32.xlu0 %v1968, 24
      %v2769 = vpop.permute.xlu0 %2768
      %2770 = vrot.lane.b32.xlu0 %v1985, 24
      %v2771 = vpop.permute.xlu0 %2770
      %2772 = vrot.lane.b32.xlu0 %v2002, 24
      %v2773 = vpop.permute.xlu0 %2772
      %2774 = vrot.lane.b32.xlu0 %v2019, 24
      %v2775 = vpop.permute.xlu0 %2774
      %2776 = vrot.lane.b32.xlu0 %v2036, 24
      %v2777 = vpop.permute.xlu0 %2776
      %2778 = vrot.lane.b32.xlu0 %v2053, 24
      %v2779 = vpop.permute.xlu0 %2778
      %2780 = vrot.lane.b32.xlu0 %v2070, 24
      %v2781 = vpop.permute.xlu0 %2780
      %2782 = vrot.lane.b32.xlu0 %v2087, 24
      %v2783 = vpop.permute.xlu0 %2782
      %2784 = vrot.lane.b32.xlu0 %v2104, 24
      %v2785 = vpop.permute.xlu0 %2784
      %2786 = vrot.lane.b32.xlu0 %v2121, 24
      %v2787 = vpop.permute.xlu0 %2786
      %2788 = vrot.lane.b32.xlu0 %v2138, 24
      %v2789 = vpop.permute.xlu0 %2788
      %2790 = vrot.lane.b32.xlu0 %v2155, 24
      %v2791 = vpop.permute.xlu0 %2790
      %2792 = vrot.lane.b32.xlu0 %v2172, 24
      %v2793 = vpop.permute.xlu0 %2792
      %2794 = vrot.lane.b32.xlu0 %v2189, 24
      %v2795 = vpop.permute.xlu0 %2794
      %2796 = vrot.lane.b32.xlu0 %v2206, 24
      %v2797 = vpop.permute.xlu0 %2796
      %2798 = vrot.lane.b32.xlu0 %v2223, 24
      %v2799 = vpop.permute.xlu0 %2798
      %2800 = vrot.lane.b32.xlu0 %v2274, 28
      %v2801 = vpop.permute.xlu0 %2800
      %2802 = vrot.lane.b32.xlu0 %v2277, 28
      %v2803 = vpop.permute.xlu0 %2802
      %2804 = vrot.lane.b32.xlu0 %v2280, 28
      %v2805 = vpop.permute.xlu0 %2804
      %2806 = vrot.lane.b32.xlu0 %v2283, 28
      %v2807 = vpop.permute.xlu0 %2806
      %2808 = vrot.lane.b32.xlu0 %v2286, 28
      %v2809 = vpop.permute.xlu0 %2808
      %2810 = vrot.lane.b32.xlu0 %v2289, 28
      %v2811 = vpop.permute.xlu0 %2810
      %2812 = vrot.lane.b32.xlu0 %v2292, 28
      %v2813 = vpop.permute.xlu0 %2812
      %2814 = vrot.lane.b32.xlu0 %v2295, 28
      %v2815 = vpop.permute.xlu0 %2814
      %2816 = vrot.lane.b32.xlu0 %v2298, 28
      %v2817 = vpop.permute.xlu0 %2816
      %2818 = vrot.lane.b32.xlu0 %v2301, 28
      %v2819 = vpop.permute.xlu0 %2818
      %2820 = vrot.lane.b32.xlu0 %v2304, 28
      %v2821 = vpop.permute.xlu0 %2820
      %2822 = vrot.lane.b32.xlu0 %v2307, 28
      %v2823 = vpop.permute.xlu0 %2822
      %2824 = vrot.lane.b32.xlu0 %v2310, 28
      %v2825 = vpop.permute.xlu0 %2824
      %2826 = vrot.lane.b32.xlu0 %v2313, 28
      %v2827 = vpop.permute.xlu0 %2826
      %2828 = vrot.lane.b32.xlu0 %v2316, 28
      %v2829 = vpop.permute.xlu0 %2828
      %2830 = vrot.lane.b32.xlu0 %v2319, 28
      %v2831 = vpop.permute.xlu0 %2830
      %2832 = vrot.lane.b32.xlu0 %v2352, 32
      %v2833 = vpop.permute.xlu0 %2832
      %2834 = vrot.lane.b32.xlu0 %v2369, 32
      %v2835 = vpop.permute.xlu0 %2834
      %2836 = vrot.lane.b32.xlu0 %v2386, 32
      %v2837 = vpop.permute.xlu0 %2836
      %2838 = vrot.lane.b32.xlu0 %v2403, 32
      %v2839 = vpop.permute.xlu0 %2838
      %2840 = vrot.lane.b32.xlu0 %v2420, 32
      %v2841 = vpop.permute.xlu0 %2840
      %2842 = vrot.lane.b32.xlu0 %v2437, 32
      %v2843 = vpop.permute.xlu0 %2842
      %2844 = vrot.lane.b32.xlu0 %v2454, 32
      %v2845 = vpop.permute.xlu0 %2844
      %2846 = vrot.lane.b32.xlu0 %v2471, 32
      %v2847 = vpop.permute.xlu0 %2846
      %2848 = vrot.lane.b32.xlu0 %v2488, 32
      %v2849 = vpop.permute.xlu0 %2848
      %2850 = vrot.lane.b32.xlu0 %v2505, 32
      %v2851 = vpop.permute.xlu0 %2850
      %2852 = vrot.lane.b32.xlu0 %v2522, 32
      %v2853 = vpop.permute.xlu0 %2852
      %2854 = vrot.lane.b32.xlu0 %v2539, 32
      %v2855 = vpop.permute.xlu0 %2854
      %2856 = vrot.lane.b32.xlu0 %v2556, 32
      %v2857 = vpop.permute.xlu0 %2856
      %2858 = vrot.lane.b32.xlu0 %v2573, 32
      %v2859 = vpop.permute.xlu0 %2858
      %2860 = vrot.lane.b32.xlu0 %v2590, 32
      %v2861 = vpop.permute.xlu0 %2860
      %2862 = vrot.lane.b32.xlu0 %v2607, 32
      %v2863 = vpop.permute.xlu0 %2862
      %v2866 = vsel %vm258, %v589, %v2609
      %v2869 = vsel %vm258, %v606, %v2611
      %v2872 = vsel %vm258, %v623, %v2613
      %v2875 = vsel %vm258, %v640, %v2615
      %v2878 = vsel %vm258, %v657, %v2617
      %v2881 = vsel %vm258, %v674, %v2619
      %v2884 = vsel %vm258, %v691, %v2621
      %v2887 = vsel %vm258, %v708, %v2623
      %v2890 = vsel %vm258, %v725, %v2625
      %v2893 = vsel %vm258, %v742, %v2627
      %v2896 = vsel %vm258, %v759, %v2629
      %v2899 = vsel %vm258, %v776, %v2631
      %v2902 = vsel %vm258, %v793, %v2633
      %v2905 = vsel %vm258, %v810, %v2635
      %v2908 = vsel %vm258, %v827, %v2637
      %v2911 = vsel %vm258, %v844, %v2639
      %vm2912 = vcmask 64512
      %v2914 = vsel %vm2912, %v2866, %v2641
      %v2916 = vsel %vm2912, %v2869, %v2643
      %v2918 = vsel %vm2912, %v2872, %v2645
      %v2920 = vsel %vm2912, %v2875, %v2647
      %v2922 = vsel %vm2912, %v2878, %v2649
      %v2924 = vsel %vm2912, %v2881, %v2651
      %v2926 = vsel %vm2912, %v2884, %v2653
      %v2928 = vsel %vm2912, %v2887, %v2655
      %v2930 = vsel %vm2912, %v2890, %v2657
      %v2932 = vsel %vm2912, %v2893, %v2659
      %v2934 = vsel %vm2912, %v2896, %v2661
      %v2936 = vsel %vm2912, %v2899, %v2663
      %v2938 = vsel %vm2912, %v2902, %v2665
      %v2940 = vsel %vm2912, %v2905, %v2667
      %v2942 = vsel %vm2912, %v2908, %v2669
      %v2944 = vsel %vm2912, %v2911, %v2671
      %vm2945 = vcmask 97280
      %v2947 = vsel %vm2945, %v2914, %v2673
      %v2949 = vsel %vm2945, %v2916, %v2675
      %v2951 = vsel %vm2945, %v2918, %v2677
      %v2953 = vsel %vm2945, %v2920, %v2679
      %v2955 = vsel %vm2945, %v2922, %v2681
      %v2957 = vsel %vm2945, %v2924, %v2683
      %v2959 = vsel %vm2945, %v2926, %v2685
      %v2961 = vsel %vm2945, %v2928, %v2687
      %v2963 = vsel %vm2945, %v2930, %v2689
      %v2965 = vsel %vm2945, %v2932, %v2691
      %v2967 = vsel %vm2945, %v2934, %v2693
      %v2969 = vsel %vm2945, %v2936, %v2695
      %v2971 = vsel %vm2945, %v2938, %v2697
      %v2973 = vsel %vm2945, %v2940, %v2699
      %v2975 = vsel %vm2945, %v2942, %v2701
      %v2977 = vsel %vm2945, %v2944, %v2703
      %vm2978 = vcmask 130048
      %v2980 = vsel %vm2978, %v2947, %v2705
      %v2982 = vsel %vm2978, %v2949, %v2707
      %v2984 = vsel %vm2978, %v2951, %v2709
      %v2986 = vsel %vm2978, %v2953, %v2711
      %v2988 = vsel %vm2978, %v2955, %v2713
      %v2990 = vsel %vm2978, %v2957, %v2715
      %v2992 = vsel %vm2978, %v2959, %v2717
      %v2994 = vsel %vm2978, %v2961, %v2719
      %v2996 = vsel %vm2978, %v2963, %v2721
      %v2998 = vsel %vm2978, %v2965, %v2723
      %v3000 = vsel %vm2978, %v2967, %v2725
      %v3002 = vsel %vm2978, %v2969, %v2727
      %v3004 = vsel %vm2978, %v2971, %v2729
      %v3006 = vsel %vm2978, %v2973, %v2731
      %v3008 = vsel %vm2978, %v2975, %v2733
      %v3010 = vsel %vm2978, %v2977, %v2735
      %vm3011 = vcmask 162816
      %v3013 = vsel %vm3011, %v2980, %v2737
      %v3015 = vsel %vm3011, %v2982, %v2739
      %v3017 = vsel %vm3011, %v2984, %v2741
      %v3019 = vsel %vm3011, %v2986, %v2743
      %v3021 = vsel %vm3011, %v2988, %v2745
      %v3023 = vsel %vm3011, %v2990, %v2747
      %v3025 = vsel %vm3011, %v2992, %v2749
      %v3027 = vsel %vm3011, %v2994, %v2751
      %v3029 = vsel %vm3011, %v2996, %v2753
      %v3031 = vsel %vm3011, %v2998, %v2755
      %v3033 = vsel %vm3011, %v3000, %v2757
      %v3035 = vsel %vm3011, %v3002, %v2759
      %v3037 = vsel %vm3011, %v3004, %v2761
      %v3039 = vsel %vm3011, %v3006, %v2763
      %v3041 = vsel %vm3011, %v3008, %v2765
      %v3043 = vsel %vm3011, %v3010, %v2767
      %vm3044 = vcmask 195584
      %v3046 = vsel %vm3044, %v3013, %v2769
      %v3048 = vsel %vm3044, %v3015, %v2771
      %v3050 = vsel %vm3044, %v3017, %v2773
      %v3052 = vsel %vm3044, %v3019, %v2775
      %v3054 = vsel %vm3044, %v3021, %v2777
      %v3056 = vsel %vm3044, %v3023, %v2779
      %v3058 = vsel %vm3044, %v3025, %v2781
      %v3060 = vsel %vm3044, %v3027, %v2783
      %v3062 = vsel %vm3044, %v3029, %v2785
      %v3064 = vsel %vm3044, %v3031, %v2787
      %v3066 = vsel %vm3044, %v3033, %v2789
      %v3068 = vsel %vm3044, %v3035, %v2791
      %v3070 = vsel %vm3044, %v3037, %v2793
      %v3072 = vsel %vm3044, %v3039, %v2795
      %v3074 = vsel %vm3044, %v3041, %v2797
      %v3076 = vsel %vm3044, %v3043, %v2799
      %vm3077 = vcmask 228352
      %v3079 = vsel %vm3077, %v3046, %v2801
      %v3081 = vsel %vm3077, %v3048, %v2803
      %v3083 = vsel %vm3077, %v3050, %v2805
      %v3085 = vsel %vm3077, %v3052, %v2807
      %v3087 = vsel %vm3077, %v3054, %v2809
      %v3089 = vsel %vm3077, %v3056, %v2811
      %v3091 = vsel %vm3077, %v3058, %v2813
      %v3093 = vsel %vm3077, %v3060, %v2815
      %v3095 = vsel %vm3077, %v3062, %v2817
      %v3097 = vsel %vm3077, %v3064, %v2819
      %v3099 = vsel %vm3077, %v3066, %v2821
      %v3101 = vsel %vm3077, %v3068, %v2823
      %v3103 = vsel %vm3077, %v3070, %v2825
      %v3105 = vsel %vm3077, %v3072, %v2827
      %v3107 = vsel %vm3077, %v3074, %v2829
      %v3109 = vsel %vm3077, %v3076, %v2831
      %vm3110 = vcmask 261120
      %v3112 = vsel %vm3110, %v3079, %v2833
      %v3114 = vsel %vm3110, %v3081, %v2835
      %v3116 = vsel %vm3110, %v3083, %v2837
      %v3118 = vsel %vm3110, %v3085, %v2839
      %v3120 = vsel %vm3110, %v3087, %v2841
      %v3122 = vsel %vm3110, %v3089, %v2843
      %v3124 = vsel %vm3110, %v3091, %v2845
      %v3126 = vsel %vm3110, %v3093, %v2847
      %v3128 = vsel %vm3110, %v3095, %v2849
      %v3130 = vsel %vm3110, %v3097, %v2851
      %v3132 = vsel %vm3110, %v3099, %v2853
      %v3134 = vsel %vm3110, %v3101, %v2855
      %v3136 = vsel %vm3110, %v3103, %v2857
      %v3138 = vsel %vm3110, %v3105, %v2859
      %v3140 = vsel %vm3110, %v3107, %v2861
      %v3142 = vsel %vm3110, %v3109, %v2863
      %v3143 = vld [vmem:[%s1] sm:$0xf]
      %v3144 = vld [vmem:[%s1 + $0x4] sm:$0xf]
      %v3145 = vld [vmem:[%s1 + $0x8] sm:$0xf]
      %v3146 = vld [vmem:[%s1 + $0xc] sm:$0xf]
      %v3147 = vld [vmem:[%s1 + $0x10] sm:$0x3]
      %v3153 = vunpack.c.l.b16 %v3143
      %v3154 = vunpack.c.l.b16 %v3144
      %v3155 = vunpack.c.l.b16 %v3145
      %v3156 = vunpack.c.l.b16 %v3146
      %v3157 = vunpack.c.l.b16 %v3147
      %v3158 = vpack.c.b16 %v3154, %v3153
      %v3159 = vpack.c.b16 %v3156, %v3155
      %v3160 = vpack.c.b16 %v3157, %v3157
      %vm3163 = vcmask 293888
      %v3164 = vsel %vm3163, %v3112, 0
      %v3166 = vsel %vm3163, %v3114, 0
      %v3168 = vsel %vm3163, %v3116, 0
      %v3170 = vsel %vm3163, %v3118, 0
      %v3172 = vsel %vm3163, %v3120, 0
      %v3174 = vsel %vm3163, %v3122, 0
      %v3176 = vsel %vm3163, %v3124, 0
      %v3178 = vsel %vm3163, %v3126, 0
      %v3180 = vsel %vm3163, %v3128, 0
      %v3182 = vsel %vm3163, %v3130, 0
      %v3184 = vsel %vm3163, %v3132, 0
      %v3186 = vsel %vm3163, %v3134, 0
      %v3188 = vsel %vm3163, %v3136, 0
      %v3190 = vsel %vm3163, %v3138, 0
      %v3192 = vsel %vm3163, %v3140, 0
      %v3194 = vsel %vm3163, %v3142, 0
      %vm3196 = vcmask 1041408
      %v3198 = vsel %vm3196, %v3160, 0
      %3200 = vmatprep.subr.bf16.mxu0 0
      %3201 = vmatpush1.bf16.msra.mxu0 %v3158
      %3202 = vmatprep.subr.bf16.mxu0 0
      %3203 = vmatpush1.bf16.msra.mxu0 %v3159
      %3204 = vmatprep.subr.bf16.mxu0 0
      %3205 = vmatpush1.bf16.msra.mxu0 %v3198
      %3206 = vmatprep.subr.bf16.mxu0 0
      %3207 = vmatpush1.bf16.msra.mxu0 0
      %3208 = vmatprep.subr.bf16.mxu0 0
      %3209 = vmatpush1.bf16.msra.mxu0 0
      %3210 = vmatprep.subr.bf16.mxu0 0
      %3211 = vmatpush1.bf16.msra.mxu0 0
      %3212 = vmatprep.subr.bf16.mxu0 0
      %3213 = vmatpush1.bf16.msra.mxu0 0
      %3214 = vmatprep.subr.bf16.mxu0 0
      %3215 = vmatpush1.bf16.msra.mxu0 0
      %3216 = vmatprep.subr.bf16.mxu0 0
      %3217 = vmatpush1.bf16.msra.mxu0 0
      %3218 = vmatprep.subr.bf16.mxu0 0
      %3219 = vmatpush1.bf16.msra.mxu0 0
      %3220 = vmatprep.subr.bf16.mxu0 0
      %3221 = vmatpush1.bf16.msra.mxu0 0
      %3222 = vmatprep.subr.bf16.mxu0 0
      %3223 = vmatpush1.bf16.msra.mxu0 0
      %3224 = vmatprep.subr.bf16.mxu0 0
      %3225 = vmatpush1.bf16.msra.mxu0 0
      %3226 = vmatprep.subr.bf16.mxu0 0
      %3227 = vmatpush1.bf16.msra.mxu0 0
      %3228 = vmatprep.subr.bf16.mxu0 0
      %3229 = vmatpush1.bf16.msra.mxu0 0
      %3230 = vmatprep.subr.bf16.mxu0 0
      %3231 = vmatpush1.bf16.msra.mxu0 0
      %3232 = vmatprep.mubr.bf16.mxu0 0
      %3233 = vmatmul.mubr.bf16.gmra.mrb[0].mxu0 %v3164
      %v3234 = vpop.f32.mrb[0].mxu0
      %v3235 = vadd.f32 0.0, %v3234
      %v3236 = vpop.f32.mrb[0].mxu0
      %v3237 = vpop.f32.mrb[0].mxu0
      %v3238 = vadd.f32 0.0, %v3237
      %v3239 = vpop.f32.mrb[0].mxu0
      %3240 = vmatprep.mubr.bf16.mxu0 0
      %3241 = vmatmul.mubr.bf16.gmra.mrb[0].mxu0 %v3166
      %v3242 = vpop.f32.mrb[0].mxu0
      %v3243 = vadd.f32 0.0, %v3242
      %v3244 = vpop.f32.mrb[0].mxu0
      %v3245 = vpop.f32.mrb[0].mxu0
      %v3246 = vadd.f32 0.0, %v3245
      %v3247 = vpop.f32.mrb[0].mxu0
      %3248 = vmatprep.mubr.bf16.mxu0 0
      %3249 = vmatmul.mubr.bf16.gmra.mrb[0].mxu0 %v3168
      %v3250 = vpop.f32.mrb[0].mxu0
      %v3251 = vadd.f32 0.0, %v3250
      %v3252 = vpop.f32.mrb[0].mxu0
      %v3253 = vpop.f32.mrb[0].mxu0
      %v3254 = vadd.f32 0.0, %v3253
      %v3255 = vpop.f32.mrb[0].mxu0
      %3256 = vmatprep.mubr.bf16.mxu0 0
      %3257 = vmatmul.mubr.bf16.gmra.mrb[0].mxu0 %v3170
      %v3258 = vpop.f32.mrb[0].mxu0
      %v3259 = vadd.f32 0.0, %v3258
      %v3260 = vpop.f32.mrb[0].mxu0
      %v3261 = vpop.f32.mrb[0].mxu0
      %v3262 = vadd.f32 0.0, %v3261
      %v3263 = vpop.f32.mrb[0].mxu0
      %3264 = vmatprep.mubr.bf16.mxu0 0
      %3265 = vmatmul.mubr.bf16.gmra.mrb[0].mxu0 %v3172
      %v3266 = vpop.f32.mrb[0].mxu0
      %v3267 = vadd.f32 0.0, %v3266
      %v3268 = vpop.f32.mrb[0].mxu0
      %v3269 = vpop.f32.mrb[0].mxu0
      %v3270 = vadd.f32 0.0, %v3269
      %v3271 = vpop.f32.mrb[0].mxu0
      %3272 = vmatprep.mubr.bf16.mxu0 0
      %3273 = vmatmul.mubr.bf16.gmra.mrb[0].mxu0 %v3174
      %v3274 = vpop.f32.mrb[0].mxu0
      %v3275 = vadd.f32 0.0, %v3274
      %v3276 = vpop.f32.mrb[0].mxu0
      %v3277 = vpop.f32.mrb[0].mxu0
      %v3278 = vadd.f32 0.0, %v3277
      %v3279 = vpop.f32.mrb[0].mxu0
      %3280 = vmatprep.mubr.bf16.mxu0 0
      %3281 = vmatmul.mubr.bf16.gmra.mrb[0].mxu0 %v3176
      %v3282 = vpop.f32.mrb[0].mxu0
      %v3283 = vadd.f32 0.0, %v3282
      %v3284 = vpop.f32.mrb[0].mxu0
      %v3285 = vpop.f32.mrb[0].mxu0
      %v3286 = vadd.f32 0.0, %v3285
      %v3287 = vpop.f32.mrb[0].mxu0
      %3288 = vmatprep.mubr.bf16.mxu0 0
      %3289 = vmatmul.mubr.bf16.gmra.mrb[0].mxu0 %v3178
      %v3290 = vpop.f32.mrb[0].mxu0
      %v3291 = vadd.f32 0.0, %v3290
      %v3292 = vpop.f32.mrb[0].mxu0
      %v3293 = vpop.f32.mrb[0].mxu0
      %v3294 = vadd.f32 0.0, %v3293
      %v3295 = vpop.f32.mrb[0].mxu0
      %3296 = vmatprep.mubr.bf16.mxu0 0
      %3297 = vmatmul.mubr.bf16.gmra.mrb[0].mxu0 %v3180
      %v3298 = vpop.f32.mrb[0].mxu0
      %v3299 = vadd.f32 0.0, %v3298
      %v3300 = vpop.f32.mrb[0].mxu0
      %v3301 = vpop.f32.mrb[0].mxu0
      %v3302 = vadd.f32 0.0, %v3301
      %v3303 = vpop.f32.mrb[0].mxu0
      %3304 = vmatprep.mubr.bf16.mxu0 0
      %3305 = vmatmul.mubr.bf16.gmra.mrb[0].mxu0 %v3182
      %v3306 = vpop.f32.mrb[0].mxu0
      %v3307 = vadd.f32 0.0, %v3306
      %v3308 = vpop.f32.mrb[0].mxu0
      %v3309 = vpop.f32.mrb[0].mxu0
      %v3310 = vadd.f32 0.0, %v3309
      %v3311 = vpop.f32.mrb[0].mxu0
      %3312 = vmatprep.mubr.bf16.mxu0 0
      %3313 = vmatmul.mubr.bf16.gmra.mrb[0].mxu0 %v3184
      %v3314 = vpop.f32.mrb[0].mxu0
      %v3315 = vadd.f32 0.0, %v3314
      %v3316 = vpop.f32.mrb[0].mxu0
      %v3317 = vpop.f32.mrb[0].mxu0
      %v3318 = vadd.f32 0.0, %v3317
      %v3319 = vpop.f32.mrb[0].mxu0
      %3320 = vmatprep.mubr.bf16.mxu0 0
      %3321 = vmatmul.mubr.bf16.gmra.mrb[0].mxu0 %v3186
      %v3322 = vpop.f32.mrb[0].mxu0
      %v3323 = vadd.f32 0.0, %v3322
      %v3324 = vpop.f32.mrb[0].mxu0
      %v3325 = vpop.f32.mrb[0].mxu0
      %v3326 = vadd.f32 0.0, %v3325
      %v3327 = vpop.f32.mrb[0].mxu0
      %3328 = vmatprep.mubr.bf16.mxu0 0
      %3329 = vmatmul.mubr.bf16.gmra.mrb[0].mxu0 %v3188
      %v3330 = vpop.f32.mrb[0].mxu0
      %v3331 = vadd.f32 0.0, %v3330
      %v3332 = vpop.f32.mrb[0].mxu0
      %v3333 = vpop.f32.mrb[0].mxu0
      %v3334 = vadd.f32 0.0, %v3333
      %v3335 = vpop.f32.mrb[0].mxu0
      %3336 = vmatprep.mubr.bf16.mxu0 0
      %3337 = vmatmul.mubr.bf16.gmra.mrb[0].mxu0 %v3190
      %v3338 = vpop.f32.mrb[0].mxu0
      %v3339 = vadd.f32 0.0, %v3338
      %v3340 = vpop.f32.mrb[0].mxu0
      %v3341 = vpop.f32.mrb[0].mxu0
      %v3342 = vadd.f32 0.0, %v3341
      %v3343 = vpop.f32.mrb[0].mxu0
      %3344 = vmatprep.mubr.bf16.mxu0 0
      %3345 = vmatmul.mubr.bf16.gmra.mrb[0].mxu0 %v3192
      %v3346 = vpop.f32.mrb[0].mxu0
      %v3347 = vadd.f32 0.0, %v3346
      %v3348 = vpop.f32.mrb[0].mxu0
      %v3349 = vpop.f32.mrb[0].mxu0
      %v3350 = vadd.f32 0.0, %v3349
      %v3351 = vpop.f32.mrb[0].mxu0
      %3352 = vmatprep.mubr.bf16.mxu0 0
      %3353 = vmatmul.mubr.bf16.gmra.mrb[0].mxu0 %v3194
      %v3354 = vpop.f32.mrb[0].mxu0
      %v3355 = vadd.f32 0.0, %v3354
      %v3356 = vpop.f32.mrb[0].mxu0
      %v3357 = vpop.f32.mrb[0].mxu0
      %v3358 = vadd.f32 0.0, %v3357
      %v3359 = vpop.f32.mrb[0].mxu0
      %3360 = vdwg.mxu0
      %v3361 = vld [vmem:[%s4] sm:$0xff]
      %v3362 = vlaneseq
      %v3363 = vshrl.u32 %v3362, 7
      %v3364 = vsub.s32 0, %v3363
      %v3365 = vrot.slane %v3361, %v3364
      %v3366 = vmul.f32 %v3235, %v3365
      %v3367 = vmul.f32 %v3238, %v3365
      %v3368 = vmul.f32 %v3243, %v3365
      %v3369 = vmul.f32 %v3246, %v3365
      %v3370 = vmul.f32 %v3251, %v3365
      %v3371 = vmul.f32 %v3254, %v3365
      %v3372 = vmul.f32 %v3259, %v3365
      %v3373 = vmul.f32 %v3262, %v3365
      %v3374 = vmul.f32 %v3267, %v3365
      %v3375 = vmul.f32 %v3270, %v3365
      %v3376 = vmul.f32 %v3275, %v3365
      %v3377 = vmul.f32 %v3278, %v3365
      %v3378 = vmul.f32 %v3283, %v3365
      %v3379 = vmul.f32 %v3286, %v3365
      %v3380 = vmul.f32 %v3291, %v3365
      %v3381 = vmul.f32 %v3294, %v3365
      %v3382 = vmul.f32 %v3299, %v3365
      %v3383 = vmul.f32 %v3302, %v3365
      %v3384 = vmul.f32 %v3307, %v3365
      %v3385 = vmul.f32 %v3310, %v3365
      %v3386 = vmul.f32 %v3315, %v3365
      %v3387 = vmul.f32 %v3318, %v3365
      %v3388 = vmul.f32 %v3323, %v3365
      %v3389 = vmul.f32 %v3326, %v3365
      %v3390 = vmul.f32 %v3331, %v3365
      %v3391 = vmul.f32 %v3334, %v3365
      %v3392 = vmul.f32 %v3339, %v3365
      %v3393 = vmul.f32 %v3342, %v3365
      %v3394 = vmul.f32 %v3347, %v3365
      %v3395 = vmul.f32 %v3350, %v3365
      %v3396 = vmul.f32 %v3355, %v3365
      %v3397 = vmul.f32 %v3358, %v3365
      %v3398 = vlaneseq
      %v3399 = vshrl.u32 %v3398, 7
      %v3400 = vsub.s32 1, %v3399
      %v3401 = vrot.slane %v3361, %v3400
      %v3402 = vadd.f32 %v3366, %v3401
      %v3403 = vadd.f32 %v3367, %v3401
      %v3404 = vadd.f32 %v3368, %v3401
      %v3405 = vadd.f32 %v3369, %v3401
      %v3406 = vadd.f32 %v3370, %v3401
      %v3407 = vadd.f32 %v3371, %v3401
      %v3408 = vadd.f32 %v3372, %v3401
      %v3409 = vadd.f32 %v3373, %v3401
      %v3410 = vadd.f32 %v3374, %v3401
      %v3411 = vadd.f32 %v3375, %v3401
      %v3412 = vadd.f32 %v3376, %v3401
      %v3413 = vadd.f32 %v3377, %v3401
      %v3414 = vadd.f32 %v3378, %v3401
      %v3415 = vadd.f32 %v3379, %v3401
      %v3416 = vadd.f32 %v3380, %v3401
      %v3417 = vadd.f32 %v3381, %v3401
      %v3418 = vadd.f32 %v3382, %v3401
      %v3419 = vadd.f32 %v3383, %v3401
      %v3420 = vadd.f32 %v3384, %v3401
      %v3421 = vadd.f32 %v3385, %v3401
      %v3422 = vadd.f32 %v3386, %v3401
      %v3423 = vadd.f32 %v3387, %v3401
      %v3424 = vadd.f32 %v3388, %v3401
      %v3425 = vadd.f32 %v3389, %v3401
      %v3426 = vadd.f32 %v3390, %v3401
      %v3427 = vadd.f32 %v3391, %v3401
      %v3428 = vadd.f32 %v3392, %v3401
      %v3429 = vadd.f32 %v3393, %v3401
      %v3430 = vadd.f32 %v3394, %v3401
      %v3431 = vadd.f32 %v3395, %v3401
      %v3432 = vadd.f32 %v3396, %v3401
      %v3433 = vadd.f32 %v3397, %v3401
      %v3434 = vmax.f32 %v3402, 0.0
      %v3435 = vmax.f32 %v3403, 0.0
      %v3436 = vmax.f32 %v3404, 0.0
      %v3437 = vmax.f32 %v3405, 0.0
      %v3438 = vmax.f32 %v3406, 0.0
      %v3439 = vmax.f32 %v3407, 0.0
      %v3440 = vmax.f32 %v3408, 0.0
      %v3441 = vmax.f32 %v3409, 0.0
      %v3442 = vmax.f32 %v3410, 0.0
      %v3443 = vmax.f32 %v3411, 0.0
      %v3444 = vmax.f32 %v3412, 0.0
      %v3445 = vmax.f32 %v3413, 0.0
      %v3446 = vmax.f32 %v3414, 0.0
      %v3447 = vmax.f32 %v3415, 0.0
      %v3448 = vmax.f32 %v3416, 0.0
      %v3449 = vmax.f32 %v3417, 0.0
      %v3450 = vmax.f32 %v3418, 0.0
      %v3451 = vmax.f32 %v3419, 0.0
      %v3452 = vmax.f32 %v3420, 0.0
      %v3453 = vmax.f32 %v3421, 0.0
      %v3454 = vmax.f32 %v3422, 0.0
      %v3455 = vmax.f32 %v3423, 0.0
      %v3456 = vmax.f32 %v3424, 0.0
      %v3457 = vmax.f32 %v3425, 0.0
      %v3458 = vmax.f32 %v3426, 0.0
      %v3459 = vmax.f32 %v3427, 0.0
      %v3460 = vmax.f32 %v3428, 0.0
      %v3461 = vmax.f32 %v3429, 0.0
      %v3462 = vmax.f32 %v3430, 0.0
      %v3463 = vmax.f32 %v3431, 0.0
      %v3464 = vmax.f32 %v3432, 0.0
      %v3465 = vmax.f32 %v3433, 0.0
      %3466 = vst.msk [vmem:[#allocation3] sm:$0xff] %vm2912, 0
      %3467 = vst.msk [vmem:[#allocation3 + $0x8] sm:$0xff] %vm2912, 0
      %s3468 = scalar_lea.vmem [#allocation3], 272
      %3469 = vst.msk [vmem:[%s3468] sm:$0xff] %vm2912, 0
      %3470 = vst.msk [vmem:[%s3468 + $0x8] sm:$0xff] %vm2912, 0
      %vm3471 = vcmask 60419
      %vm3472 = vmand %vm3471, %vm265
      %v3473 = vld [vmem:[#allocation3] sm:$0x8]
      %v3474 = vsel %vm3472, 0, %v3473
      %3475 = vst [vmem:[#allocation3] sm:$0x8] %v3474
      %v3476 = vld [vmem:[#allocation3 + $0x10] sm:$0x8]
      %v3477 = vsel %vm3472, 0, %v3476
      %3478 = vst [vmem:[#allocation3 + $0x10] sm:$0x8] %v3477
      %v3479 = vld [vmem:[#allocation3 + $0x20] sm:$0x8]
      %v3480 = vsel %vm3472, 0, %v3479
      %3481 = vst [vmem:[#allocation3 + $0x20] sm:$0x8] %v3480
      %v3482 = vld [vmem:[#allocation3 + $0x30] sm:$0x8]
      %v3483 = vsel %vm3472, 0, %v3482
      %3484 = vst [vmem:[#allocation3 + $0x30] sm:$0x8] %v3483
      %v3485 = vld [vmem:[#allocation3 + $0x40] sm:$0x8]
      %v3486 = vsel %vm3472, 0, %v3485
      %3487 = vst [vmem:[#allocation3 + $0x40] sm:$0x8] %v3486
      %v3488 = vld [vmem:[#allocation3 + $0x50] sm:$0x8]
      %v3489 = vsel %vm3472, 0, %v3488
      %3490 = vst [vmem:[#allocation3 + $0x50] sm:$0x8] %v3489
      %v3491 = vld [vmem:[#allocation3 + $0x60] sm:$0x8]
      %v3492 = vsel %vm3472, 0, %v3491
      %3493 = vst [vmem:[#allocation3 + $0x60] sm:$0x8] %v3492
      %v3494 = vld [vmem:[#allocation3 + $0x70] sm:$0x8]
      %v3495 = vsel %vm3472, 0, %v3494
      %3496 = vst [vmem:[#allocation3 + $0x70] sm:$0x8] %v3495
      %v3497 = vld [vmem:[#allocation3 + $0x80] sm:$0x8]
      %v3498 = vsel %vm3472, 0, %v3497
      %3499 = vst [vmem:[#allocation3 + $0x80] sm:$0x8] %v3498
      %v3500 = vld [vmem:[#allocation3 + $0x90] sm:$0x8]
      %v3501 = vsel %vm3472, 0, %v3500
      %3502 = vst [vmem:[#allocation3 + $0x90] sm:$0x8] %v3501
      %v3503 = vld [vmem:[#allocation3 + $0xa0] sm:$0x8]
      %v3504 = vsel %vm3472, 0, %v3503
      %3505 = vst [vmem:[#allocation3 + $0xa0] sm:$0x8] %v3504
      %v3506 = vld [vmem:[#allocation3 + $0xb0] sm:$0x8]
      %v3507 = vsel %vm3472, 0, %v3506
      %3508 = vst [vmem:[#allocation3 + $0xb0] sm:$0x8] %v3507
      %v3509 = vld [vmem:[#allocation3 + $0xc0] sm:$0x8]
      %v3510 = vsel %vm3472, 0, %v3509
      %3511 = vst [vmem:[#allocation3 + $0xc0] sm:$0x8] %v3510
      %v3512 = vld [vmem:[#allocation3 + $0xd0] sm:$0x8]
      %v3513 = vsel %vm3472, 0, %v3512
      %3514 = vst [vmem:[#allocation3 + $0xd0] sm:$0x8] %v3513
      %v3515 = vld [vmem:[#allocation3 + $0xe0] sm:$0x8]
      %v3516 = vsel %vm3472, 0, %v3515
      %3517 = vst [vmem:[#allocation3 + $0xe0] sm:$0x8] %v3516
      %v3518 = vld [vmem:[#allocation3 + $0xf0] sm:$0x8]
      %v3519 = vsel %vm3472, 0, %v3518
      %3520 = vst [vmem:[#allocation3 + $0xf0] sm:$0x8] %v3519
      %v3521 = vld [vmem:[#allocation3 + $0x100] sm:$0x8]
      %v3522 = vsel %vm3472, 0, %v3521
      %3523 = vst [vmem:[#allocation3 + $0x100] sm:$0x8] %v3522
      %v3524 = vld [vmem:[#allocation3 + $0x110] sm:$0x8]
      %v3525 = vsel %vm3472, 0, %v3524
      %3526 = vst [vmem:[#allocation3 + $0x110] sm:$0x8] %v3525
      %vm3527 = vcmask 61444
      %vm3528 = vmand %vm3527, %vm322
      %v3529 = vld [vmem:[#allocation3 + $0x8] sm:$0x10]
      %v3530 = vsel %vm3528, 0, %v3529
      %3531 = vst [vmem:[#allocation3 + $0x8] sm:$0x10] %v3530
      %v3532 = vld [vmem:[#allocation3 + $0x18] sm:$0x10]
      %v3533 = vsel %vm3528, 0, %v3532
      %3534 = vst [vmem:[#allocation3 + $0x18] sm:$0x10] %v3533
      %v3535 = vld [vmem:[#allocation3 + $0x28] sm:$0x10]
      %v3536 = vsel %vm3528, 0, %v3535
      %3537 = vst [vmem:[#allocation3 + $0x28] sm:$0x10] %v3536
      %v3538 = vld [vmem:[#allocation3 + $0x38] sm:$0x10]
      %v3539 = vsel %vm3528, 0, %v3538
      %3540 = vst [vmem:[#allocation3 + $0x38] sm:$0x10] %v3539
      %v3541 = vld [vmem:[#allocation3 + $0x48] sm:$0x10]
      %v3542 = vsel %vm3528, 0, %v3541
      %3543 = vst [vmem:[#allocation3 + $0x48] sm:$0x10] %v3542
      %v3544 = vld [vmem:[#allocation3 + $0x58] sm:$0x10]
      %v3545 = vsel %vm3528, 0, %v3544
      %3546 = vst [vmem:[#allocation3 + $0x58] sm:$0x10] %v3545
      %v3547 = vld [vmem:[#allocation3 + $0x68] sm:$0x10]
      %v3548 = vsel %vm3528, 0, %v3547
      %3549 = vst [vmem:[#allocation3 + $0x68] sm:$0x10] %v3548
      %v3550 = vld [vmem:[#allocation3 + $0x78] sm:$0x10]
      %v3551 = vsel %vm3528, 0, %v3550
      %3552 = vst [vmem:[#allocation3 + $0x78] sm:$0x10] %v3551
      %v3553 = vld [vmem:[#allocation3 + $0x88] sm:$0x10]
      %v3554 = vsel %vm3528, 0, %v3553
      %3555 = vst [vmem:[#allocation3 + $0x88] sm:$0x10] %v3554
      %v3556 = vld [vmem:[#allocation3 + $0x98] sm:$0x10]
      %v3557 = vsel %vm3528, 0, %v3556
      %3558 = vst [vmem:[#allocation3 + $0x98] sm:$0x10] %v3557
      %v3559 = vld [vmem:[#allocation3 + $0xa8] sm:$0x10]
      %v3560 = vsel %vm3528, 0, %v3559
      %3561 = vst [vmem:[#allocation3 + $0xa8] sm:$0x10] %v3560
      %v3562 = vld [vmem:[#allocation3 + $0xb8] sm:$0x10]
      %v3563 = vsel %vm3528, 0, %v3562
      %3564 = vst [vmem:[#allocation3 + $0xb8] sm:$0x10] %v3563
      %v3565 = vld [vmem:[#allocation3 + $0xc8] sm:$0x10]
      %v3566 = vsel %vm3528, 0, %v3565
      %3567 = vst [vmem:[#allocation3 + $0xc8] sm:$0x10] %v3566
      %v3568 = vld [vmem:[#allocation3 + $0xd8] sm:$0x10]
      %v3569 = vsel %vm3528, 0, %v3568
      %3570 = vst [vmem:[#allocation3 + $0xd8] sm:$0x10] %v3569
      %v3571 = vld [vmem:[#allocation3 + $0xe8] sm:$0x10]
      %v3572 = vsel %vm3528, 0, %v3571
      %3573 = vst [vmem:[#allocation3 + $0xe8] sm:$0x10] %v3572
      %v3574 = vld [vmem:[#allocation3 + $0xf8] sm:$0x10]
      %v3575 = vsel %vm3528, 0, %v3574
      %3576 = vst [vmem:[#allocation3 + $0xf8] sm:$0x10] %v3575
      %v3577 = vld [vmem:[#allocation3 + $0x108] sm:$0x10]
      %v3578 = vsel %vm3528, 0, %v3577
      %3579 = vst [vmem:[#allocation3 + $0x108] sm:$0x10] %v3578
      %v3580 = vld [vmem:[#allocation3 + $0x118] sm:$0x10]
      %v3581 = vsel %vm3528, 0, %v3580
      %3582 = vst [vmem:[#allocation3 + $0x118] sm:$0x10] %v3581
      %v3583 = vpack.c.bf16 %v3435, %v3434
      %v3584 = vpack.c.bf16 %v3437, %v3436
      %v3585 = vpack.c.bf16 %v3439, %v3438
      %v3586 = vpack.c.bf16 %v3441, %v3440
      %v3587 = vpack.c.bf16 %v3443, %v3442
      %v3588 = vpack.c.bf16 %v3445, %v3444
      %v3589 = vpack.c.bf16 %v3447, %v3446
      %v3590 = vpack.c.bf16 %v3449, %v3448
      %v3591 = vpack.c.bf16 %v3451, %v3450
      %v3592 = vpack.c.bf16 %v3453, %v3452
      %v3593 = vpack.c.bf16 %v3455, %v3454
      %v3594 = vpack.c.bf16 %v3457, %v3456
      %v3595 = vpack.c.bf16 %v3459, %v3458
      %v3596 = vpack.c.bf16 %v3461, %v3460
      %v3597 = vpack.c.bf16 %v3463, %v3462
      %v3598 = vpack.c.bf16 %v3465, %v3464
      %v3615 = vrot.slane %v3583, 4
      %v3616 = vrot.slane %v3584, 4
      %v3617 = vrot.slane %v3585, 4
      %v3618 = vrot.slane %v3586, 4
      %v3619 = vrot.slane %v3587, 4
      %v3620 = vrot.slane %v3588, 4
      %v3621 = vrot.slane %v3589, 4
      %v3622 = vrot.slane %v3590, 4
      %v3623 = vrot.slane %v3591, 4
      %v3624 = vrot.slane %v3592, 4
      %v3625 = vrot.slane %v3593, 4
      %v3626 = vrot.slane %v3594, 4
      %v3627 = vrot.slane %v3595, 4
      %v3628 = vrot.slane %v3596, 4
      %v3629 = vrot.slane %v3597, 4
      %v3630 = vrot.slane %v3598, 4
      %s3647 = scalar_lea.vmem [#allocation3], 16
      %vm3648 = vcmask 64516
      %3649 = vst.msk [vmem:[%s3647] sm:$0xf0] %vm3648, %v3615
      %vm3650 = vcmask 60416
      %3651 = vst.msk [vmem:[%s3647 + $0x8] sm:$0xf] %vm3650, %v3615
      %3652 = vst.msk [vmem:[%s3647 + $0x10] sm:$0xf0] %vm3648, %v3616
      %3653 = vst.msk [vmem:[%s3647 + $0x18] sm:$0xf] %vm3650, %v3616
      %3654 = vst.msk [vmem:[%s3647 + $0x20] sm:$0xf0] %vm3648, %v3617
      %3655 = vst.msk [vmem:[%s3647 + $0x28] sm:$0xf] %vm3650, %v3617
      %3656 = vst.msk [vmem:[%s3647 + $0x30] sm:$0xf0] %vm3648, %v3618
      %3657 = vst.msk [vmem:[%s3647 + $0x38] sm:$0xf] %vm3650, %v3618
      %3658 = vst.msk [vmem:[%s3647 + $0x40] sm:$0xf0] %vm3648, %v3619
      %3659 = vst.msk [vmem:[%s3647 + $0x48] sm:$0xf] %vm3650, %v3619
      %3660 = vst.msk [vmem:[%s3647 + $0x50] sm:$0xf0] %vm3648, %v3620
      %3661 = vst.msk [vmem:[%s3647 + $0x58] sm:$0xf] %vm3650, %v3620
      %3662 = vst.msk [vmem:[%s3647 + $0x60] sm:$0xf0] %vm3648, %v3621
      %3663 = vst.msk [vmem:[%s3647 + $0x68] sm:$0xf] %vm3650, %v3621
      %3664 = vst.msk [vmem:[%s3647 + $0x70] sm:$0xf0] %vm3648, %v3622
      %3665 = vst.msk [vmem:[%s3647 + $0x78] sm:$0xf] %vm3650, %v3622
      %3666 = vst.msk [vmem:[%s3647 + $0x80] sm:$0xf0] %vm3648, %v3623
      %3667 = vst.msk [vmem:[%s3647 + $0x88] sm:$0xf] %vm3650, %v3623
      %3668 = vst.msk [vmem:[%s3647 + $0x90] sm:$0xf0] %vm3648, %v3624
      %3669 = vst.msk [vmem:[%s3647 + $0x98] sm:$0xf] %vm3650, %v3624
      %3670 = vst.msk [vmem:[%s3647 + $0xa0] sm:$0xf0] %vm3648, %v3625
      %3671 = vst.msk [vmem:[%s3647 + $0xa8] sm:$0xf] %vm3650, %v3625
      %3672 = vst.msk [vmem:[%s3647 + $0xb0] sm:$0xf0] %vm3648, %v3626
      %3673 = vst.msk [vmem:[%s3647 + $0xb8] sm:$0xf] %vm3650, %v3626
      %3674 = vst.msk [vmem:[%s3647 + $0xc0] sm:$0xf0] %vm3648, %v3627
      %3675 = vst.msk [vmem:[%s3647 + $0xc8] sm:$0xf] %vm3650, %v3627
      %3676 = vst.msk [vmem:[%s3647 + $0xd0] sm:$0xf0] %vm3648, %v3628
      %3677 = vst.msk [vmem:[%s3647 + $0xd8] sm:$0xf] %vm3650, %v3628
      %3678 = vst.msk [vmem:[%s3647 + $0xe0] sm:$0xf0] %vm3648, %v3629
      %3679 = vst.msk [vmem:[%s3647 + $0xe8] sm:$0xf] %vm3650, %v3629
      %3680 = vst.msk [vmem:[%s3647 + $0xf0] sm:$0xf0] %vm3648, %v3630
      %3681 = vst.msk [vmem:[%s3647 + $0xf8] sm:$0xf] %vm3650, %v3630
      %v3682 = vld [vmem:[#allocation3] sm:$0xf8]
      %v3683 = vld [vmem:[#allocation3 + $0x8] sm:$0xf]
      %v3684 = vld [vmem:[#allocation3 + $0x10] sm:$0xf8]
      %v3685 = vld [vmem:[#allocation3 + $0x18] sm:$0xf]
      %v3686 = vld [vmem:[#allocation3 + $0x20] sm:$0xf8]
      %v3687 = vld [vmem:[#allocation3 + $0x28] sm:$0xf]
      %v3688 = vld [vmem:[#allocation3 + $0x30] sm:$0xf8]
      %v3689 = vld [vmem:[#allocation3 + $0x38] sm:$0xf]
      %v3690 = vld [vmem:[#allocation3 + $0x40] sm:$0xf8]
      %v3691 = vld [vmem:[#allocation3 + $0x48] sm:$0xf]
      %v3692 = vld [vmem:[#allocation3 + $0x50] sm:$0xf8]
      %v3693 = vld [vmem:[#allocation3 + $0x58] sm:$0xf]
      %v3694 = vld [vmem:[#allocation3 + $0x60] sm:$0xf8]
      %v3695 = vld [vmem:[#allocation3 + $0x68] sm:$0xf]
      %v3696 = vld [vmem:[#allocation3 + $0x70] sm:$0xf8]
      %v3697 = vld [vmem:[#allocation3 + $0x78] sm:$0xf]
      %v3698 = vld [vmem:[#allocation3 + $0x80] sm:$0xf8]
      %v3699 = vld [vmem:[#allocation3 + $0x88] sm:$0xf]
      %v3700 = vld [vmem:[#allocation3 + $0x90] sm:$0xf8]
      %v3701 = vld [vmem:[#allocation3 + $0x98] sm:$0xf]
      %v3702 = vld [vmem:[#allocation3 + $0xa0] sm:$0xf8]
      %v3703 = vld [vmem:[#allocation3 + $0xa8] sm:$0xf]
      %v3704 = vld [vmem:[#allocation3 + $0xb0] sm:$0xf8]
      %v3705 = vld [vmem:[#allocation3 + $0xb8] sm:$0xf]
      %v3706 = vld [vmem:[#allocation3 + $0xc0] sm:$0xf8]
      %v3707 = vld [vmem:[#allocation3 + $0xc8] sm:$0xf]
      %v3708 = vld [vmem:[#allocation3 + $0xd0] sm:$0xf8]
      %v3709 = vld [vmem:[#allocation3 + $0xd8] sm:$0xf]
      %v3710 = vld [vmem:[#allocation3 + $0xe0] sm:$0xf8]
      %v3711 = vld [vmem:[#allocation3 + $0xe8] sm:$0xf]
      %v3712 = vld [vmem:[#allocation3 + $0xf0] sm:$0xf8]
      %v3713 = vld [vmem:[#allocation3 + $0xf8] sm:$0xf]
      %v3715 = vshrl.u32 %v3682, 16
      %v3717 = vrot.slane %v3715, 3
      %v3718 = vshll.u32 %v3682, 16
      %v3720 = vrot.slane %v3718, 4
      %v3721 = vor.u32 %v3717, %v3720
      %v3723 = vshrl.u32 %v3683, 16
      %v3725 = vrot.slane %v3723, 3
      %v3726 = vshll.u32 %v3683, 16
      %v3728 = vrot.slane %v3726, 4
      %v3729 = vor.u32 %v3725, %v3728
      %v3730 = vsel %vm322, %v3721, %v3729
      %v3732 = vshrl.u32 %v3684, 16
      %v3734 = vrot.slane %v3732, 3
      %v3735 = vshll.u32 %v3684, 16
      %v3737 = vrot.slane %v3735, 4
      %v3738 = vor.u32 %v3734, %v3737
      %v3740 = vshrl.u32 %v3685, 16
      %v3742 = vrot.slane %v3740, 3
      %v3743 = vshll.u32 %v3685, 16
      %v3745 = vrot.slane %v3743, 4
      %v3746 = vor.u32 %v3742, %v3745
      %v3747 = vsel %vm322, %v3738, %v3746
      %v3749 = vshrl.u32 %v3686, 16
      %v3751 = vrot.slane %v3749, 3
      %v3752 = vshll.u32 %v3686, 16
      %v3754 = vrot.slane %v3752, 4
      %v3755 = vor.u32 %v3751, %v3754
      %v3757 = vshrl.u32 %v3687, 16
      %v3759 = vrot.slane %v3757, 3
      %v3760 = vshll.u32 %v3687, 16
      %v3762 = vrot.slane %v3760, 4
      %v3763 = vor.u32 %v3759, %v3762
      %v3764 = vsel %vm322, %v3755, %v3763
      %v3766 = vshrl.u32 %v3688, 16
      %v3768 = vrot.slane %v3766, 3
      %v3769 = vshll.u32 %v3688, 16
      %v3771 = vrot.slane %v3769, 4
      %v3772 = vor.u32 %v3768, %v3771
      %v3774 = vshrl.u32 %v3689, 16
      %v3776 = vrot.slane %v3774, 3
      %v3777 = vshll.u32 %v3689, 16
      %v3779 = vrot.slane %v3777, 4
      %v3780 = vor.u32 %v3776, %v3779
      %v3781 = vsel %vm322, %v3772, %v3780
      %v3783 = vshrl.u32 %v3690, 16
      %v3785 = vrot.slane %v3783, 3
      %v3786 = vshll.u32 %v3690, 16
      %v3788 = vrot.slane %v3786, 4
      %v3789 = vor.u32 %v3785, %v3788
      %v3791 = vshrl.u32 %v3691, 16
      %v3793 = vrot.slane %v3791, 3
      %v3794 = vshll.u32 %v3691, 16
      %v3796 = vrot.slane %v3794, 4
      %v3797 = vor.u32 %v3793, %v3796
      %v3798 = vsel %vm322, %v3789, %v3797
      %v3800 = vshrl.u32 %v3692, 16
      %v3802 = vrot.slane %v3800, 3
      %v3803 = vshll.u32 %v3692, 16
      %v3805 = vrot.slane %v3803, 4
      %v3806 = vor.u32 %v3802, %v3805
      %v3808 = vshrl.u32 %v3693, 16
      %v3810 = vrot.slane %v3808, 3
      %v3811 = vshll.u32 %v3693, 16
      %v3813 = vrot.slane %v3811, 4
      %v3814 = vor.u32 %v3810, %v3813
      %v3815 = vsel %vm322, %v3806, %v3814
      %v3817 = vshrl.u32 %v3694, 16
      %v3819 = vrot.slane %v3817, 3
      %v3820 = vshll.u32 %v3694, 16
      %v3822 = vrot.slane %v3820, 4
      %v3823 = vor.u32 %v3819, %v3822
      %v3825 = vshrl.u32 %v3695, 16
      %v3827 = vrot.slane %v3825, 3
      %v3828 = vshll.u32 %v3695, 16
      %v3830 = vrot.slane %v3828, 4
      %v3831 = vor.u32 %v3827, %v3830
      %v3832 = vsel %vm322, %v3823, %v3831
      %v3834 = vshrl.u32 %v3696, 16
      %v3836 = vrot.slane %v3834, 3
      %v3837 = vshll.u32 %v3696, 16
      %v3839 = vrot.slane %v3837, 4
      %v3840 = vor.u32 %v3836, %v3839
      %v3842 = vshrl.u32 %v3697, 16
      %v3844 = vrot.slane %v3842, 3
      %v3845 = vshll.u32 %v3697, 16
      %v3847 = vrot.slane %v3845, 4
      %v3848 = vor.u32 %v3844, %v3847
      %v3849 = vsel %vm322, %v3840, %v3848
      %v3851 = vshrl.u32 %v3698, 16
      %v3853 = vrot.slane %v3851, 3
      %v3854 = vshll.u32 %v3698, 16
      %v3856 = vrot.slane %v3854, 4
      %v3857 = vor.u32 %v3853, %v3856
      %v3859 = vshrl.u32 %v3699, 16
      %v3861 = vrot.slane %v3859, 3
      %v3862 = vshll.u32 %v3699, 16
      %v3864 = vrot.slane %v3862, 4
      %v3865 = vor.u32 %v3861, %v3864
      %v3866 = vsel %vm322, %v3857, %v3865
      %v3868 = vshrl.u32 %v3700, 16
      %v3870 = vrot.slane %v3868, 3
      %v3871 = vshll.u32 %v3700, 16
      %v3873 = vrot.slane %v3871, 4
      %v3874 = vor.u32 %v3870, %v3873
      %v3876 = vshrl.u32 %v3701, 16
      %v3878 = vrot.slane %v3876, 3
      %v3879 = vshll.u32 %v3701, 16
      %v3881 = vrot.slane %v3879, 4
      %v3882 = vor.u32 %v3878, %v3881
      %v3883 = vsel %vm322, %v3874, %v3882
      %v3885 = vshrl.u32 %v3702, 16
      %v3887 = vrot.slane %v3885, 3
      %v3888 = vshll.u32 %v3702, 16
      %v3890 = vrot.slane %v3888, 4
      %v3891 = vor.u32 %v3887, %v3890
      %v3893 = vshrl.u32 %v3703, 16
      %v3895 = vrot.slane %v3893, 3
      %v3896 = vshll.u32 %v3703, 16
      %v3898 = vrot.slane %v3896, 4
      %v3899 = vor.u32 %v3895, %v3898
      %v3900 = vsel %vm322, %v3891, %v3899
      %v3902 = vshrl.u32 %v3704, 16
      %v3904 = vrot.slane %v3902, 3
      %v3905 = vshll.u32 %v3704, 16
      %v3907 = vrot.slane %v3905, 4
      %v3908 = vor.u32 %v3904, %v3907
      %v3910 = vshrl.u32 %v3705, 16
      %v3912 = vrot.slane %v3910, 3
      %v3913 = vshll.u32 %v3705, 16
      %v3915 = vrot.slane %v3913, 4
      %v3916 = vor.u32 %v3912, %v3915
      %v3917 = vsel %vm322, %v3908, %v3916
      %v3919 = vshrl.u32 %v3706, 16
      %v3921 = vrot.slane %v3919, 3
      %v3922 = vshll.u32 %v3706, 16
      %v3924 = vrot.slane %v3922, 4
      %v3925 = vor.u32 %v3921, %v3924
      %v3927 = vshrl.u32 %v3707, 16
      %v3929 = vrot.slane %v3927, 3
      %v3930 = vshll.u32 %v3707, 16
      %v3932 = vrot.slane %v3930, 4
      %v3933 = vor.u32 %v3929, %v3932
      %v3934 = vsel %vm322, %v3925, %v3933
      %v3936 = vshrl.u32 %v3708, 16
      %v3938 = vrot.slane %v3936, 3
      %v3939 = vshll.u32 %v3708, 16
      %v3941 = vrot.slane %v3939, 4
      %v3942 = vor.u32 %v3938, %v3941
      %v3944 = vshrl.u32 %v3709, 16
      %v3946 = vrot.slane %v3944, 3
      %v3947 = vshll.u32 %v3709, 16
      %v3949 = vrot.slane %v3947, 4
      %v3950 = vor.u32 %v3946, %v3949
      %v3951 = vsel %vm322, %v3942, %v3950
      %v3953 = vshrl.u32 %v3710, 16
      %v3955 = vrot.slane %v3953, 3
      %v3956 = vshll.u32 %v3710, 16
      %v3958 = vrot.slane %v3956, 4
      %v3959 = vor.u32 %v3955, %v3958
      %v3961 = vshrl.u32 %v3711, 16
      %v3963 = vrot.slane %v3961, 3
      %v3964 = vshll.u32 %v3711, 16
      %v3966 = vrot.slane %v3964, 4
      %v3967 = vor.u32 %v3963, %v3966
      %v3968 = vsel %vm322, %v3959, %v3967
      %v3970 = vshrl.u32 %v3712, 16
      %v3972 = vrot.slane %v3970, 3
      %v3973 = vshll.u32 %v3712, 16
      %v3975 = vrot.slane %v3973, 4
      %v3976 = vor.u32 %v3972, %v3975
      %v3978 = vshrl.u32 %v3713, 16
      %v3980 = vrot.slane %v3978, 3
      %v3981 = vshll.u32 %v3713, 16
      %v3983 = vrot.slane %v3981, 4
      %v3984 = vor.u32 %v3980, %v3983
      %v3985 = vsel %vm322, %v3976, %v3984
      %v3986 = vld [vmem:[#allocation3] sm:$0xf0]
      %v3987 = vld [vmem:[#allocation3 + $0x10] sm:$0xf0]
      %v3988 = vld [vmem:[#allocation3 + $0x20] sm:$0xf0]
      %v3989 = vld [vmem:[#allocation3 + $0x30] sm:$0xf0]
      %v3990 = vld [vmem:[#allocation3 + $0x40] sm:$0xf0]
      %v3991 = vld [vmem:[#allocation3 + $0x50] sm:$0xf0]
      %v3992 = vld [vmem:[#allocation3 + $0x60] sm:$0xf0]
      %v3993 = vld [vmem:[#allocation3 + $0x70] sm:$0xf0]
      %v3994 = vld [vmem:[#allocation3 + $0x80] sm:$0xf0]
      %v3995 = vld [vmem:[#allocation3 + $0x90] sm:$0xf0]
      %v3996 = vld [vmem:[#allocation3 + $0xa0] sm:$0xf0]
      %v3997 = vld [vmem:[#allocation3 + $0xb0] sm:$0xf0]
      %v3998 = vld [vmem:[#allocation3 + $0xc0] sm:$0xf0]
      %v3999 = vld [vmem:[#allocation3 + $0xd0] sm:$0xf0]
      %v4000 = vld [vmem:[#allocation3 + $0xe0] sm:$0xf0]
      %v4001 = vld [vmem:[#allocation3 + $0xf0] sm:$0xf0]
      %v4034 = vrot.slane %v3986, 4
      %v4035 = vrot.slane %v3683, 4
      %v4036 = vsel %vm893, %v4034, %v4035
      %v4037 = vrot.slane %v3987, 4
      %v4038 = vrot.slane %v3685, 4
      %v4039 = vsel %vm893, %v4037, %v4038
      %v4040 = vrot.slane %v3988, 4
      %v4041 = vrot.slane %v3687, 4
      %v4042 = vsel %vm893, %v4040, %v4041
      %v4043 = vrot.slane %v3989, 4
      %v4044 = vrot.slane %v3689, 4
      %v4045 = vsel %vm893, %v4043, %v4044
      %v4046 = vrot.slane %v3990, 4
      %v4047 = vrot.slane %v3691, 4
      %v4048 = vsel %vm893, %v4046, %v4047
      %v4049 = vrot.slane %v3991, 4
      %v4050 = vrot.slane %v3693, 4
      %v4051 = vsel %vm893, %v4049, %v4050
      %v4052 = vrot.slane %v3992, 4
      %v4053 = vrot.slane %v3695, 4
      %v4054 = vsel %vm893, %v4052, %v4053
      %v4055 = vrot.slane %v3993, 4
      %v4056 = vrot.slane %v3697, 4
      %v4057 = vsel %vm893, %v4055, %v4056
      %v4058 = vrot.slane %v3994, 4
      %v4059 = vrot.slane %v3699, 4
      %v4060 = vsel %vm893, %v4058, %v4059
      %v4061 = vrot.slane %v3995, 4
      %v4062 = vrot.slane %v3701, 4
      %v4063 = vsel %vm893, %v4061, %v4062
      %v4064 = vrot.slane %v3996, 4
      %v4065 = vrot.slane %v3703, 4
      %v4066 = vsel %vm893, %v4064, %v4065
      %v4067 = vrot.slane %v3997, 4
      %v4068 = vrot.slane %v3705, 4
      %v4069 = vsel %vm893, %v4067, %v4068
      %v4070 = vrot.slane %v3998, 4
      %v4071 = vrot.slane %v3707, 4
      %v4072 = vsel %vm893, %v4070, %v4071
      %v4073 = vrot.slane %v3999, 4
      %v4074 = vrot.slane %v3709, 4
      %v4075 = vsel %vm893, %v4073, %v4074
      %v4076 = vrot.slane %v4000, 4
      %v4077 = vrot.slane %v3711, 4
      %v4078 = vsel %vm893, %v4076, %v4077
      %v4079 = vrot.slane %v4001, 4
      %v4080 = vrot.slane %v3713, 4
      %v4081 = vsel %vm893, %v4079, %v4080
      %v4082 = vld [vmem:[#allocation3 + $0x8] sm:$0x1f]
      %v4083 = vld [vmem:[#allocation3 + $0x18] sm:$0x1f]
      %v4084 = vld [vmem:[#allocation3 + $0x28] sm:$0x1f]
      %v4085 = vld [vmem:[#allocation3 + $0x38] sm:$0x1f]
      %v4086 = vld [vmem:[#allocation3 + $0x48] sm:$0x1f]
      %v4087 = vld [vmem:[#allocation3 + $0x58] sm:$0x1f]
      %v4088 = vld [vmem:[#allocation3 + $0x68] sm:$0x1f]
      %v4089 = vld [vmem:[#allocation3 + $0x78] sm:$0x1f]
      %v4090 = vld [vmem:[#allocation3 + $0x88] sm:$0x1f]
      %v4091 = vld [vmem:[#allocation3 + $0x98] sm:$0x1f]
      %v4092 = vld [vmem:[#allocation3 + $0xa8] sm:$0x1f]
      %v4093 = vld [vmem:[#allocation3 + $0xb8] sm:$0x1f]
      %v4094 = vld [vmem:[#allocation3 + $0xc8] sm:$0x1f]
      %v4095 = vld [vmem:[#allocation3 + $0xd8] sm:$0x1f]
      %v4096 = vld [vmem:[#allocation3 + $0xe8] sm:$0x1f]
      %v4097 = vld [vmem:[#allocation3 + $0xf8] sm:$0x1f]
      %v4099 = vshrl.u32 %v3986, 16
      %v4101 = vrot.slane %v4099, 4
      %v4102 = vshll.u32 %v3986, 16
      %v4104 = vrot.slane %v4102, 5
      %v4105 = vor.u32 %v4101, %v4104
      %v4107 = vshrl.u32 %v4082, 16
      %v4109 = vrot.slane %v4107, 4
      %v4110 = vshll.u32 %v4082, 16
      %v4112 = vrot.slane %v4110, 5
      %v4113 = vor.u32 %v4109, %v4112
      %v4114 = vsel %vm958, %v4105, %v4113
      %v4116 = vshrl.u32 %v3987, 16
      %v4118 = vrot.slane %v4116, 4
      %v4119 = vshll.u32 %v3987, 16
      %v4121 = vrot.slane %v4119, 5
      %v4122 = vor.u32 %v4118, %v4121
      %v4124 = vshrl.u32 %v4083, 16
      %v4126 = vrot.slane %v4124, 4
      %v4127 = vshll.u32 %v4083, 16
      %v4129 = vrot.slane %v4127, 5
      %v4130 = vor.u32 %v4126, %v4129
      %v4131 = vsel %vm958, %v4122, %v4130
      %v4133 = vshrl.u32 %v3988, 16
      %v4135 = vrot.slane %v4133, 4
      %v4136 = vshll.u32 %v3988, 16
      %v4138 = vrot.slane %v4136, 5
      %v4139 = vor.u32 %v4135, %v4138
      %v4141 = vshrl.u32 %v4084, 16
      %v4143 = vrot.slane %v4141, 4
      %v4144 = vshll.u32 %v4084, 16
      %v4146 = vrot.slane %v4144, 5
      %v4147 = vor.u32 %v4143, %v4146
      %v4148 = vsel %vm958, %v4139, %v4147
      %v4150 = vshrl.u32 %v3989, 16
      %v4152 = vrot.slane %v4150, 4
      %v4153 = vshll.u32 %v3989, 16
      %v4155 = vrot.slane %v4153, 5
      %v4156 = vor.u32 %v4152, %v4155
      %v4158 = vshrl.u32 %v4085, 16
      %v4160 = vrot.slane %v4158, 4
      %v4161 = vshll.u32 %v4085, 16
      %v4163 = vrot.slane %v4161, 5
      %v4164 = vor.u32 %v4160, %v4163
      %v4165 = vsel %vm958, %v4156, %v4164
      %v4167 = vshrl.u32 %v3990, 16
      %v4169 = vrot.slane %v4167, 4
      %v4170 = vshll.u32 %v3990, 16
      %v4172 = vrot.slane %v4170, 5
      %v4173 = vor.u32 %v4169, %v4172
      %v4175 = vshrl.u32 %v4086, 16
      %v4177 = vrot.slane %v4175, 4
      %v4178 = vshll.u32 %v4086, 16
      %v4180 = vrot.slane %v4178, 5
      %v4181 = vor.u32 %v4177, %v4180
      %v4182 = vsel %vm958, %v4173, %v4181
      %v4184 = vshrl.u32 %v3991, 16
      %v4186 = vrot.slane %v4184, 4
      %v4187 = vshll.u32 %v3991, 16
      %v4189 = vrot.slane %v4187, 5
      %v4190 = vor.u32 %v4186, %v4189
      %v4192 = vshrl.u32 %v4087, 16
      %v4194 = vrot.slane %v4192, 4
      %v4195 = vshll.u32 %v4087, 16
      %v4197 = vrot.slane %v4195, 5
      %v4198 = vor.u32 %v4194, %v4197
      %v4199 = vsel %vm958, %v4190, %v4198
      %v4201 = vshrl.u32 %v3992, 16
      %v4203 = vrot.slane %v4201, 4
      %v4204 = vshll.u32 %v3992, 16
      %v4206 = vrot.slane %v4204, 5
      %v4207 = vor.u32 %v4203, %v4206
      %v4209 = vshrl.u32 %v4088, 16
      %v4211 = vrot.slane %v4209, 4
      %v4212 = vshll.u32 %v4088, 16
      %v4214 = vrot.slane %v4212, 5
      %v4215 = vor.u32 %v4211, %v4214
      %v4216 = vsel %vm958, %v4207, %v4215
      %v4218 = vshrl.u32 %v3993, 16
      %v4220 = vrot.slane %v4218, 4
      %v4221 = vshll.u32 %v3993, 16
      %v4223 = vrot.slane %v4221, 5
      %v4224 = vor.u32 %v4220, %v4223
      %v4226 = vshrl.u32 %v4089, 16
      %v4228 = vrot.slane %v4226, 4
      %v4229 = vshll.u32 %v4089, 16
      %v4231 = vrot.slane %v4229, 5
      %v4232 = vor.u32 %v4228, %v4231
      %v4233 = vsel %vm958, %v4224, %v4232
      %v4235 = vshrl.u32 %v3994, 16
      %v4237 = vrot.slane %v4235, 4
      %v4238 = vshll.u32 %v3994, 16
      %v4240 = vrot.slane %v4238, 5
      %v4241 = vor.u32 %v4237, %v4240
      %v4243 = vshrl.u32 %v4090, 16
      %v4245 = vrot.slane %v4243, 4
      %v4246 = vshll.u32 %v4090, 16
      %v4248 = vrot.slane %v4246, 5
      %v4249 = vor.u32 %v4245, %v4248
      %v4250 = vsel %vm958, %v4241, %v4249
      %v4252 = vshrl.u32 %v3995, 16
      %v4254 = vrot.slane %v4252, 4
      %v4255 = vshll.u32 %v3995, 16
      %v4257 = vrot.slane %v4255, 5
      %v4258 = vor.u32 %v4254, %v4257
      %v4260 = vshrl.u32 %v4091, 16
      %v4262 = vrot.slane %v4260, 4
      %v4263 = vshll.u32 %v4091, 16
      %v4265 = vrot.slane %v4263, 5
      %v4266 = vor.u32 %v4262, %v4265
      %v4267 = vsel %vm958, %v4258, %v4266
      %v4269 = vshrl.u32 %v3996, 16
      %v4271 = vrot.slane %v4269, 4
      %v4272 = vshll.u32 %v3996, 16
      %v4274 = vrot.slane %v4272, 5
      %v4275 = vor.u32 %v4271, %v4274
      %v4277 = vshrl.u32 %v4092, 16
      %v4279 = vrot.slane %v4277, 4
      %v4280 = vshll.u32 %v4092, 16
      %v4282 = vrot.slane %v4280, 5
      %v4283 = vor.u32 %v4279, %v4282
      %v4284 = vsel %vm958, %v4275, %v4283
      %v4286 = vshrl.u32 %v3997, 16
      %v4288 = vrot.slane %v4286, 4
      %v4289 = vshll.u32 %v3997, 16
      %v4291 = vrot.slane %v4289, 5
      %v4292 = vor.u32 %v4288, %v4291
      %v4294 = vshrl.u32 %v4093, 16
      %v4296 = vrot.slane %v4294, 4
      %v4297 = vshll.u32 %v4093, 16
      %v4299 = vrot.slane %v4297, 5
      %v4300 = vor.u32 %v4296, %v4299
      %v4301 = vsel %vm958, %v4292, %v4300
      %v4303 = vshrl.u32 %v3998, 16
      %v4305 = vrot.slane %v4303, 4
      %v4306 = vshll.u32 %v3998, 16
      %v4308 = vrot.slane %v4306, 5
      %v4309 = vor.u32 %v4305, %v4308
      %v4311 = vshrl.u32 %v4094, 16
      %v4313 = vrot.slane %v4311, 4
      %v4314 = vshll.u32 %v4094, 16
      %v4316 = vrot.slane %v4314, 5
      %v4317 = vor.u32 %v4313, %v4316
      %v4318 = vsel %vm958, %v4309, %v4317
      %v4320 = vshrl.u32 %v3999, 16
      %v4322 = vrot.slane %v4320, 4
      %v4323 = vshll.u32 %v3999, 16
      %v4325 = vrot.slane %v4323, 5
      %v4326 = vor.u32 %v4322, %v4325
      %v4328 = vshrl.u32 %v4095, 16
      %v4330 = vrot.slane %v4328, 4
      %v4331 = vshll.u32 %v4095, 16
      %v4333 = vrot.slane %v4331, 5
      %v4334 = vor.u32 %v4330, %v4333
      %v4335 = vsel %vm958, %v4326, %v4334
      %v4337 = vshrl.u32 %v4000, 16
      %v4339 = vrot.slane %v4337, 4
      %v4340 = vshll.u32 %v4000, 16
      %v4342 = vrot.slane %v4340, 5
      %v4343 = vor.u32 %v4339, %v4342
      %v4345 = vshrl.u32 %v4096, 16
      %v4347 = vrot.slane %v4345, 4
      %v4348 = vshll.u32 %v4096, 16
      %v4350 = vrot.slane %v4348, 5
      %v4351 = vor.u32 %v4347, %v4350
      %v4352 = vsel %vm958, %v4343, %v4351
      %v4354 = vshrl.u32 %v4001, 16
      %v4356 = vrot.slane %v4354, 4
      %v4357 = vshll.u32 %v4001, 16
      %v4359 = vrot.slane %v4357, 5
      %v4360 = vor.u32 %v4356, %v4359
      %v4362 = vshrl.u32 %v4097, 16
      %v4364 = vrot.slane %v4362, 4
      %v4365 = vshll.u32 %v4097, 16
      %v4367 = vrot.slane %v4365, 5
      %v4368 = vor.u32 %v4364, %v4367
      %v4369 = vsel %vm958, %v4360, %v4368
      %v4370 = vld [vmem:[%s3647] sm:$0xf8]
      %v4371 = vld [vmem:[%s3647 + $0x8] sm:$0xf]
      %v4372 = vld [vmem:[%s3647 + $0x10] sm:$0xf8]
      %v4373 = vld [vmem:[%s3647 + $0x18] sm:$0xf]
      %v4374 = vld [vmem:[%s3647 + $0x20] sm:$0xf8]
      %v4375 = vld [vmem:[%s3647 + $0x28] sm:$0xf]
      %v4376 = vld [vmem:[%s3647 + $0x30] sm:$0xf8]
      %v4377 = vld [vmem:[%s3647 + $0x38] sm:$0xf]
      %v4378 = vld [vmem:[%s3647 + $0x40] sm:$0xf8]
      %v4379 = vld [vmem:[%s3647 + $0x48] sm:$0xf]
      %v4380 = vld [vmem:[%s3647 + $0x50] sm:$0xf8]
      %v4381 = vld [vmem:[%s3647 + $0x58] sm:$0xf]
      %v4382 = vld [vmem:[%s3647 + $0x60] sm:$0xf8]
      %v4383 = vld [vmem:[%s3647 + $0x68] sm:$0xf]
      %v4384 = vld [vmem:[%s3647 + $0x70] sm:$0xf8]
      %v4385 = vld [vmem:[%s3647 + $0x78] sm:$0xf]
      %v4386 = vld [vmem:[%s3647 + $0x80] sm:$0xf8]
      %v4387 = vld [vmem:[%s3647 + $0x88] sm:$0xf]
      %v4388 = vld [vmem:[%s3647 + $0x90] sm:$0xf8]
      %v4389 = vld [vmem:[%s3647 + $0x98] sm:$0xf]
      %v4390 = vld [vmem:[%s3647 + $0xa0] sm:$0xf8]
      %v4391 = vld [vmem:[%s3647 + $0xa8] sm:$0xf]
      %v4392 = vld [vmem:[%s3647 + $0xb0] sm:$0xf8]
      %v4393 = vld [vmem:[%s3647 + $0xb8] sm:$0xf]
      %v4394 = vld [vmem:[%s3647 + $0xc0] sm:$0xf8]
      %v4395 = vld [vmem:[%s3647 + $0xc8] sm:$0xf]
      %v4396 = vld [vmem:[%s3647 + $0xd0] sm:$0xf8]
      %v4397 = vld [vmem:[%s3647 + $0xd8] sm:$0xf]
      %v4398 = vld [vmem:[%s3647 + $0xe0] sm:$0xf8]
      %v4399 = vld [vmem:[%s3647 + $0xe8] sm:$0xf]
      %v4400 = vld [vmem:[%s3647 + $0xf0] sm:$0xf8]
      %v4401 = vld [vmem:[%s3647 + $0xf8] sm:$0xf]
      %v4403 = vshrl.u32 %v4370, 16
      %v4405 = vrot.slane %v4403, 3
      %v4406 = vshll.u32 %v4370, 16
      %v4408 = vrot.slane %v4406, 4
      %v4409 = vor.u32 %v4405, %v4408
      %v4411 = vshrl.u32 %v4371, 16
      %v4413 = vrot.slane %v4411, 3
      %v4414 = vshll.u32 %v4371, 16
      %v4416 = vrot.slane %v4414, 4
      %v4417 = vor.u32 %v4413, %v4416
      %v4418 = vsel %vm322, %v4409, %v4417
      %v4420 = vshrl.u32 %v4372, 16
      %v4422 = vrot.slane %v4420, 3
      %v4423 = vshll.u32 %v4372, 16
      %v4425 = vrot.slane %v4423, 4
      %v4426 = vor.u32 %v4422, %v4425
      %v4428 = vshrl.u32 %v4373, 16
      %v4430 = vrot.slane %v4428, 3
      %v4431 = vshll.u32 %v4373, 16
      %v4433 = vrot.slane %v4431, 4
      %v4434 = vor.u32 %v4430, %v4433
      %v4435 = vsel %vm322, %v4426, %v4434
      %v4437 = vshrl.u32 %v4374, 16
      %v4439 = vrot.slane %v4437, 3
      %v4440 = vshll.u32 %v4374, 16
      %v4442 = vrot.slane %v4440, 4
      %v4443 = vor.u32 %v4439, %v4442
      %v4445 = vshrl.u32 %v4375, 16
      %v4447 = vrot.slane %v4445, 3
      %v4448 = vshll.u32 %v4375, 16
      %v4450 = vrot.slane %v4448, 4
      %v4451 = vor.u32 %v4447, %v4450
      %v4452 = vsel %vm322, %v4443, %v4451
      %v4454 = vshrl.u32 %v4376, 16
      %v4456 = vrot.slane %v4454, 3
      %v4457 = vshll.u32 %v4376, 16
      %v4459 = vrot.slane %v4457, 4
      %v4460 = vor.u32 %v4456, %v4459
      %v4462 = vshrl.u32 %v4377, 16
      %v4464 = vrot.slane %v4462, 3
      %v4465 = vshll.u32 %v4377, 16
      %v4467 = vrot.slane %v4465, 4
      %v4468 = vor.u32 %v4464, %v4467
      %v4469 = vsel %vm322, %v4460, %v4468
      %v4471 = vshrl.u32 %v4378, 16
      %v4473 = vrot.slane %v4471, 3
      %v4474 = vshll.u32 %v4378, 16
      %v4476 = vrot.slane %v4474, 4
      %v4477 = vor.u32 %v4473, %v4476
      %v4479 = vshrl.u32 %v4379, 16
      %v4481 = vrot.slane %v4479, 3
      %v4482 = vshll.u32 %v4379, 16
      %v4484 = vrot.slane %v4482, 4
      %v4485 = vor.u32 %v4481, %v4484
      %v4486 = vsel %vm322, %v4477, %v4485
      %v4488 = vshrl.u32 %v4380, 16
      %v4490 = vrot.slane %v4488, 3
      %v4491 = vshll.u32 %v4380, 16
      %v4493 = vrot.slane %v4491, 4
      %v4494 = vor.u32 %v4490, %v4493
      %v4496 = vshrl.u32 %v4381, 16
      %v4498 = vrot.slane %v4496, 3
      %v4499 = vshll.u32 %v4381, 16
      %v4501 = vrot.slane %v4499, 4
      %v4502 = vor.u32 %v4498, %v4501
      %v4503 = vsel %vm322, %v4494, %v4502
      %v4505 = vshrl.u32 %v4382, 16
      %v4507 = vrot.slane %v4505, 3
      %v4508 = vshll.u32 %v4382, 16
      %v4510 = vrot.slane %v4508, 4
      %v4511 = vor.u32 %v4507, %v4510
      %v4513 = vshrl.u32 %v4383, 16
      %v4515 = vrot.slane %v4513, 3
      %v4516 = vshll.u32 %v4383, 16
      %v4518 = vrot.slane %v4516, 4
      %v4519 = vor.u32 %v4515, %v4518
      %v4520 = vsel %vm322, %v4511, %v4519
      %v4522 = vshrl.u32 %v4384, 16
      %v4524 = vrot.slane %v4522, 3
      %v4525 = vshll.u32 %v4384, 16
      %v4527 = vrot.slane %v4525, 4
      %v4528 = vor.u32 %v4524, %v4527
      %v4530 = vshrl.u32 %v4385, 16
      %v4532 = vrot.slane %v4530, 3
      %v4533 = vshll.u32 %v4385, 16
      %v4535 = vrot.slane %v4533, 4
      %v4536 = vor.u32 %v4532, %v4535
      %v4537 = vsel %vm322, %v4528, %v4536
      %v4539 = vshrl.u32 %v4386, 16
      %v4541 = vrot.slane %v4539, 3
      %v4542 = vshll.u32 %v4386, 16
      %v4544 = vrot.slane %v4542, 4
      %v4545 = vor.u32 %v4541, %v4544
      %v4547 = vshrl.u32 %v4387, 16
      %v4549 = vrot.slane %v4547, 3
      %v4550 = vshll.u32 %v4387, 16
      %v4552 = vrot.slane %v4550, 4
      %v4553 = vor.u32 %v4549, %v4552
      %v4554 = vsel %vm322, %v4545, %v4553
      %v4556 = vshrl.u32 %v4388, 16
      %v4558 = vrot.slane %v4556, 3
      %v4559 = vshll.u32 %v4388, 16
      %v4561 = vrot.slane %v4559, 4
      %v4562 = vor.u32 %v4558, %v4561
      %v4564 = vshrl.u32 %v4389, 16
      %v4566 = vrot.slane %v4564, 3
      %v4567 = vshll.u32 %v4389, 16
      %v4569 = vrot.slane %v4567, 4
      %v4570 = vor.u32 %v4566, %v4569
      %v4571 = vsel %vm322, %v4562, %v4570
      %v4573 = vshrl.u32 %v4390, 16
      %v4575 = vrot.slane %v4573, 3
      %v4576 = vshll.u32 %v4390, 16
      %v4578 = vrot.slane %v4576, 4
      %v4579 = vor.u32 %v4575, %v4578
      %v4581 = vshrl.u32 %v4391, 16
      %v4583 = vrot.slane %v4581, 3
      %v4584 = vshll.u32 %v4391, 16
      %v4586 = vrot.slane %v4584, 4
      %v4587 = vor.u32 %v4583, %v4586
      %v4588 = vsel %vm322, %v4579, %v4587
      %v4590 = vshrl.u32 %v4392, 16
      %v4592 = vrot.slane %v4590, 3
      %v4593 = vshll.u32 %v4392, 16
      %v4595 = vrot.slane %v4593, 4
      %v4596 = vor.u32 %v4592, %v4595
      %v4598 = vshrl.u32 %v4393, 16
      %v4600 = vrot.slane %v4598, 3
      %v4601 = vshll.u32 %v4393, 16
      %v4603 = vrot.slane %v4601, 4
      %v4604 = vor.u32 %v4600, %v4603
      %v4605 = vsel %vm322, %v4596, %v4604
      %v4607 = vshrl.u32 %v4394, 16
      %v4609 = vrot.slane %v4607, 3
      %v4610 = vshll.u32 %v4394, 16
      %v4612 = vrot.slane %v4610, 4
      %v4613 = vor.u32 %v4609, %v4612
      %v4615 = vshrl.u32 %v4395, 16
      %v4617 = vrot.slane %v4615, 3
      %v4618 = vshll.u32 %v4395, 16
      %v4620 = vrot.slane %v4618, 4
      %v4621 = vor.u32 %v4617, %v4620
      %v4622 = vsel %vm322, %v4613, %v4621
      %v4624 = vshrl.u32 %v4396, 16
      %v4626 = vrot.slane %v4624, 3
      %v4627 = vshll.u32 %v4396, 16
      %v4629 = vrot.slane %v4627, 4
      %v4630 = vor.u32 %v4626, %v4629
      %v4632 = vshrl.u32 %v4397, 16
      %v4634 = vrot.slane %v4632, 3
      %v4635 = vshll.u32 %v4397, 16
      %v4637 = vrot.slane %v4635, 4
      %v4638 = vor.u32 %v4634, %v4637
      %v4639 = vsel %vm322, %v4630, %v4638
      %v4641 = vshrl.u32 %v4398, 16
      %v4643 = vrot.slane %v4641, 3
      %v4644 = vshll.u32 %v4398, 16
      %v4646 = vrot.slane %v4644, 4
      %v4647 = vor.u32 %v4643, %v4646
      %v4649 = vshrl.u32 %v4399, 16
      %v4651 = vrot.slane %v4649, 3
      %v4652 = vshll.u32 %v4399, 16
      %v4654 = vrot.slane %v4652, 4
      %v4655 = vor.u32 %v4651, %v4654
      %v4656 = vsel %vm322, %v4647, %v4655
      %v4658 = vshrl.u32 %v4400, 16
      %v4660 = vrot.slane %v4658, 3
      %v4661 = vshll.u32 %v4400, 16
      %v4663 = vrot.slane %v4661, 4
      %v4664 = vor.u32 %v4660, %v4663
      %v4666 = vshrl.u32 %v4401, 16
      %v4668 = vrot.slane %v4666, 3
      %v4669 = vshll.u32 %v4401, 16
      %v4671 = vrot.slane %v4669, 4
      %v4672 = vor.u32 %v4668, %v4671
      %v4673 = vsel %vm322, %v4664, %v4672
      %v4674 = vld [vmem:[%s3647] sm:$0xf0]
      %v4675 = vld [vmem:[%s3647 + $0x10] sm:$0xf0]
      %v4676 = vld [vmem:[%s3647 + $0x20] sm:$0xf0]
      %v4677 = vld [vmem:[%s3647 + $0x30] sm:$0xf0]
      %v4678 = vld [vmem:[%s3647 + $0x40] sm:$0xf0]
      %v4679 = vld [vmem:[%s3647 + $0x50] sm:$0xf0]
      %v4680 = vld [vmem:[%s3647 + $0x60] sm:$0xf0]
      %v4681 = vld [vmem:[%s3647 + $0x70] sm:$0xf0]
      %v4682 = vld [vmem:[%s3647 + $0x80] sm:$0xf0]
      %v4683 = vld [vmem:[%s3647 + $0x90] sm:$0xf0]
      %v4684 = vld [vmem:[%s3647 + $0xa0] sm:$0xf0]
      %v4685 = vld [vmem:[%s3647 + $0xb0] sm:$0xf0]
      %v4686 = vld [vmem:[%s3647 + $0xc0] sm:$0xf0]
      %v4687 = vld [vmem:[%s3647 + $0xd0] sm:$0xf0]
      %v4688 = vld [vmem:[%s3647 + $0xe0] sm:$0xf0]
      %v4689 = vld [vmem:[%s3647 + $0xf0] sm:$0xf0]
      %v4722 = vrot.slane %v4674, 4
      %v4723 = vrot.slane %v4371, 4
      %v4724 = vsel %vm893, %v4722, %v4723
      %v4725 = vrot.slane %v4675, 4
      %v4726 = vrot.slane %v4373, 4
      %v4727 = vsel %vm893, %v4725, %v4726
      %v4728 = vrot.slane %v4676, 4
      %v4729 = vrot.slane %v4375, 4
      %v4730 = vsel %vm893, %v4728, %v4729
      %v4731 = vrot.slane %v4677, 4
      %v4732 = vrot.slane %v4377, 4
      %v4733 = vsel %vm893, %v4731, %v4732
      %v4734 = vrot.slane %v4678, 4
      %v4735 = vrot.slane %v4379, 4
      %v4736 = vsel %vm893, %v4734, %v4735
      %v4737 = vrot.slane %v4679, 4
      %v4738 = vrot.slane %v4381, 4
      %v4739 = vsel %vm893, %v4737, %v4738
      %v4740 = vrot.slane %v4680, 4
      %v4741 = vrot.slane %v4383, 4
      %v4742 = vsel %vm893, %v4740, %v4741
      %v4743 = vrot.slane %v4681, 4
      %v4744 = vrot.slane %v4385, 4
      %v4745 = vsel %vm893, %v4743, %v4744
      %v4746 = vrot.slane %v4682, 4
      %v4747 = vrot.slane %v4387, 4
      %v4748 = vsel %vm893, %v4746, %v4747
      %v4749 = vrot.slane %v4683, 4
      %v4750 = vrot.slane %v4389, 4
      %v4751 = vsel %vm893, %v4749, %v4750
      %v4752 = vrot.slane %v4684, 4
      %v4753 = vrot.slane %v4391, 4
      %v4754 = vsel %vm893, %v4752, %v4753
      %v4755 = vrot.slane %v4685, 4
      %v4756 = vrot.slane %v4393, 4
      %v4757 = vsel %vm893, %v4755, %v4756
      %v4758 = vrot.slane %v4686, 4
      %v4759 = vrot.slane %v4395, 4
      %v4760 = vsel %vm893, %v4758, %v4759
      %v4761 = vrot.slane %v4687, 4
      %v4762 = vrot.slane %v4397, 4
      %v4763 = vsel %vm893, %v4761, %v4762
      %v4764 = vrot.slane %v4688, 4
      %v4765 = vrot.slane %v4399, 4
      %v4766 = vsel %vm893, %v4764, %v4765
      %v4767 = vrot.slane %v4689, 4
      %v4768 = vrot.slane %v4401, 4
      %v4769 = vsel %vm893, %v4767, %v4768
      %v4770 = vld [vmem:[%s3647 + $0x8] sm:$0x1f]
      %v4771 = vld [vmem:[%s3647 + $0x18] sm:$0x1f]
      %v4772 = vld [vmem:[%s3647 + $0x28] sm:$0x1f]
      %v4773 = vld [vmem:[%s3647 + $0x38] sm:$0x1f]
      %v4774 = vld [vmem:[%s3647 + $0x48] sm:$0x1f]
      %v4775 = vld [vmem:[%s3647 + $0x58] sm:$0x1f]
      %v4776 = vld [vmem:[%s3647 + $0x68] sm:$0x1f]
      %v4777 = vld [vmem:[%s3647 + $0x78] sm:$0x1f]
      %v4778 = vld [vmem:[%s3647 + $0x88] sm:$0x1f]
      %v4779 = vld [vmem:[%s3647 + $0x98] sm:$0x1f]
      %v4780 = vld [vmem:[%s3647 + $0xa8] sm:$0x1f]
      %v4781 = vld [vmem:[%s3647 + $0xb8] sm:$0x1f]
      %v4782 = vld [vmem:[%s3647 + $0xc8] sm:$0x1f]
      %v4783 = vld [vmem:[%s3647 + $0xd8] sm:$0x1f]
      %v4784 = vld [vmem:[%s3647 + $0xe8] sm:$0x1f]
      %v4785 = vld [vmem:[%s3647 + $0xf8] sm:$0x1f]
      %v4787 = vshrl.u32 %v4674, 16
      %v4789 = vrot.slane %v4787, 4
      %v4790 = vshll.u32 %v4674, 16
      %v4792 = vrot.slane %v4790, 5
      %v4793 = vor.u32 %v4789, %v4792
      %v4795 = vshrl.u32 %v4770, 16
      %v4797 = vrot.slane %v4795, 4
      %v4798 = vshll.u32 %v4770, 16
      %v4800 = vrot.slane %v4798, 5
      %v4801 = vor.u32 %v4797, %v4800
      %v4802 = vsel %vm958, %v4793, %v4801
      %v4804 = vshrl.u32 %v4675, 16
      %v4806 = vrot.slane %v4804, 4
      %v4807 = vshll.u32 %v4675, 16
      %v4809 = vrot.slane %v4807, 5
      %v4810 = vor.u32 %v4806, %v4809
      %v4812 = vshrl.u32 %v4771, 16
      %v4814 = vrot.slane %v4812, 4
      %v4815 = vshll.u32 %v4771, 16
      %v4817 = vrot.slane %v4815, 5
      %v4818 = vor.u32 %v4814, %v4817
      %v4819 = vsel %vm958, %v4810, %v4818
      %v4821 = vshrl.u32 %v4676, 16
      %v4823 = vrot.slane %v4821, 4
      %v4824 = vshll.u32 %v4676, 16
      %v4826 = vrot.slane %v4824, 5
      %v4827 = vor.u32 %v4823, %v4826
      %v4829 = vshrl.u32 %v4772, 16
      %v4831 = vrot.slane %v4829, 4
      %v4832 = vshll.u32 %v4772, 16
      %v4834 = vrot.slane %v4832, 5
      %v4835 = vor.u32 %v4831, %v4834
      %v4836 = vsel %vm958, %v4827, %v4835
      %v4838 = vshrl.u32 %v4677, 16
      %v4840 = vrot.slane %v4838, 4
      %v4841 = vshll.u32 %v4677, 16
      %v4843 = vrot.slane %v4841, 5
      %v4844 = vor.u32 %v4840, %v4843
      %v4846 = vshrl.u32 %v4773, 16
      %v4848 = vrot.slane %v4846, 4
      %v4849 = vshll.u32 %v4773, 16
      %v4851 = vrot.slane %v4849, 5
      %v4852 = vor.u32 %v4848, %v4851
      %v4853 = vsel %vm958, %v4844, %v4852
      %v4855 = vshrl.u32 %v4678, 16
      %v4857 = vrot.slane %v4855, 4
      %v4858 = vshll.u32 %v4678, 16
      %v4860 = vrot.slane %v4858, 5
      %v4861 = vor.u32 %v4857, %v4860
      %v4863 = vshrl.u32 %v4774, 16
      %v4865 = vrot.slane %v4863, 4
      %v4866 = vshll.u32 %v4774, 16
      %v4868 = vrot.slane %v4866, 5
      %v4869 = vor.u32 %v4865, %v4868
      %v4870 = vsel %vm958, %v4861, %v4869
      %v4872 = vshrl.u32 %v4679, 16
      %v4874 = vrot.slane %v4872, 4
      %v4875 = vshll.u32 %v4679, 16
      %v4877 = vrot.slane %v4875, 5
      %v4878 = vor.u32 %v4874, %v4877
      %v4880 = vshrl.u32 %v4775, 16
      %v4882 = vrot.slane %v4880, 4
      %v4883 = vshll.u32 %v4775, 16
      %v4885 = vrot.slane %v4883, 5
      %v4886 = vor.u32 %v4882, %v4885
      %v4887 = vsel %vm958, %v4878, %v4886
      %v4889 = vshrl.u32 %v4680, 16
      %v4891 = vrot.slane %v4889, 4
      %v4892 = vshll.u32 %v4680, 16
      %v4894 = vrot.slane %v4892, 5
      %v4895 = vor.u32 %v4891, %v4894
      %v4897 = vshrl.u32 %v4776, 16
      %v4899 = vrot.slane %v4897, 4
      %v4900 = vshll.u32 %v4776, 16
      %v4902 = vrot.slane %v4900, 5
      %v4903 = vor.u32 %v4899, %v4902
      %v4904 = vsel %vm958, %v4895, %v4903
      %v4906 = vshrl.u32 %v4681, 16
      %v4908 = vrot.slane %v4906, 4
      %v4909 = vshll.u32 %v4681, 16
      %v4911 = vrot.slane %v4909, 5
      %v4912 = vor.u32 %v4908, %v4911
      %v4914 = vshrl.u32 %v4777, 16
      %v4916 = vrot.slane %v4914, 4
      %v4917 = vshll.u32 %v4777, 16
      %v4919 = vrot.slane %v4917, 5
      %v4920 = vor.u32 %v4916, %v4919
      %v4921 = vsel %vm958, %v4912, %v4920
      %v4923 = vshrl.u32 %v4682, 16
      %v4925 = vrot.slane %v4923, 4
      %v4926 = vshll.u32 %v4682, 16
      %v4928 = vrot.slane %v4926, 5
      %v4929 = vor.u32 %v4925, %v4928
      %v4931 = vshrl.u32 %v4778, 16
      %v4933 = vrot.slane %v4931, 4
      %v4934 = vshll.u32 %v4778, 16
      %v4936 = vrot.slane %v4934, 5
      %v4937 = vor.u32 %v4933, %v4936
      %v4938 = vsel %vm958, %v4929, %v4937
      %v4940 = vshrl.u32 %v4683, 16
      %v4942 = vrot.slane %v4940, 4
      %v4943 = vshll.u32 %v4683, 16
      %v4945 = vrot.slane %v4943, 5
      %v4946 = vor.u32 %v4942, %v4945
      %v4948 = vshrl.u32 %v4779, 16
      %v4950 = vrot.slane %v4948, 4
      %v4951 = vshll.u32 %v4779, 16
      %v4953 = vrot.slane %v4951, 5
      %v4954 = vor.u32 %v4950, %v4953
      %v4955 = vsel %vm958, %v4946, %v4954
      %v4957 = vshrl.u32 %v4684, 16
      %v4959 = vrot.slane %v4957, 4
      %v4960 = vshll.u32 %v4684, 16
      %v4962 = vrot.slane %v4960, 5
      %v4963 = vor.u32 %v4959, %v4962
      %v4965 = vshrl.u32 %v4780, 16
      %v4967 = vrot.slane %v4965, 4
      %v4968 = vshll.u32 %v4780, 16
      %v4970 = vrot.slane %v4968, 5
      %v4971 = vor.u32 %v4967, %v4970
      %v4972 = vsel %vm958, %v4963, %v4971
      %v4974 = vshrl.u32 %v4685, 16
      %v4976 = vrot.slane %v4974, 4
      %v4977 = vshll.u32 %v4685, 16
      %v4979 = vrot.slane %v4977, 5
      %v4980 = vor.u32 %v4976, %v4979
      %v4982 = vshrl.u32 %v4781, 16
      %v4984 = vrot.slane %v4982, 4
      %v4985 = vshll.u32 %v4781, 16
      %v4987 = vrot.slane %v4985, 5
      %v4988 = vor.u32 %v4984, %v4987
      %v4989 = vsel %vm958, %v4980, %v4988
      %v4991 = vshrl.u32 %v4686, 16
      %v4993 = vrot.slane %v4991, 4
      %v4994 = vshll.u32 %v4686, 16
      %v4996 = vrot.slane %v4994, 5
      %v4997 = vor.u32 %v4993, %v4996
      %v4999 = vshrl.u32 %v4782, 16
      %v5001 = vrot.slane %v4999, 4
      %v5002 = vshll.u32 %v4782, 16
      %v5004 = vrot.slane %v5002, 5
      %v5005 = vor.u32 %v5001, %v5004
      %v5006 = vsel %vm958, %v4997, %v5005
      %v5008 = vshrl.u32 %v4687, 16
      %v5010 = vrot.slane %v5008, 4
      %v5011 = vshll.u32 %v4687, 16
      %v5013 = vrot.slane %v5011, 5
      %v5014 = vor.u32 %v5010, %v5013
      %v5016 = vshrl.u32 %v4783, 16
      %v5018 = vrot.slane %v5016, 4
      %v5019 = vshll.u32 %v4783, 16
      %v5021 = vrot.slane %v5019, 5
      %v5022 = vor.u32 %v5018, %v5021
      %v5023 = vsel %vm958, %v5014, %v5022
      %v5025 = vshrl.u32 %v4688, 16
      %v5027 = vrot.slane %v5025, 4
      %v5028 = vshll.u32 %v4688, 16
      %v5030 = vrot.slane %v5028, 5
      %v5031 = vor.u32 %v5027, %v5030
      %v5033 = vshrl.u32 %v4784, 16
      %v5035 = vrot.slane %v5033, 4
      %v5036 = vshll.u32 %v4784, 16
      %v5038 = vrot.slane %v5036, 5
      %v5039 = vor.u32 %v5035, %v5038
      %v5040 = vsel %vm958, %v5031, %v5039
      %v5042 = vshrl.u32 %v4689, 16
      %v5044 = vrot.slane %v5042, 4
      %v5045 = vshll.u32 %v4689, 16
      %v5047 = vrot.slane %v5045, 5
      %v5048 = vor.u32 %v5044, %v5047
      %v5050 = vshrl.u32 %v4785, 16
      %v5052 = vrot.slane %v5050, 4
      %v5053 = vshll.u32 %v4785, 16
      %v5055 = vrot.slane %v5053, 5
      %v5056 = vor.u32 %v5052, %v5055
      %v5057 = vsel %vm958, %v5048, %v5056
      %s5058 = scalar_lea.vmem [#allocation3], 32
      %v5059 = vld [vmem:[%s5058] sm:$0xf8]
      %v5060 = vld [vmem:[%s5058 + $0x8] sm:$0xf]
      %v5061 = vld [vmem:[%s5058 + $0x10] sm:$0xf8]
      %v5062 = vld [vmem:[%s5058 + $0x18] sm:$0xf]
      %v5063 = vld [vmem:[%s5058 + $0x20] sm:$0xf8]
      %v5064 = vld [vmem:[%s5058 + $0x28] sm:$0xf]
      %v5065 = vld [vmem:[%s5058 + $0x30] sm:$0xf8]
      %v5066 = vld [vmem:[%s5058 + $0x38] sm:$0xf]
      %v5067 = vld [vmem:[%s5058 + $0x40] sm:$0xf8]
      %v5068 = vld [vmem:[%s5058 + $0x48] sm:$0xf]
      %v5069 = vld [vmem:[%s5058 + $0x50] sm:$0xf8]
      %v5070 = vld [vmem:[%s5058 + $0x58] sm:$0xf]
      %v5071 = vld [vmem:[%s5058 + $0x60] sm:$0xf8]
      %v5072 = vld [vmem:[%s5058 + $0x68] sm:$0xf]
      %v5073 = vld [vmem:[%s5058 + $0x70] sm:$0xf8]
      %v5074 = vld [vmem:[%s5058 + $0x78] sm:$0xf]
      %v5075 = vld [vmem:[%s5058 + $0x80] sm:$0xf8]
      %v5076 = vld [vmem:[%s5058 + $0x88] sm:$0xf]
      %v5077 = vld [vmem:[%s5058 + $0x90] sm:$0xf8]
      %v5078 = vld [vmem:[%s5058 + $0x98] sm:$0xf]
      %v5079 = vld [vmem:[%s5058 + $0xa0] sm:$0xf8]
      %v5080 = vld [vmem:[%s5058 + $0xa8] sm:$0xf]
      %v5081 = vld [vmem:[%s5058 + $0xb0] sm:$0xf8]
      %v5082 = vld [vmem:[%s5058 + $0xb8] sm:$0xf]
      %v5083 = vld [vmem:[%s5058 + $0xc0] sm:$0xf8]
      %v5084 = vld [vmem:[%s5058 + $0xc8] sm:$0xf]
      %v5085 = vld [vmem:[%s5058 + $0xd0] sm:$0xf8]
      %v5086 = vld [vmem:[%s5058 + $0xd8] sm:$0xf]
      %v5087 = vld [vmem:[%s5058 + $0xe0] sm:$0xf8]
      %v5088 = vld [vmem:[%s5058 + $0xe8] sm:$0xf]
      %v5089 = vld [vmem:[%s5058 + $0xf0] sm:$0xf8]
      %v5090 = vld [vmem:[%s5058 + $0xf8] sm:$0xf]
      %v5092 = vshrl.u32 %v5059, 16
      %v5094 = vrot.slane %v5092, 3
      %v5095 = vshll.u32 %v5059, 16
      %v5097 = vrot.slane %v5095, 4
      %v5098 = vor.u32 %v5094, %v5097
      %v5100 = vshrl.u32 %v5060, 16
      %v5102 = vrot.slane %v5100, 3
      %v5103 = vshll.u32 %v5060, 16
      %v5105 = vrot.slane %v5103, 4
      %v5106 = vor.u32 %v5102, %v5105
      %v5107 = vsel %vm322, %v5098, %v5106
      %v5109 = vshrl.u32 %v5061, 16
      %v5111 = vrot.slane %v5109, 3
      %v5112 = vshll.u32 %v5061, 16
      %v5114 = vrot.slane %v5112, 4
      %v5115 = vor.u32 %v5111, %v5114
      %v5117 = vshrl.u32 %v5062, 16
      %v5119 = vrot.slane %v5117, 3
      %v5120 = vshll.u32 %v5062, 16
      %v5122 = vrot.slane %v5120, 4
      %v5123 = vor.u32 %v5119, %v5122
      %v5124 = vsel %vm322, %v5115, %v5123
      %v5126 = vshrl.u32 %v5063, 16
      %v5128 = vrot.slane %v5126, 3
      %v5129 = vshll.u32 %v5063, 16
      %v5131 = vrot.slane %v5129, 4
      %v5132 = vor.u32 %v5128, %v5131
      %v5134 = vshrl.u32 %v5064, 16
      %v5136 = vrot.slane %v5134, 3
      %v5137 = vshll.u32 %v5064, 16
      %v5139 = vrot.slane %v5137, 4
      %v5140 = vor.u32 %v5136, %v5139
      %v5141 = vsel %vm322, %v5132, %v5140
      %v5143 = vshrl.u32 %v5065, 16
      %v5145 = vrot.slane %v5143, 3
      %v5146 = vshll.u32 %v5065, 16
      %v5148 = vrot.slane %v5146, 4
      %v5149 = vor.u32 %v5145, %v5148
      %v5151 = vshrl.u32 %v5066, 16
      %v5153 = vrot.slane %v5151, 3
      %v5154 = vshll.u32 %v5066, 16
      %v5156 = vrot.slane %v5154, 4
      %v5157 = vor.u32 %v5153, %v5156
      %v5158 = vsel %vm322, %v5149, %v5157
      %v5160 = vshrl.u32 %v5067, 16
      %v5162 = vrot.slane %v5160, 3
      %v5163 = vshll.u32 %v5067, 16
      %v5165 = vrot.slane %v5163, 4
      %v5166 = vor.u32 %v5162, %v5165
      %v5168 = vshrl.u32 %v5068, 16
      %v5170 = vrot.slane %v5168, 3
      %v5171 = vshll.u32 %v5068, 16
      %v5173 = vrot.slane %v5171, 4
      %v5174 = vor.u32 %v5170, %v5173
      %v5175 = vsel %vm322, %v5166, %v5174
      %v5177 = vshrl.u32 %v5069, 16
      %v5179 = vrot.slane %v5177, 3
      %v5180 = vshll.u32 %v5069, 16
      %v5182 = vrot.slane %v5180, 4
      %v5183 = vor.u32 %v5179, %v5182
      %v5185 = vshrl.u32 %v5070, 16
      %v5187 = vrot.slane %v5185, 3
      %v5188 = vshll.u32 %v5070, 16
      %v5190 = vrot.slane %v5188, 4
      %v5191 = vor.u32 %v5187, %v5190
      %v5192 = vsel %vm322, %v5183, %v5191
      %v5194 = vshrl.u32 %v5071, 16
      %v5196 = vrot.slane %v5194, 3
      %v5197 = vshll.u32 %v5071, 16
      %v5199 = vrot.slane %v5197, 4
      %v5200 = vor.u32 %v5196, %v5199
      %v5202 = vshrl.u32 %v5072, 16
      %v5204 = vrot.slane %v5202, 3
      %v5205 = vshll.u32 %v5072, 16
      %v5207 = vrot.slane %v5205, 4
      %v5208 = vor.u32 %v5204, %v5207
      %v5209 = vsel %vm322, %v5200, %v5208
      %v5211 = vshrl.u32 %v5073, 16
      %v5213 = vrot.slane %v5211, 3
      %v5214 = vshll.u32 %v5073, 16
      %v5216 = vrot.slane %v5214, 4
      %v5217 = vor.u32 %v5213, %v5216
      %v5219 = vshrl.u32 %v5074, 16
      %v5221 = vrot.slane %v5219, 3
      %v5222 = vshll.u32 %v5074, 16
      %v5224 = vrot.slane %v5222, 4
      %v5225 = vor.u32 %v5221, %v5224
      %v5226 = vsel %vm322, %v5217, %v5225
      %v5228 = vshrl.u32 %v5075, 16
      %v5230 = vrot.slane %v5228, 3
      %v5231 = vshll.u32 %v5075, 16
      %v5233 = vrot.slane %v5231, 4
      %v5234 = vor.u32 %v5230, %v5233
      %v5236 = vshrl.u32 %v5076, 16
      %v5238 = vrot.slane %v5236, 3
      %v5239 = vshll.u32 %v5076, 16
      %v5241 = vrot.slane %v5239, 4
      %v5242 = vor.u32 %v5238, %v5241
      %v5243 = vsel %vm322, %v5234, %v5242
      %v5245 = vshrl.u32 %v5077, 16
      %v5247 = vrot.slane %v5245, 3
      %v5248 = vshll.u32 %v5077, 16
      %v5250 = vrot.slane %v5248, 4
      %v5251 = vor.u32 %v5247, %v5250
      %v5253 = vshrl.u32 %v5078, 16
      %v5255 = vrot.slane %v5253, 3
      %v5256 = vshll.u32 %v5078, 16
      %v5258 = vrot.slane %v5256, 4
      %v5259 = vor.u32 %v5255, %v5258
      %v5260 = vsel %vm322, %v5251, %v5259
      %v5262 = vshrl.u32 %v5079, 16
      %v5264 = vrot.slane %v5262, 3
      %v5265 = vshll.u32 %v5079, 16
      %v5267 = vrot.slane %v5265, 4
      %v5268 = vor.u32 %v5264, %v5267
      %v5270 = vshrl.u32 %v5080, 16
      %v5272 = vrot.slane %v5270, 3
      %v5273 = vshll.u32 %v5080, 16
      %v5275 = vrot.slane %v5273, 4
      %v5276 = vor.u32 %v5272, %v5275
      %v5277 = vsel %vm322, %v5268, %v5276
      %v5279 = vshrl.u32 %v5081, 16
      %v5281 = vrot.slane %v5279, 3
      %v5282 = vshll.u32 %v5081, 16
      %v5284 = vrot.slane %v5282, 4
      %v5285 = vor.u32 %v5281, %v5284
      %v5287 = vshrl.u32 %v5082, 16
      %v5289 = vrot.slane %v5287, 3
      %v5290 = vshll.u32 %v5082, 16
      %v5292 = vrot.slane %v5290, 4
      %v5293 = vor.u32 %v5289, %v5292
      %v5294 = vsel %vm322, %v5285, %v5293
      %v5296 = vshrl.u32 %v5083, 16
      %v5298 = vrot.slane %v5296, 3
      %v5299 = vshll.u32 %v5083, 16
      %v5301 = vrot.slane %v5299, 4
      %v5302 = vor.u32 %v5298, %v5301
      %v5304 = vshrl.u32 %v5084, 16
      %v5306 = vrot.slane %v5304, 3
      %v5307 = vshll.u32 %v5084, 16
      %v5309 = vrot.slane %v5307, 4
      %v5310 = vor.u32 %v5306, %v5309
      %v5311 = vsel %vm322, %v5302, %v5310
      %v5313 = vshrl.u32 %v5085, 16
      %v5315 = vrot.slane %v5313, 3
      %v5316 = vshll.u32 %v5085, 16
      %v5318 = vrot.slane %v5316, 4
      %v5319 = vor.u32 %v5315, %v5318
      %v5321 = vshrl.u32 %v5086, 16
      %v5323 = vrot.slane %v5321, 3
      %v5324 = vshll.u32 %v5086, 16
      %v5326 = vrot.slane %v5324, 4
      %v5327 = vor.u32 %v5323, %v5326
      %v5328 = vsel %vm322, %v5319, %v5327
      %v5330 = vshrl.u32 %v5087, 16
      %v5332 = vrot.slane %v5330, 3
      %v5333 = vshll.u32 %v5087, 16
      %v5335 = vrot.slane %v5333, 4
      %v5336 = vor.u32 %v5332, %v5335
      %v5338 = vshrl.u32 %v5088, 16
      %v5340 = vrot.slane %v5338, 3
      %v5341 = vshll.u32 %v5088, 16
      %v5343 = vrot.slane %v5341, 4
      %v5344 = vor.u32 %v5340, %v5343
      %v5345 = vsel %vm322, %v5336, %v5344
      %v5347 = vshrl.u32 %v5089, 16
      %v5349 = vrot.slane %v5347, 3
      %v5350 = vshll.u32 %v5089, 16
      %v5352 = vrot.slane %v5350, 4
      %v5353 = vor.u32 %v5349, %v5352
      %v5355 = vshrl.u32 %v5090, 16
      %v5357 = vrot.slane %v5355, 3
      %v5358 = vshll.u32 %v5090, 16
      %v5360 = vrot.slane %v5358, 4
      %v5361 = vor.u32 %v5357, %v5360
      %v5362 = vsel %vm322, %v5353, %v5361
      %v5363 = vld [vmem:[%s5058] sm:$0xf0]
      %v5364 = vld [vmem:[%s5058 + $0x10] sm:$0xf0]
      %v5365 = vld [vmem:[%s5058 + $0x20] sm:$0xf0]
      %v5366 = vld [vmem:[%s5058 + $0x30] sm:$0xf0]
      %v5367 = vld [vmem:[%s5058 + $0x40] sm:$0xf0]
      %v5368 = vld [vmem:[%s5058 + $0x50] sm:$0xf0]
      %v5369 = vld [vmem:[%s5058 + $0x60] sm:$0xf0]
      %v5370 = vld [vmem:[%s5058 + $0x70] sm:$0xf0]
      %v5371 = vld [vmem:[%s5058 + $0x80] sm:$0xf0]
      %v5372 = vld [vmem:[%s5058 + $0x90] sm:$0xf0]
      %v5373 = vld [vmem:[%s5058 + $0xa0] sm:$0xf0]
      %v5374 = vld [vmem:[%s5058 + $0xb0] sm:$0xf0]
      %v5375 = vld [vmem:[%s5058 + $0xc0] sm:$0xf0]
      %v5376 = vld [vmem:[%s5058 + $0xd0] sm:$0xf0]
      %v5377 = vld [vmem:[%s5058 + $0xe0] sm:$0xf0]
      %v5378 = vld [vmem:[%s5058 + $0xf0] sm:$0xf0]
      %v5411 = vrot.slane %v5363, 4
      %v5412 = vrot.slane %v5060, 4
      %v5413 = vsel %vm893, %v5411, %v5412
      %v5414 = vrot.slane %v5364, 4
      %v5415 = vrot.slane %v5062, 4
      %v5416 = vsel %vm893, %v5414, %v5415
      %v5417 = vrot.slane %v5365, 4
      %v5418 = vrot.slane %v5064, 4
      %v5419 = vsel %vm893, %v5417, %v5418
      %v5420 = vrot.slane %v5366, 4
      %v5421 = vrot.slane %v5066, 4
      %v5422 = vsel %vm893, %v5420, %v5421
      %v5423 = vrot.slane %v5367, 4
      %v5424 = vrot.slane %v5068, 4
      %v5425 = vsel %vm893, %v5423, %v5424
      %v5426 = vrot.slane %v5368, 4
      %v5427 = vrot.slane %v5070, 4
      %v5428 = vsel %vm893, %v5426, %v5427
      %v5429 = vrot.slane %v5369, 4
      %v5430 = vrot.slane %v5072, 4
      %v5431 = vsel %vm893, %v5429, %v5430
      %v5432 = vrot.slane %v5370, 4
      %v5433 = vrot.slane %v5074, 4
      %v5434 = vsel %vm893, %v5432, %v5433
      %v5435 = vrot.slane %v5371, 4
      %v5436 = vrot.slane %v5076, 4
      %v5437 = vsel %vm893, %v5435, %v5436
      %v5438 = vrot.slane %v5372, 4
      %v5439 = vrot.slane %v5078, 4
      %v5440 = vsel %vm893, %v5438, %v5439
      %v5441 = vrot.slane %v5373, 4
      %v5442 = vrot.slane %v5080, 4
      %v5443 = vsel %vm893, %v5441, %v5442
      %v5444 = vrot.slane %v5374, 4
      %v5445 = vrot.slane %v5082, 4
      %v5446 = vsel %vm893, %v5444, %v5445
      %v5447 = vrot.slane %v5375, 4
      %v5448 = vrot.slane %v5084, 4
      %v5449 = vsel %vm893, %v5447, %v5448
      %v5450 = vrot.slane %v5376, 4
      %v5451 = vrot.slane %v5086, 4
      %v5452 = vsel %vm893, %v5450, %v5451
      %v5453 = vrot.slane %v5377, 4
      %v5454 = vrot.slane %v5088, 4
      %v5455 = vsel %vm893, %v5453, %v5454
      %v5456 = vrot.slane %v5378, 4
      %v5457 = vrot.slane %v5090, 4
      %v5458 = vsel %vm893, %v5456, %v5457
      %v5459 = vld [vmem:[%s5058 + $0x8] sm:$0x1f]
      %v5460 = vld [vmem:[%s5058 + $0x18] sm:$0x1f]
      %v5461 = vld [vmem:[%s5058 + $0x28] sm:$0x1f]
      %v5462 = vld [vmem:[%s5058 + $0x38] sm:$0x1f]
      %v5463 = vld [vmem:[%s5058 + $0x48] sm:$0x1f]
      %v5464 = vld [vmem:[%s5058 + $0x58] sm:$0x1f]
      %v5465 = vld [vmem:[%s5058 + $0x68] sm:$0x1f]
      %v5466 = vld [vmem:[%s5058 + $0x78] sm:$0x1f]
      %v5467 = vld [vmem:[%s5058 + $0x88] sm:$0x1f]
      %v5468 = vld [vmem:[%s5058 + $0x98] sm:$0x1f]
      %v5469 = vld [vmem:[%s5058 + $0xa8] sm:$0x1f]
      %v5470 = vld [vmem:[%s5058 + $0xb8] sm:$0x1f]
      %v5471 = vld [vmem:[%s5058 + $0xc8] sm:$0x1f]
      %v5472 = vld [vmem:[%s5058 + $0xd8] sm:$0x1f]
      %v5473 = vld [vmem:[%s5058 + $0xe8] sm:$0x1f]
      %v5474 = vld [vmem:[%s5058 + $0xf8] sm:$0x1f]
      %v5476 = vshrl.u32 %v5363, 16
      %v5478 = vrot.slane %v5476, 4
      %v5479 = vshll.u32 %v5363, 16
      %v5481 = vrot.slane %v5479, 5
      %v5482 = vor.u32 %v5478, %v5481
      %v5484 = vshrl.u32 %v5459, 16
      %v5486 = vrot.slane %v5484, 4
      %v5487 = vshll.u32 %v5459, 16
      %v5489 = vrot.slane %v5487, 5
      %v5490 = vor.u32 %v5486, %v5489
      %v5491 = vsel %vm958, %v5482, %v5490
      %v5493 = vshrl.u32 %v5364, 16
      %v5495 = vrot.slane %v5493, 4
      %v5496 = vshll.u32 %v5364, 16
      %v5498 = vrot.slane %v5496, 5
      %v5499 = vor.u32 %v5495, %v5498
      %v5501 = vshrl.u32 %v5460, 16
      %v5503 = vrot.slane %v5501, 4
      %v5504 = vshll.u32 %v5460, 16
      %v5506 = vrot.slane %v5504, 5
      %v5507 = vor.u32 %v5503, %v5506
      %v5508 = vsel %vm958, %v5499, %v5507
      %v5510 = vshrl.u32 %v5365, 16
      %v5512 = vrot.slane %v5510, 4
      %v5513 = vshll.u32 %v5365, 16
      %v5515 = vrot.slane %v5513, 5
      %v5516 = vor.u32 %v5512, %v5515
      %v5518 = vshrl.u32 %v5461, 16
      %v5520 = vrot.slane %v5518, 4
      %v5521 = vshll.u32 %v5461, 16
      %v5523 = vrot.slane %v5521, 5
      %v5524 = vor.u32 %v5520, %v5523
      %v5525 = vsel %vm958, %v5516, %v5524
      %v5527 = vshrl.u32 %v5366, 16
      %v5529 = vrot.slane %v5527, 4
      %v5530 = vshll.u32 %v5366, 16
      %v5532 = vrot.slane %v5530, 5
      %v5533 = vor.u32 %v5529, %v5532
      %v5535 = vshrl.u32 %v5462, 16
      %v5537 = vrot.slane %v5535, 4
      %v5538 = vshll.u32 %v5462, 16
      %v5540 = vrot.slane %v5538, 5
      %v5541 = vor.u32 %v5537, %v5540
      %v5542 = vsel %vm958, %v5533, %v5541
      %v5544 = vshrl.u32 %v5367, 16
      %v5546 = vrot.slane %v5544, 4
      %v5547 = vshll.u32 %v5367, 16
      %v5549 = vrot.slane %v5547, 5
      %v5550 = vor.u32 %v5546, %v5549
      %v5552 = vshrl.u32 %v5463, 16
      %v5554 = vrot.slane %v5552, 4
      %v5555 = vshll.u32 %v5463, 16
      %v5557 = vrot.slane %v5555, 5
      %v5558 = vor.u32 %v5554, %v5557
      %v5559 = vsel %vm958, %v5550, %v5558
      %v5561 = vshrl.u32 %v5368, 16
      %v5563 = vrot.slane %v5561, 4
      %v5564 = vshll.u32 %v5368, 16
      %v5566 = vrot.slane %v5564, 5
      %v5567 = vor.u32 %v5563, %v5566
      %v5569 = vshrl.u32 %v5464, 16
      %v5571 = vrot.slane %v5569, 4
      %v5572 = vshll.u32 %v5464, 16
      %v5574 = vrot.slane %v5572, 5
      %v5575 = vor.u32 %v5571, %v5574
      %v5576 = vsel %vm958, %v5567, %v5575
      %v5578 = vshrl.u32 %v5369, 16
      %v5580 = vrot.slane %v5578, 4
      %v5581 = vshll.u32 %v5369, 16
      %v5583 = vrot.slane %v5581, 5
      %v5584 = vor.u32 %v5580, %v5583
      %v5586 = vshrl.u32 %v5465, 16
      %v5588 = vrot.slane %v5586, 4
      %v5589 = vshll.u32 %v5465, 16
      %v5591 = vrot.slane %v5589, 5
      %v5592 = vor.u32 %v5588, %v5591
      %v5593 = vsel %vm958, %v5584, %v5592
      %v5595 = vshrl.u32 %v5370, 16
      %v5597 = vrot.slane %v5595, 4
      %v5598 = vshll.u32 %v5370, 16
      %v5600 = vrot.slane %v5598, 5
      %v5601 = vor.u32 %v5597, %v5600
      %v5603 = vshrl.u32 %v5466, 16
      %v5605 = vrot.slane %v5603, 4
      %v5606 = vshll.u32 %v5466, 16
      %v5608 = vrot.slane %v5606, 5
      %v5609 = vor.u32 %v5605, %v5608
      %v5610 = vsel %vm958, %v5601, %v5609
      %v5612 = vshrl.u32 %v5371, 16
      %v5614 = vrot.slane %v5612, 4
      %v5615 = vshll.u32 %v5371, 16
      %v5617 = vrot.slane %v5615, 5
      %v5618 = vor.u32 %v5614, %v5617
      %v5620 = vshrl.u32 %v5467, 16
      %v5622 = vrot.slane %v5620, 4
      %v5623 = vshll.u32 %v5467, 16
      %v5625 = vrot.slane %v5623, 5
      %v5626 = vor.u32 %v5622, %v5625
      %v5627 = vsel %vm958, %v5618, %v5626
      %v5629 = vshrl.u32 %v5372, 16
      %v5631 = vrot.slane %v5629, 4
      %v5632 = vshll.u32 %v5372, 16
      %v5634 = vrot.slane %v5632, 5
      %v5635 = vor.u32 %v5631, %v5634
      %v5637 = vshrl.u32 %v5468, 16
      %v5639 = vrot.slane %v5637, 4
      %v5640 = vshll.u32 %v5468, 16
      %v5642 = vrot.slane %v5640, 5
      %v5643 = vor.u32 %v5639, %v5642
      %v5644 = vsel %vm958, %v5635, %v5643
      %v5646 = vshrl.u32 %v5373, 16
      %v5648 = vrot.slane %v5646, 4
      %v5649 = vshll.u32 %v5373, 16
      %v5651 = vrot.slane %v5649, 5
      %v5652 = vor.u32 %v5648, %v5651
      %v5654 = vshrl.u32 %v5469, 16
      %v5656 = vrot.slane %v5654, 4
      %v5657 = vshll.u32 %v5469, 16
      %v5659 = vrot.slane %v5657, 5
      %v5660 = vor.u32 %v5656, %v5659
      %v5661 = vsel %vm958, %v5652, %v5660
      %v5663 = vshrl.u32 %v5374, 16
      %v5665 = vrot.slane %v5663, 4
      %v5666 = vshll.u32 %v5374, 16
      %v5668 = vrot.slane %v5666, 5
      %v5669 = vor.u32 %v5665, %v5668
      %v5671 = vshrl.u32 %v5470, 16
      %v5673 = vrot.slane %v5671, 4
      %v5674 = vshll.u32 %v5470, 16
      %v5676 = vrot.slane %v5674, 5
      %v5677 = vor.u32 %v5673, %v5676
      %v5678 = vsel %vm958, %v5669, %v5677
      %v5680 = vshrl.u32 %v5375, 16
      %v5682 = vrot.slane %v5680, 4
      %v5683 = vshll.u32 %v5375, 16
      %v5685 = vrot.slane %v5683, 5
      %v5686 = vor.u32 %v5682, %v5685
      %v5688 = vshrl.u32 %v5471, 16
      %v5690 = vrot.slane %v5688, 4
      %v5691 = vshll.u32 %v5471, 16
      %v5693 = vrot.slane %v5691, 5
      %v5694 = vor.u32 %v5690, %v5693
      %v5695 = vsel %vm958, %v5686, %v5694
      %v5697 = vshrl.u32 %v5376, 16
      %v5699 = vrot.slane %v5697, 4
      %v5700 = vshll.u32 %v5376, 16
      %v5702 = vrot.slane %v5700, 5
      %v5703 = vor.u32 %v5699, %v5702
      %v5705 = vshrl.u32 %v5472, 16
      %v5707 = vrot.slane %v5705, 4
      %v5708 = vshll.u32 %v5472, 16
      %v5710 = vrot.slane %v5708, 5
      %v5711 = vor.u32 %v5707, %v5710
      %v5712 = vsel %vm958, %v5703, %v5711
      %v5714 = vshrl.u32 %v5377, 16
      %v5716 = vrot.slane %v5714, 4
      %v5717 = vshll.u32 %v5377, 16
      %v5719 = vrot.slane %v5717, 5
      %v5720 = vor.u32 %v5716, %v5719
      %v5722 = vshrl.u32 %v5473, 16
      %v5724 = vrot.slane %v5722, 4
      %v5725 = vshll.u32 %v5473, 16
      %v5727 = vrot.slane %v5725, 5
      %v5728 = vor.u32 %v5724, %v5727
      %v5729 = vsel %vm958, %v5720, %v5728
      %v5731 = vshrl.u32 %v5378, 16
      %v5733 = vrot.slane %v5731, 4
      %v5734 = vshll.u32 %v5378, 16
      %v5736 = vrot.slane %v5734, 5
      %v5737 = vor.u32 %v5733, %v5736
      %v5739 = vshrl.u32 %v5474, 16
      %v5741 = vrot.slane %v5739, 4
      %v5742 = vshll.u32 %v5474, 16
      %v5744 = vrot.slane %v5742, 5
      %v5745 = vor.u32 %v5741, %v5744
      %v5746 = vsel %vm958, %v5737, %v5745
      %5747 = vrot.lane.b32.xlu0 %v4036, 8
      %v5748 = vpop.permute.xlu0 %5747
      %5749 = vrot.lane.b32.xlu0 %v4039, 8
      %v5750 = vpop.permute.xlu0 %5749
      %5751 = vrot.lane.b32.xlu0 %v4042, 8
      %v5752 = vpop.permute.xlu0 %5751
      %5753 = vrot.lane.b32.xlu0 %v4045, 8
      %v5754 = vpop.permute.xlu0 %5753
      %5755 = vrot.lane.b32.xlu0 %v4048, 8
      %v5756 = vpop.permute.xlu0 %5755
      %5757 = vrot.lane.b32.xlu0 %v4051, 8
      %v5758 = vpop.permute.xlu0 %5757
      %5759 = vrot.lane.b32.xlu0 %v4054, 8
      %v5760 = vpop.permute.xlu0 %5759
      %5761 = vrot.lane.b32.xlu0 %v4057, 8
      %v5762 = vpop.permute.xlu0 %5761
      %5763 = vrot.lane.b32.xlu0 %v4060, 8
      %v5764 = vpop.permute.xlu0 %5763
      %5765 = vrot.lane.b32.xlu0 %v4063, 8
      %v5766 = vpop.permute.xlu0 %5765
      %5767 = vrot.lane.b32.xlu0 %v4066, 8
      %v5768 = vpop.permute.xlu0 %5767
      %5769 = vrot.lane.b32.xlu0 %v4069, 8
      %v5770 = vpop.permute.xlu0 %5769
      %5771 = vrot.lane.b32.xlu0 %v4072, 8
      %v5772 = vpop.permute.xlu0 %5771
      %5773 = vrot.lane.b32.xlu0 %v4075, 8
      %v5774 = vpop.permute.xlu0 %5773
      %5775 = vrot.lane.b32.xlu0 %v4078, 8
      %v5776 = vpop.permute.xlu0 %5775
      %5777 = vrot.lane.b32.xlu0 %v4081, 8
      %v5778 = vpop.permute.xlu0 %5777
      %5779 = vrot.lane.b32.xlu0 %v4114, 16
      %v5780 = vpop.permute.xlu0 %5779
      %5781 = vrot.lane.b32.xlu0 %v4131, 16
      %v5782 = vpop.permute.xlu0 %5781
      %5783 = vrot.lane.b32.xlu0 %v4148, 16
      %v5784 = vpop.permute.xlu0 %5783
      %5785 = vrot.lane.b32.xlu0 %v4165, 16
      %v5786 = vpop.permute.xlu0 %5785
      %5787 = vrot.lane.b32.xlu0 %v4182, 16
      %v5788 = vpop.permute.xlu0 %5787
      %5789 = vrot.lane.b32.xlu0 %v4199, 16
      %v5790 = vpop.permute.xlu0 %5789
      %5791 = vrot.lane.b32.xlu0 %v4216, 16
      %v5792 = vpop.permute.xlu0 %5791
      %5793 = vrot.lane.b32.xlu0 %v4233, 16
      %v5794 = vpop.permute.xlu0 %5793
      %5795 = vrot.lane.b32.xlu0 %v4250, 16
      %v5796 = vpop.permute.xlu0 %5795
      %5797 = vrot.lane.b32.xlu0 %v4267, 16
      %v5798 = vpop.permute.xlu0 %5797
      %5799 = vrot.lane.b32.xlu0 %v4284, 16
      %v5800 = vpop.permute.xlu0 %5799
      %5801 = vrot.lane.b32.xlu0 %v4301, 16
      %v5802 = vpop.permute.xlu0 %5801
      %5803 = vrot.lane.b32.xlu0 %v4318, 16
      %v5804 = vpop.permute.xlu0 %5803
      %5805 = vrot.lane.b32.xlu0 %v4335, 16
      %v5806 = vpop.permute.xlu0 %5805
      %5807 = vrot.lane.b32.xlu0 %v4352, 16
      %v5808 = vpop.permute.xlu0 %5807
      %5809 = vrot.lane.b32.xlu0 %v4369, 16
      %v5810 = vpop.permute.xlu0 %5809
      %5811 = vrot.lane.b32.xlu0 %v4418, 24
      %v5812 = vpop.permute.xlu0 %5811
      %5813 = vrot.lane.b32.xlu0 %v4435, 24
      %v5814 = vpop.permute.xlu0 %5813
      %5815 = vrot.lane.b32.xlu0 %v4452, 24
      %v5816 = vpop.permute.xlu0 %5815
      %5817 = vrot.lane.b32.xlu0 %v4469, 24
      %v5818 = vpop.permute.xlu0 %5817
      %5819 = vrot.lane.b32.xlu0 %v4486, 24
      %v5820 = vpop.permute.xlu0 %5819
      %5821 = vrot.lane.b32.xlu0 %v4503, 24
      %v5822 = vpop.permute.xlu0 %5821
      %5823 = vrot.lane.b32.xlu0 %v4520, 24
      %v5824 = vpop.permute.xlu0 %5823
      %5825 = vrot.lane.b32.xlu0 %v4537, 24
      %v5826 = vpop.permute.xlu0 %5825
      %5827 = vrot.lane.b32.xlu0 %v4554, 24
      %v5828 = vpop.permute.xlu0 %5827
      %5829 = vrot.lane.b32.xlu0 %v4571, 24
      %v5830 = vpop.permute.xlu0 %5829
      %5831 = vrot.lane.b32.xlu0 %v4588, 24
      %v5832 = vpop.permute.xlu0 %5831
      %5833 = vrot.lane.b32.xlu0 %v4605, 24
      %v5834 = vpop.permute.xlu0 %5833
      %5835 = vrot.lane.b32.xlu0 %v4622, 24
      %v5836 = vpop.permute.xlu0 %5835
      %5837 = vrot.lane.b32.xlu0 %v4639, 24
      %v5838 = vpop.permute.xlu0 %5837
      %5839 = vrot.lane.b32.xlu0 %v4656, 24
      %v5840 = vpop.permute.xlu0 %5839
      %5841 = vrot.lane.b32.xlu0 %v4673, 24
      %v5842 = vpop.permute.xlu0 %5841
      %5843 = vrot.lane.b32.xlu0 %v4724, 32
      %v5844 = vpop.permute.xlu0 %5843
      %5845 = vrot.lane.b32.xlu0 %v4727, 32
      %v5846 = vpop.permute.xlu0 %5845
      %5847 = vrot.lane.b32.xlu0 %v4730, 32
      %v5848 = vpop.permute.xlu0 %5847
      %5849 = vrot.lane.b32.xlu0 %v4733, 32
      %v5850 = vpop.permute.xlu0 %5849
      %5851 = vrot.lane.b32.xlu0 %v4736, 32
      %v5852 = vpop.permute.xlu0 %5851
      %5853 = vrot.lane.b32.xlu0 %v4739, 32
      %v5854 = vpop.permute.xlu0 %5853
      %5855 = vrot.lane.b32.xlu0 %v4742, 32
      %v5856 = vpop.permute.xlu0 %5855
      %5857 = vrot.lane.b32.xlu0 %v4745, 32
      %v5858 = vpop.permute.xlu0 %5857
      %5859 = vrot.lane.b32.xlu0 %v4748, 32
      %v5860 = vpop.permute.xlu0 %5859
      %5861 = vrot.lane.b32.xlu0 %v4751, 32
      %v5862 = vpop.permute.xlu0 %5861
      %5863 = vrot.lane.b32.xlu0 %v4754, 32
      %v5864 = vpop.permute.xlu0 %5863
      %5865 = vrot.lane.b32.xlu0 %v4757, 32
      %v5866 = vpop.permute.xlu0 %5865
      %5867 = vrot.lane.b32.xlu0 %v4760, 32
      %v5868 = vpop.permute.xlu0 %5867
      %5869 = vrot.lane.b32.xlu0 %v4763, 32
      %v5870 = vpop.permute.xlu0 %5869
      %5871 = vrot.lane.b32.xlu0 %v4766, 32
      %v5872 = vpop.permute.xlu0 %5871
      %5873 = vrot.lane.b32.xlu0 %v4769, 32
      %v5874 = vpop.permute.xlu0 %5873
      %5875 = vrot.lane.b32.xlu0 %v4802, 40
      %v5876 = vpop.permute.xlu0 %5875
      %5877 = vrot.lane.b32.xlu0 %v4819, 40
      %v5878 = vpop.permute.xlu0 %5877
      %5879 = vrot.lane.b32.xlu0 %v4836, 40
      %v5880 = vpop.permute.xlu0 %5879
      %5881 = vrot.lane.b32.xlu0 %v4853, 40
      %v5882 = vpop.permute.xlu0 %5881
      %5883 = vrot.lane.b32.xlu0 %v4870, 40
      %v5884 = vpop.permute.xlu0 %5883
      %5885 = vrot.lane.b32.xlu0 %v4887, 40
      %v5886 = vpop.permute.xlu0 %5885
      %5887 = vrot.lane.b32.xlu0 %v4904, 40
      %v5888 = vpop.permute.xlu0 %5887
      %5889 = vrot.lane.b32.xlu0 %v4921, 40
      %v5890 = vpop.permute.xlu0 %5889
      %5891 = vrot.lane.b32.xlu0 %v4938, 40
      %v5892 = vpop.permute.xlu0 %5891
      %5893 = vrot.lane.b32.xlu0 %v4955, 40
      %v5894 = vpop.permute.xlu0 %5893
      %5895 = vrot.lane.b32.xlu0 %v4972, 40
      %v5896 = vpop.permute.xlu0 %5895
      %5897 = vrot.lane.b32.xlu0 %v4989, 40
      %v5898 = vpop.permute.xlu0 %5897
      %5899 = vrot.lane.b32.xlu0 %v5006, 40
      %v5900 = vpop.permute.xlu0 %5899
      %5901 = vrot.lane.b32.xlu0 %v5023, 40
      %v5902 = vpop.permute.xlu0 %5901
      %5903 = vrot.lane.b32.xlu0 %v5040, 40
      %v5904 = vpop.permute.xlu0 %5903
      %5905 = vrot.lane.b32.xlu0 %v5057, 40
      %v5906 = vpop.permute.xlu0 %5905
      %5907 = vrot.lane.b32.xlu0 %v5107, 48
      %v5908 = vpop.permute.xlu0 %5907
      %5909 = vrot.lane.b32.xlu0 %v5124, 48
      %v5910 = vpop.permute.xlu0 %5909
      %5911 = vrot.lane.b32.xlu0 %v5141, 48
      %v5912 = vpop.permute.xlu0 %5911
      %5913 = vrot.lane.b32.xlu0 %v5158, 48
      %v5914 = vpop.permute.xlu0 %5913
      %5915 = vrot.lane.b32.xlu0 %v5175, 48
      %v5916 = vpop.permute.xlu0 %5915
      %5917 = vrot.lane.b32.xlu0 %v5192, 48
      %v5918 = vpop.permute.xlu0 %5917
      %5919 = vrot.lane.b32.xlu0 %v5209, 48
      %v5920 = vpop.permute.xlu0 %5919
      %5921 = vrot.lane.b32.xlu0 %v5226, 48
      %v5922 = vpop.permute.xlu0 %5921
      %5923 = vrot.lane.b32.xlu0 %v5243, 48
      %v5924 = vpop.permute.xlu0 %5923
      %5925 = vrot.lane.b32.xlu0 %v5260, 48
      %v5926 = vpop.permute.xlu0 %5925
      %5927 = vrot.lane.b32.xlu0 %v5277, 48
      %v5928 = vpop.permute.xlu0 %5927
      %5929 = vrot.lane.b32.xlu0 %v5294, 48
      %v5930 = vpop.permute.xlu0 %5929
      %5931 = vrot.lane.b32.xlu0 %v5311, 48
      %v5932 = vpop.permute.xlu0 %5931
      %5933 = vrot.lane.b32.xlu0 %v5328, 48
      %v5934 = vpop.permute.xlu0 %5933
      %5935 = vrot.lane.b32.xlu0 %v5345, 48
      %v5936 = vpop.permute.xlu0 %5935
      %5937 = vrot.lane.b32.xlu0 %v5362, 48
      %v5938 = vpop.permute.xlu0 %5937
      %5939 = vrot.lane.b32.xlu0 %v5413, 56
      %v5940 = vpop.permute.xlu0 %5939
      %5941 = vrot.lane.b32.xlu0 %v5416, 56
      %v5942 = vpop.permute.xlu0 %5941
      %5943 = vrot.lane.b32.xlu0 %v5419, 56
      %v5944 = vpop.permute.xlu0 %5943
      %5945 = vrot.lane.b32.xlu0 %v5422, 56
      %v5946 = vpop.permute.xlu0 %5945
      %5947 = vrot.lane.b32.xlu0 %v5425, 56
      %v5948 = vpop.permute.xlu0 %5947
      %5949 = vrot.lane.b32.xlu0 %v5428, 56
      %v5950 = vpop.permute.xlu0 %5949
      %5951 = vrot.lane.b32.xlu0 %v5431, 56
      %v5952 = vpop.permute.xlu0 %5951
      %5953 = vrot.lane.b32.xlu0 %v5434, 56
      %v5954 = vpop.permute.xlu0 %5953
      %5955 = vrot.lane.b32.xlu0 %v5437, 56
      %v5956 = vpop.permute.xlu0 %5955
      %5957 = vrot.lane.b32.xlu0 %v5440, 56
      %v5958 = vpop.permute.xlu0 %5957
      %5959 = vrot.lane.b32.xlu0 %v5443, 56
      %v5960 = vpop.permute.xlu0 %5959
      %5961 = vrot.lane.b32.xlu0 %v5446, 56
      %v5962 = vpop.permute.xlu0 %5961
      %5963 = vrot.lane.b32.xlu0 %v5449, 56
      %v5964 = vpop.permute.xlu0 %5963
      %5965 = vrot.lane.b32.xlu0 %v5452, 56
      %v5966 = vpop.permute.xlu0 %5965
      %5967 = vrot.lane.b32.xlu0 %v5455, 56
      %v5968 = vpop.permute.xlu0 %5967
      %5969 = vrot.lane.b32.xlu0 %v5458, 56
      %v5970 = vpop.permute.xlu0 %5969
      %5971 = vrot.lane.b32.xlu0 %v5491, 64
      %v5972 = vpop.permute.xlu0 %5971
      %5973 = vrot.lane.b32.xlu0 %v5508, 64
      %v5974 = vpop.permute.xlu0 %5973
      %5975 = vrot.lane.b32.xlu0 %v5525, 64
      %v5976 = vpop.permute.xlu0 %5975
      %5977 = vrot.lane.b32.xlu0 %v5542, 64
      %v5978 = vpop.permute.xlu0 %5977
      %5979 = vrot.lane.b32.xlu0 %v5559, 64
      %v5980 = vpop.permute.xlu0 %5979
      %5981 = vrot.lane.b32.xlu0 %v5576, 64
      %v5982 = vpop.permute.xlu0 %5981
      %5983 = vrot.lane.b32.xlu0 %v5593, 64
      %v5984 = vpop.permute.xlu0 %5983
      %5985 = vrot.lane.b32.xlu0 %v5610, 64
      %v5986 = vpop.permute.xlu0 %5985
      %5987 = vrot.lane.b32.xlu0 %v5627, 64
      %v5988 = vpop.permute.xlu0 %5987
      %5989 = vrot.lane.b32.xlu0 %v5644, 64
      %v5990 = vpop.permute.xlu0 %5989
      %5991 = vrot.lane.b32.xlu0 %v5661, 64
      %v5992 = vpop.permute.xlu0 %5991
      %5993 = vrot.lane.b32.xlu0 %v5678, 64
      %v5994 = vpop.permute.xlu0 %5993
      %5995 = vrot.lane.b32.xlu0 %v5695, 64
      %v5996 = vpop.permute.xlu0 %5995
      %5997 = vrot.lane.b32.xlu0 %v5712, 64
      %v5998 = vpop.permute.xlu0 %5997
      %5999 = vrot.lane.b32.xlu0 %v5729, 64
      %v6000 = vpop.permute.xlu0 %5999
      %6001 = vrot.lane.b32.xlu0 %v5746, 64
      %v6002 = vpop.permute.xlu0 %6001
      %v6005 = vsel %vm2912, %v3730, %v5748
      %v6008 = vsel %vm2912, %v3747, %v5750
      %v6011 = vsel %vm2912, %v3764, %v5752
      %v6014 = vsel %vm2912, %v3781, %v5754
      %v6017 = vsel %vm2912, %v3798, %v5756
      %v6020 = vsel %vm2912, %v3815, %v5758
      %v6023 = vsel %vm2912, %v3832, %v5760
      %v6026 = vsel %vm2912, %v3849, %v5762
      %v6029 = vsel %vm2912, %v3866, %v5764
      %v6032 = vsel %vm2912, %v3883, %v5766
      %v6035 = vsel %vm2912, %v3900, %v5768
      %v6038 = vsel %vm2912, %v3917, %v5770
      %v6041 = vsel %vm2912, %v3934, %v5772
      %v6044 = vsel %vm2912, %v3951, %v5774
      %v6047 = vsel %vm2912, %v3968, %v5776
      %v6050 = vsel %vm2912, %v3985, %v5778
      %v6052 = vsel %vm2978, %v6005, %v5780
      %v6054 = vsel %vm2978, %v6008, %v5782
      %v6056 = vsel %vm2978, %v6011, %v5784
      %v6058 = vsel %vm2978, %v6014, %v5786
      %v6060 = vsel %vm2978, %v6017, %v5788
      %v6062 = vsel %vm2978, %v6020, %v5790
      %v6064 = vsel %vm2978, %v6023, %v5792
      %v6066 = vsel %vm2978, %v6026, %v5794
      %v6068 = vsel %vm2978, %v6029, %v5796
      %v6070 = vsel %vm2978, %v6032, %v5798
      %v6072 = vsel %vm2978, %v6035, %v5800
      %v6074 = vsel %vm2978, %v6038, %v5802
      %v6076 = vsel %vm2978, %v6041, %v5804
      %v6078 = vsel %vm2978, %v6044, %v5806
      %v6080 = vsel %vm2978, %v6047, %v5808
      %v6082 = vsel %vm2978, %v6050, %v5810
      %v6084 = vsel %vm3044, %v6052, %v5812
      %v6086 = vsel %vm3044, %v6054, %v5814
      %v6088 = vsel %vm3044, %v6056, %v5816
      %v6090 = vsel %vm3044, %v6058, %v5818
      %v6092 = vsel %vm3044, %v6060, %v5820
      %v6094 = vsel %vm3044, %v6062, %v5822
      %v6096 = vsel %vm3044, %v6064, %v5824
      %v6098 = vsel %vm3044, %v6066, %v5826
      %v6100 = vsel %vm3044, %v6068, %v5828
      %v6102 = vsel %vm3044, %v6070, %v5830
      %v6104 = vsel %vm3044, %v6072, %v5832
      %v6106 = vsel %vm3044, %v6074, %v5834
      %v6108 = vsel %vm3044, %v6076, %v5836
      %v6110 = vsel %vm3044, %v6078, %v5838
      %v6112 = vsel %vm3044, %v6080, %v5840
      %v6114 = vsel %vm3044, %v6082, %v5842
      %v6116 = vsel %vm3110, %v6084, %v5844
      %v6118 = vsel %vm3110, %v6086, %v5846
      %v6120 = vsel %vm3110, %v6088, %v5848
      %v6122 = vsel %vm3110, %v6090, %v5850
      %v6124 = vsel %vm3110, %v6092, %v5852
      %v6126 = vsel %vm3110, %v6094, %v5854
      %v6128 = vsel %vm3110, %v6096, %v5856
      %v6130 = vsel %vm3110, %v6098, %v5858
      %v6132 = vsel %vm3110, %v6100, %v5860
      %v6134 = vsel %vm3110, %v6102, %v5862
      %v6136 = vsel %vm3110, %v6104, %v5864
      %v6138 = vsel %vm3110, %v6106, %v5866
      %v6140 = vsel %vm3110, %v6108, %v5868
      %v6142 = vsel %vm3110, %v6110, %v5870
      %v6144 = vsel %vm3110, %v6112, %v5872
      %v6146 = vsel %vm3110, %v6114, %v5874
      %vm6147 = vcmask 326656
      %v6149 = vsel %vm6147, %v6116, %v5876
      %v6151 = vsel %vm6147, %v6118, %v5878
      %v6153 = vsel %vm6147, %v6120, %v5880
      %v6155 = vsel %vm6147, %v6122, %v5882
      %v6157 = vsel %vm6147, %v6124, %v5884
      %v6159 = vsel %vm6147, %v6126, %v5886
      %v6161 = vsel %vm6147, %v6128, %v5888
      %v6163 = vsel %vm6147, %v6130, %v5890
      %v6165 = vsel %vm6147, %v6132, %v5892
      %v6167 = vsel %vm6147, %v6134, %v5894
      %v6169 = vsel %vm6147, %v6136, %v5896
      %v6171 = vsel %vm6147, %v6138, %v5898
      %v6173 = vsel %vm6147, %v6140, %v5900
      %v6175 = vsel %vm6147, %v6142, %v5902
      %v6177 = vsel %vm6147, %v6144, %v5904
      %v6179 = vsel %vm6147, %v6146, %v5906
      %vm6180 = vcmask 392192
      %v6182 = vsel %vm6180, %v6149, %v5908
      %v6184 = vsel %vm6180, %v6151, %v5910
      %v6186 = vsel %vm6180, %v6153, %v5912
      %v6188 = vsel %vm6180, %v6155, %v5914
      %v6190 = vsel %vm6180, %v6157, %v5916
      %v6192 = vsel %vm6180, %v6159, %v5918
      %v6194 = vsel %vm6180, %v6161, %v5920
      %v6196 = vsel %vm6180, %v6163, %v5922
      %v6198 = vsel %vm6180, %v6165, %v5924
      %v6200 = vsel %vm6180, %v6167, %v5926
      %v6202 = vsel %vm6180, %v6169, %v5928
      %v6204 = vsel %vm6180, %v6171, %v5930
      %v6206 = vsel %vm6180, %v6173, %v5932
      %v6208 = vsel %vm6180, %v6175, %v5934
      %v6210 = vsel %vm6180, %v6177, %v5936
      %v6212 = vsel %vm6180, %v6179, %v5938
      %vm6213 = vcmask 457728
      %v6215 = vsel %vm6213, %v6182, %v5940
      %v6217 = vsel %vm6213, %v6184, %v5942
      %v6219 = vsel %vm6213, %v6186, %v5944
      %v6221 = vsel %vm6213, %v6188, %v5946
      %v6223 = vsel %vm6213, %v6190, %v5948
      %v6225 = vsel %vm6213, %v6192, %v5950
      %v6227 = vsel %vm6213, %v6194, %v5952
      %v6229 = vsel %vm6213, %v6196, %v5954
      %v6231 = vsel %vm6213, %v6198, %v5956
      %v6233 = vsel %vm6213, %v6200, %v5958
      %v6235 = vsel %vm6213, %v6202, %v5960
      %v6237 = vsel %vm6213, %v6204, %v5962
      %v6239 = vsel %vm6213, %v6206, %v5964
      %v6241 = vsel %vm6213, %v6208, %v5966
      %v6243 = vsel %vm6213, %v6210, %v5968
      %v6245 = vsel %vm6213, %v6212, %v5970
      %vm6246 = vcmask 523264
      %v6248 = vsel %vm6246, %v6215, %v5972
      %v6250 = vsel %vm6246, %v6217, %v5974
      %v6252 = vsel %vm6246, %v6219, %v5976
      %v6254 = vsel %vm6246, %v6221, %v5978
      %v6256 = vsel %vm6246, %v6223, %v5980
      %v6258 = vsel %vm6246, %v6225, %v5982
      %v6260 = vsel %vm6246, %v6227, %v5984
      %v6262 = vsel %vm6246, %v6229, %v5986
      %v6264 = vsel %vm6246, %v6231, %v5988
      %v6266 = vsel %vm6246, %v6233, %v5990
      %v6268 = vsel %vm6246, %v6235, %v5992
      %v6270 = vsel %vm6246, %v6237, %v5994
      %v6272 = vsel %vm6246, %v6239, %v5996
      %v6274 = vsel %vm6246, %v6241, %v5998
      %v6276 = vsel %vm6246, %v6243, %v6000
      %v6278 = vsel %vm6246, %v6245, %v6002
      %v6279 = vld [vmem:[%s2] sm:$0xf]
      %v6280 = vld [vmem:[%s2 + $0x4] sm:$0xf]
      %v6281 = vld [vmem:[%s2 + $0x8] sm:$0xf]
      %v6282 = vld [vmem:[%s2 + $0xc] sm:$0xf]
      %v6283 = vld [vmem:[%s2 + $0x10] sm:$0xf]
      %v6284 = vld [vmem:[%s2 + $0x14] sm:$0xf]
      %v6285 = vld [vmem:[%s2 + $0x18] sm:$0xf]
      %v6286 = vld [vmem:[%s2 + $0x1c] sm:$0xf]
      %v6287 = vld [vmem:[%s2 + $0x20] sm:$0xf]
      %v6297 = vunpack.c.l.b16 %v6279
      %v6298 = vunpack.c.l.b16 %v6280
      %v6299 = vunpack.c.l.b16 %v6281
      %v6300 = vunpack.c.l.b16 %v6282
      %v6301 = vunpack.c.l.b16 %v6283
      %v6302 = vunpack.c.l.b16 %v6284
      %v6303 = vunpack.c.l.b16 %v6285
      %v6304 = vunpack.c.l.b16 %v6286
      %v6305 = vunpack.c.l.b16 %v6287
      %v6306 = vpack.c.b16 %v6298, %v6297
      %v6307 = vpack.c.b16 %v6300, %v6299
      %v6308 = vpack.c.b16 %v6302, %v6301
      %v6309 = vpack.c.b16 %v6304, %v6303
      %v6310 = vpack.c.b16 %v6305, %v6305
      %vm6315 = vcmask 588800
      %v6316 = vsel %vm6315, %v6248, 0
      %v6318 = vsel %vm6315, %v6250, 0
      %v6320 = vsel %vm6315, %v6252, 0
      %v6322 = vsel %vm6315, %v6254, 0
      %v6324 = vsel %vm6315, %v6256, 0
      %v6326 = vsel %vm6315, %v6258, 0
      %v6328 = vsel %vm6315, %v6260, 0
      %v6330 = vsel %vm6315, %v6262, 0
      %v6332 = vsel %vm6315, %v6264, 0
      %v6334 = vsel %vm6315, %v6266, 0
      %v6336 = vsel %vm6315, %v6268, 0
      %v6338 = vsel %vm6315, %v6270, 0
      %v6340 = vsel %vm6315, %v6272, 0
      %v6342 = vsel %vm6315, %v6274, 0
      %v6344 = vsel %vm6315, %v6276, 0
      %v6346 = vsel %vm6315, %v6278, 0
      %vm6348 = vcmask 1043456
      %v6350 = vsel %vm6348, %v6310, 0
      %6352 = vmatprep.subr.bf16.mxu0 0
      %6353 = vmatpush1.bf16.msra.mxu0 %v6306
      %6354 = vmatprep.subr.bf16.mxu0 0
      %6355 = vmatpush1.bf16.msra.mxu0 %v6307
      %6356 = vmatprep.subr.bf16.mxu0 0
      %6357 = vmatpush1.bf16.msra.mxu0 %v6308
      %6358 = vmatprep.subr.bf16.mxu0 0
      %6359 = vmatpush1.bf16.msra.mxu0 %v6309
      %6360 = vmatprep.subr.bf16.mxu0 0
      %6361 = vmatpush1.bf16.msra.mxu0 %v6350
      %6362 = vmatprep.subr.bf16.mxu0 0
      %6363 = vmatpush1.bf16.msra.mxu0 0
      %6364 = vmatprep.subr.bf16.mxu0 0
      %6365 = vmatpush1.bf16.msra.mxu0 0
      %6366 = vmatprep.subr.bf16.mxu0 0
      %6367 = vmatpush1.bf16.msra.mxu0 0
      %6368 = vmatprep.subr.bf16.mxu0 0
      %6369 = vmatpush1.bf16.msra.mxu0 0
      %6370 = vmatprep.subr.bf16.mxu0 0
      %6371 = vmatpush1.bf16.msra.mxu0 0
      %6372 = vmatprep.subr.bf16.mxu0 0
      %6373 = vmatpush1.bf16.msra.mxu0 0
      %6374 = vmatprep.subr.bf16.mxu0 0
      %6375 = vmatpush1.bf16.msra.mxu0 0
      %6376 = vmatprep.subr.bf16.mxu0 0
      %6377 = vmatpush1.bf16.msra.mxu0 0
      %6378 = vmatprep.subr.bf16.mxu0 0
      %6379 = vmatpush1.bf16.msra.mxu0 0
      %6380 = vmatprep.subr.bf16.mxu0 0
      %6381 = vmatpush1.bf16.msra.mxu0 0
      %6382 = vmatprep.subr.bf16.mxu0 0
      %6383 = vmatpush1.bf16.msra.mxu0 0
      %6384 = vmatprep.mubr.bf16.mxu0 0
      %6385 = vmatmul.mubr.bf16.gmra.mrb[0].mxu0 %v6316
      %v6386 = vpop.f32.mrb[0].mxu0
      %v6387 = vadd.f32 0.0, %v6386
      %v6388 = vpop.f32.mrb[0].mxu0
      %v6389 = vpop.f32.mrb[0].mxu0
      %v6390 = vadd.f32 0.0, %v6389
      %v6391 = vpop.f32.mrb[0].mxu0
      %6392 = vmatprep.mubr.bf16.mxu0 0
      %6393 = vmatmul.mubr.bf16.gmra.mrb[0].mxu0 %v6318
      %v6394 = vpop.f32.mrb[0].mxu0
      %v6395 = vadd.f32 0.0, %v6394
      %v6396 = vpop.f32.mrb[0].mxu0
      %v6397 = vpop.f32.mrb[0].mxu0
      %v6398 = vadd.f32 0.0, %v6397
      %v6399 = vpop.f32.mrb[0].mxu0
      %6400 = vmatprep.mubr.bf16.mxu0 0
      %6401 = vmatmul.mubr.bf16.gmra.mrb[0].mxu0 %v6320
      %v6402 = vpop.f32.mrb[0].mxu0
      %v6403 = vadd.f32 0.0, %v6402
      %v6404 = vpop.f32.mrb[0].mxu0
      %v6405 = vpop.f32.mrb[0].mxu0
      %v6406 = vadd.f32 0.0, %v6405
      %v6407 = vpop.f32.mrb[0].mxu0
      %6408 = vmatprep.mubr.bf16.mxu0 0
      %6409 = vmatmul.mubr.bf16.gmra.mrb[0].mxu0 %v6322
      %v6410 = vpop.f32.mrb[0].mxu0
      %v6411 = vadd.f32 0.0, %v6410
      %v6412 = vpop.f32.mrb[0].mxu0
      %v6413 = vpop.f32.mrb[0].mxu0
      %v6414 = vadd.f32 0.0, %v6413
      %v6415 = vpop.f32.mrb[0].mxu0
      %6416 = vmatprep.mubr.bf16.mxu0 0
      %6417 = vmatmul.mubr.bf16.gmra.mrb[0].mxu0 %v6324
      %v6418 = vpop.f32.mrb[0].mxu0
      %v6419 = vadd.f32 0.0, %v6418
      %v6420 = vpop.f32.mrb[0].mxu0
      %v6421 = vpop.f32.mrb[0].mxu0
      %v6422 = vadd.f32 0.0, %v6421
      %v6423 = vpop.f32.mrb[0].mxu0
      %6424 = vmatprep.mubr.bf16.mxu0 0
      %6425 = vmatmul.mubr.bf16.gmra.mrb[0].mxu0 %v6326
      %v6426 = vpop.f32.mrb[0].mxu0
      %v6427 = vadd.f32 0.0, %v6426
      %v6428 = vpop.f32.mrb[0].mxu0
      %v6429 = vpop.f32.mrb[0].mxu0
      %v6430 = vadd.f32 0.0, %v6429
      %v6431 = vpop.f32.mrb[0].mxu0
      %6432 = vmatprep.mubr.bf16.mxu0 0
      %6433 = vmatmul.mubr.bf16.gmra.mrb[0].mxu0 %v6328
      %v6434 = vpop.f32.mrb[0].mxu0
      %v6435 = vadd.f32 0.0, %v6434
      %v6436 = vpop.f32.mrb[0].mxu0
      %v6437 = vpop.f32.mrb[0].mxu0
      %v6438 = vadd.f32 0.0, %v6437
      %v6439 = vpop.f32.mrb[0].mxu0
      %6440 = vmatprep.mubr.bf16.mxu0 0
      %6441 = vmatmul.mubr.bf16.gmra.mrb[0].mxu0 %v6330
      %v6442 = vpop.f32.mrb[0].mxu0
      %v6443 = vadd.f32 0.0, %v6442
      %v6444 = vpop.f32.mrb[0].mxu0
      %v6445 = vpop.f32.mrb[0].mxu0
      %v6446 = vadd.f32 0.0, %v6445
      %v6447 = vpop.f32.mrb[0].mxu0
      %6448 = vmatprep.mubr.bf16.mxu0 0
      %6449 = vmatmul.mubr.bf16.gmra.mrb[0].mxu0 %v6332
      %v6450 = vpop.f32.mrb[0].mxu0
      %v6451 = vadd.f32 0.0, %v6450
      %v6452 = vpop.f32.mrb[0].mxu0
      %v6453 = vpop.f32.mrb[0].mxu0
      %v6454 = vadd.f32 0.0, %v6453
      %v6455 = vpop.f32.mrb[0].mxu0
      %6456 = vmatprep.mubr.bf16.mxu0 0
      %6457 = vmatmul.mubr.bf16.gmra.mrb[0].mxu0 %v6334
      %v6458 = vpop.f32.mrb[0].mxu0
      %v6459 = vadd.f32 0.0, %v6458
      %v6460 = vpop.f32.mrb[0].mxu0
      %v6461 = vpop.f32.mrb[0].mxu0
      %v6462 = vadd.f32 0.0, %v6461
      %v6463 = vpop.f32.mrb[0].mxu0
      %6464 = vmatprep.mubr.bf16.mxu0 0
      %6465 = vmatmul.mubr.bf16.gmra.mrb[0].mxu0 %v6336
      %v6466 = vpop.f32.mrb[0].mxu0
      %v6467 = vadd.f32 0.0, %v6466
      %v6468 = vpop.f32.mrb[0].mxu0
      %v6469 = vpop.f32.mrb[0].mxu0
      %v6470 = vadd.f32 0.0, %v6469
      %v6471 = vpop.f32.mrb[0].mxu0
      %6472 = vmatprep.mubr.bf16.mxu0 0
      %6473 = vmatmul.mubr.bf16.gmra.mrb[0].mxu0 %v6338
      %v6474 = vpop.f32.mrb[0].mxu0
      %v6475 = vadd.f32 0.0, %v6474
      %v6476 = vpop.f32.mrb[0].mxu0
      %v6477 = vpop.f32.mrb[0].mxu0
      %v6478 = vadd.f32 0.0, %v6477
      %v6479 = vpop.f32.mrb[0].mxu0
      %6480 = vmatprep.mubr.bf16.mxu0 0
      %6481 = vmatmul.mubr.bf16.gmra.mrb[0].mxu0 %v6340
      %v6482 = vpop.f32.mrb[0].mxu0
      %v6483 = vadd.f32 0.0, %v6482
      %v6484 = vpop.f32.mrb[0].mxu0
      %v6485 = vpop.f32.mrb[0].mxu0
      %v6486 = vadd.f32 0.0, %v6485
      %v6487 = vpop.f32.mrb[0].mxu0
      %6488 = vmatprep.mubr.bf16.mxu0 0
      %6489 = vmatmul.mubr.bf16.gmra.mrb[0].mxu0 %v6342
      %v6490 = vpop.f32.mrb[0].mxu0
      %v6491 = vadd.f32 0.0, %v6490
      %v6492 = vpop.f32.mrb[0].mxu0
      %v6493 = vpop.f32.mrb[0].mxu0
      %v6494 = vadd.f32 0.0, %v6493
      %v6495 = vpop.f32.mrb[0].mxu0
      %6496 = vmatprep.mubr.bf16.mxu0 0
      %6497 = vmatmul.mubr.bf16.gmra.mrb[0].mxu0 %v6344
      %v6498 = vpop.f32.mrb[0].mxu0
      %v6499 = vadd.f32 0.0, %v6498
      %v6500 = vpop.f32.mrb[0].mxu0
      %v6501 = vpop.f32.mrb[0].mxu0
      %v6502 = vadd.f32 0.0, %v6501
      %v6503 = vpop.f32.mrb[0].mxu0
      %6504 = vmatprep.mubr.bf16.mxu0 0
      %6505 = vmatmul.mubr.bf16.gmra.mrb[0].mxu0 %v6346
      %v6506 = vpop.f32.mrb[0].mxu0
      %v6507 = vadd.f32 0.0, %v6506
      %v6508 = vpop.f32.mrb[0].mxu0
      %v6509 = vpop.f32.mrb[0].mxu0
      %v6510 = vadd.f32 0.0, %v6509
      %v6511 = vpop.f32.mrb[0].mxu0
      %6512 = vdwg.mxu0
      %v6513 = vlaneseq
      %v6514 = vshrl.u32 %v6513, 7
      %v6515 = vsub.s32 2, %v6514
      %v6516 = vrot.slane %v3361, %v6515
      %v6517 = vmul.f32 %v6387, %v6516
      %v6518 = vmul.f32 %v6390, %v6516
      %v6519 = vmul.f32 %v6395, %v6516
      %v6520 = vmul.f32 %v6398, %v6516
      %v6521 = vmul.f32 %v6403, %v6516
      %v6522 = vmul.f32 %v6406, %v6516
      %v6523 = vmul.f32 %v6411, %v6516
      %v6524 = vmul.f32 %v6414, %v6516
      %v6525 = vmul.f32 %v6419, %v6516
      %v6526 = vmul.f32 %v6422, %v6516
      %v6527 = vmul.f32 %v6427, %v6516
      %v6528 = vmul.f32 %v6430, %v6516
      %v6529 = vmul.f32 %v6435, %v6516
      %v6530 = vmul.f32 %v6438, %v6516
      %v6531 = vmul.f32 %v6443, %v6516
      %v6532 = vmul.f32 %v6446, %v6516
      %v6533 = vmul.f32 %v6451, %v6516
      %v6534 = vmul.f32 %v6454, %v6516
      %v6535 = vmul.f32 %v6459, %v6516
      %v6536 = vmul.f32 %v6462, %v6516
      %v6537 = vmul.f32 %v6467, %v6516
      %v6538 = vmul.f32 %v6470, %v6516
      %v6539 = vmul.f32 %v6475, %v6516
      %v6540 = vmul.f32 %v6478, %v6516
      %v6541 = vmul.f32 %v6483, %v6516
      %v6542 = vmul.f32 %v6486, %v6516
      %v6543 = vmul.f32 %v6491, %v6516
      %v6544 = vmul.f32 %v6494, %v6516
      %v6545 = vmul.f32 %v6499, %v6516
      %v6546 = vmul.f32 %v6502, %v6516
      %v6547 = vmul.f32 %v6507, %v6516
      %v6548 = vmul.f32 %v6510, %v6516
      %v6549 = vlaneseq
      %v6550 = vshrl.u32 %v6549, 7
      %v6551 = vsub.s32 3, %v6550
      %v6552 = vrot.slane %v3361, %v6551
      %v6553 = vadd.f32 %v6517, %v6552
      %v6554 = vadd.f32 %v6518, %v6552
      %v6555 = vadd.f32 %v6519, %v6552
      %v6556 = vadd.f32 %v6520, %v6552
      %v6557 = vadd.f32 %v6521, %v6552
      %v6558 = vadd.f32 %v6522, %v6552
      %v6559 = vadd.f32 %v6523, %v6552
      %v6560 = vadd.f32 %v6524, %v6552
      %v6561 = vadd.f32 %v6525, %v6552
      %v6562 = vadd.f32 %v6526, %v6552
      %v6563 = vadd.f32 %v6527, %v6552
      %v6564 = vadd.f32 %v6528, %v6552
      %v6565 = vadd.f32 %v6529, %v6552
      %v6566 = vadd.f32 %v6530, %v6552
      %v6567 = vadd.f32 %v6531, %v6552
      %v6568 = vadd.f32 %v6532, %v6552
      %v6569 = vadd.f32 %v6533, %v6552
      %v6570 = vadd.f32 %v6534, %v6552
      %v6571 = vadd.f32 %v6535, %v6552
      %v6572 = vadd.f32 %v6536, %v6552
      %v6573 = vadd.f32 %v6537, %v6552
      %v6574 = vadd.f32 %v6538, %v6552
      %v6575 = vadd.f32 %v6539, %v6552
      %v6576 = vadd.f32 %v6540, %v6552
      %v6577 = vadd.f32 %v6541, %v6552
      %v6578 = vadd.f32 %v6542, %v6552
      %v6579 = vadd.f32 %v6543, %v6552
      %v6580 = vadd.f32 %v6544, %v6552
      %v6581 = vadd.f32 %v6545, %v6552
      %v6582 = vadd.f32 %v6546, %v6552
      %v6583 = vadd.f32 %v6547, %v6552
      %v6584 = vadd.f32 %v6548, %v6552
      %v6585 = vld [vmem:[%s3] sm:$0x3]
      %v6586 = vpack.c.b16 %v411, %v410
      %v6587 = vpack.c.b16 %v413, %v412
      %v6588 = vpack.c.b16 %v415, %v414
      %v6589 = vpack.c.b16 %v417, %v416
      %v6590 = vpack.c.b16 %v419, %v418
      %v6591 = vpack.c.b16 %v421, %v420
      %v6592 = vpack.c.b16 %v423, %v422
      %v6593 = vpack.c.b16 %v425, %v424
      %v6594 = vpack.c.b16 %v427, %v426
      %v6595 = vpack.c.b16 %v429, %v428
      %v6596 = vpack.c.b16 %v431, %v430
      %v6597 = vpack.c.b16 %v433, %v432
      %v6598 = vpack.c.b16 %v435, %v434
      %v6599 = vpack.c.b16 %v437, %v436
      %v6600 = vpack.c.b16 %v439, %v438
      %v6601 = vpack.c.b16 %v441, %v440
      %v6603 = vsel %vm258, %v6586, 0
      %v6606 = vsel %vm258, %v6587, 0
      %v6609 = vsel %vm258, %v6588, 0
      %v6612 = vsel %vm258, %v6589, 0
      %v6615 = vsel %vm258, %v6590, 0
      %v6618 = vsel %vm258, %v6591, 0
      %v6621 = vsel %vm258, %v6592, 0
      %v6624 = vsel %vm258, %v6593, 0
      %v6627 = vsel %vm258, %v6594, 0
      %v6630 = vsel %vm258, %v6595, 0
      %v6633 = vsel %vm258, %v6596, 0
      %v6636 = vsel %vm258, %v6597, 0
      %v6639 = vsel %vm258, %v6598, 0
      %v6642 = vsel %vm258, %v6599, 0
      %v6645 = vsel %vm258, %v6600, 0
      %v6648 = vsel %vm258, %v6601, 0
      %v6651 = vsel %vm3196, %v6585, 0
      %6653 = vmatprep.subr.bf16.mxu0 0
      %6654 = vmatpush1.bf16.msra.mxu0 %v6651
      %6655 = vmatprep.subr.bf16.mxu0 0
      %6656 = vmatpush1.bf16.msra.mxu0 0
      %6657 = vmatprep.subr.bf16.mxu0 0
      %6658 = vmatpush1.bf16.msra.mxu0 0
      %6659 = vmatprep.subr.bf16.mxu0 0
      %6660 = vmatpush1.bf16.msra.mxu0 0
      %6661 = vmatprep.subr.bf16.mxu0 0
      %6662 = vmatpush1.bf16.msra.mxu0 0
      %6663 = vmatprep.subr.bf16.mxu0 0
      %6664 = vmatpush1.bf16.msra.mxu0 0
      %6665 = vmatprep.subr.bf16.mxu0 0
      %6666 = vmatpush1.bf16.msra.mxu0 0
      %6667 = vmatprep.subr.bf16.mxu0 0
      %6668 = vmatpush1.bf16.msra.mxu0 0
      %6669 = vmatprep.subr.bf16.mxu0 0
      %6670 = vmatpush1.bf16.msra.mxu0 0
      %6671 = vmatprep.subr.bf16.mxu0 0
      %6672 = vmatpush1.bf16.msra.mxu0 0
      %6673 = vmatprep.subr.bf16.mxu0 0
      %6674 = vmatpush1.bf16.msra.mxu0 0
      %6675 = vmatprep.subr.bf16.mxu0 0
      %6676 = vmatpush1.bf16.msra.mxu0 0
      %6677 = vmatprep.subr.bf16.mxu0 0
      %6678 = vmatpush1.bf16.msra.mxu0 0
      %6679 = vmatprep.subr.bf16.mxu0 0
      %6680 = vmatpush1.bf16.msra.mxu0 0
      %6681 = vmatprep.subr.bf16.mxu0 0
      %6682 = vmatpush1.bf16.msra.mxu0 0
      %6683 = vmatprep.subr.bf16.mxu0 0
      %6684 = vmatpush1.bf16.msra.mxu0 0
      %6685 = vmatprep.mubr.bf16.mxu0 0
      %6686 = vmatmul.mubr.bf16.gmra.mrb[0].mxu0 %v6603
      %v6687 = vpop.f32.mrb[0].mxu0
      %v6688 = vadd.f32 0.0, %v6687
      %v6689 = vpop.f32.mrb[0].mxu0
      %v6690 = vpop.f32.mrb[0].mxu0
      %v6691 = vadd.f32 0.0, %v6690
      %v6692 = vpop.f32.mrb[0].mxu0
      %6693 = vmatprep.mubr.bf16.mxu0 0
      %6694 = vmatmul.mubr.bf16.gmra.mrb[0].mxu0 %v6606
      %v6695 = vpop.f32.mrb[0].mxu0
      %v6696 = vadd.f32 0.0, %v6695
      %v6697 = vpop.f32.mrb[0].mxu0
      %v6698 = vpop.f32.mrb[0].mxu0
      %v6699 = vadd.f32 0.0, %v6698
      %v6700 = vpop.f32.mrb[0].mxu0
      %6701 = vmatprep.mubr.bf16.mxu0 0
      %6702 = vmatmul.mubr.bf16.gmra.mrb[0].mxu0 %v6609
      %v6703 = vpop.f32.mrb[0].mxu0
      %v6704 = vadd.f32 0.0, %v6703
      %v6705 = vpop.f32.mrb[0].mxu0
      %v6706 = vpop.f32.mrb[0].mxu0
      %v6707 = vadd.f32 0.0, %v6706
      %v6708 = vpop.f32.mrb[0].mxu0
      %6709 = vmatprep.mubr.bf16.mxu0 0
      %6710 = vmatmul.mubr.bf16.gmra.mrb[0].mxu0 %v6612
      %v6711 = vpop.f32.mrb[0].mxu0
      %v6712 = vadd.f32 0.0, %v6711
      %v6713 = vpop.f32.mrb[0].mxu0
      %v6714 = vpop.f32.mrb[0].mxu0
      %v6715 = vadd.f32 0.0, %v6714
      %v6716 = vpop.f32.mrb[0].mxu0
      %6717 = vmatprep.mubr.bf16.mxu0 0
      %6718 = vmatmul.mubr.bf16.gmra.mrb[0].mxu0 %v6615
      %v6719 = vpop.f32.mrb[0].mxu0
      %v6720 = vadd.f32 0.0, %v6719
      %v6721 = vpop.f32.mrb[0].mxu0
      %v6722 = vpop.f32.mrb[0].mxu0
      %v6723 = vadd.f32 0.0, %v6722
      %v6724 = vpop.f32.mrb[0].mxu0
      %6725 = vmatprep.mubr.bf16.mxu0 0
      %6726 = vmatmul.mubr.bf16.gmra.mrb[0].mxu0 %v6618
      %v6727 = vpop.f32.mrb[0].mxu0
      %v6728 = vadd.f32 0.0, %v6727
      %v6729 = vpop.f32.mrb[0].mxu0
      %v6730 = vpop.f32.mrb[0].mxu0
      %v6731 = vadd.f32 0.0, %v6730
      %v6732 = vpop.f32.mrb[0].mxu0
      %6733 = vmatprep.mubr.bf16.mxu0 0
      %6734 = vmatmul.mubr.bf16.gmra.mrb[0].mxu0 %v6621
      %v6735 = vpop.f32.mrb[0].mxu0
      %v6736 = vadd.f32 0.0, %v6735
      %v6737 = vpop.f32.mrb[0].mxu0
      %v6738 = vpop.f32.mrb[0].mxu0
      %v6739 = vadd.f32 0.0, %v6738
      %v6740 = vpop.f32.mrb[0].mxu0
      %6741 = vmatprep.mubr.bf16.mxu0 0
      %6742 = vmatmul.mubr.bf16.gmra.mrb[0].mxu0 %v6624
      %v6743 = vpop.f32.mrb[0].mxu0
      %v6744 = vadd.f32 0.0, %v6743
      %v6745 = vpop.f32.mrb[0].mxu0
      %v6746 = vpop.f32.mrb[0].mxu0
      %v6747 = vadd.f32 0.0, %v6746
      %v6748 = vpop.f32.mrb[0].mxu0
      %6749 = vmatprep.mubr.bf16.mxu0 0
      %6750 = vmatmul.mubr.bf16.gmra.mrb[0].mxu0 %v6627
      %v6751 = vpop.f32.mrb[0].mxu0
      %v6752 = vadd.f32 0.0, %v6751
      %v6753 = vpop.f32.mrb[0].mxu0
      %v6754 = vpop.f32.mrb[0].mxu0
      %v6755 = vadd.f32 0.0, %v6754
      %v6756 = vpop.f32.mrb[0].mxu0
      %6757 = vmatprep.mubr.bf16.mxu0 0
      %6758 = vmatmul.mubr.bf16.gmra.mrb[0].mxu0 %v6630
      %v6759 = vpop.f32.mrb[0].mxu0
      %v6760 = vadd.f32 0.0, %v6759
      %v6761 = vpop.f32.mrb[0].mxu0
      %v6762 = vpop.f32.mrb[0].mxu0
      %v6763 = vadd.f32 0.0, %v6762
      %v6764 = vpop.f32.mrb[0].mxu0
      %6765 = vmatprep.mubr.bf16.mxu0 0
      %6766 = vmatmul.mubr.bf16.gmra.mrb[0].mxu0 %v6633
      %v6767 = vpop.f32.mrb[0].mxu0
      %v6768 = vadd.f32 0.0, %v6767
      %v6769 = vpop.f32.mrb[0].mxu0
      %v6770 = vpop.f32.mrb[0].mxu0
      %v6771 = vadd.f32 0.0, %v6770
      %v6772 = vpop.f32.mrb[0].mxu0
      %6773 = vmatprep.mubr.bf16.mxu0 0
      %6774 = vmatmul.mubr.bf16.gmra.mrb[0].mxu0 %v6636
      %v6775 = vpop.f32.mrb[0].mxu0
      %v6776 = vadd.f32 0.0, %v6775
      %v6777 = vpop.f32.mrb[0].mxu0
      %v6778 = vpop.f32.mrb[0].mxu0
      %v6779 = vadd.f32 0.0, %v6778
      %v6780 = vpop.f32.mrb[0].mxu0
      %6781 = vmatprep.mubr.bf16.mxu0 0
      %6782 = vmatmul.mubr.bf16.gmra.mrb[0].mxu0 %v6639
      %v6783 = vpop.f32.mrb[0].mxu0
      %v6784 = vadd.f32 0.0, %v6783
      %v6785 = vpop.f32.mrb[0].mxu0
      %v6786 = vpop.f32.mrb[0].mxu0
      %v6787 = vadd.f32 0.0, %v6786
      %v6788 = vpop.f32.mrb[0].mxu0
      %6789 = vmatprep.mubr.bf16.mxu0 0
      %6790 = vmatmul.mubr.bf16.gmra.mrb[0].mxu0 %v6642
      %v6791 = vpop.f32.mrb[0].mxu0
      %v6792 = vadd.f32 0.0, %v6791
      %v6793 = vpop.f32.mrb[0].mxu0
      %v6794 = vpop.f32.mrb[0].mxu0
      %v6795 = vadd.f32 0.0, %v6794
      %v6796 = vpop.f32.mrb[0].mxu0
      %6797 = vmatprep.mubr.bf16.mxu0 0
      %6798 = vmatmul.mubr.bf16.gmra.mrb[0].mxu0 %v6645
      %v6799 = vpop.f32.mrb[0].mxu0
      %v6800 = vadd.f32 0.0, %v6799
      %v6801 = vpop.f32.mrb[0].mxu0
      %v6802 = vpop.f32.mrb[0].mxu0
      %v6803 = vadd.f32 0.0, %v6802
      %v6804 = vpop.f32.mrb[0].mxu0
      %6805 = vmatprep.mubr.bf16.mxu0 0
      %6806 = vmatmul.mubr.bf16.gmra.mrb[0].mxu0 %v6648
      %v6807 = vpop.f32.mrb[0].mxu0
      %v6808 = vadd.f32 0.0, %v6807
      %v6809 = vpop.f32.mrb[0].mxu0
      %v6810 = vpop.f32.mrb[0].mxu0
      %v6811 = vadd.f32 0.0, %v6810
      %v6812 = vpop.f32.mrb[0].mxu0
      %6813 = vdwg.mxu0
      %v6814 = vlaneseq
      %v6815 = vshrl.u32 %v6814, 7
      %v6816 = vsub.s32 4, %v6815
      %v6817 = vrot.slane %v3361, %v6816
      %v6818 = vmul.f32 %v6688, %v6817
      %v6819 = vmul.f32 %v6691, %v6817
      %v6820 = vmul.f32 %v6696, %v6817
      %v6821 = vmul.f32 %v6699, %v6817
      %v6822 = vmul.f32 %v6704, %v6817
      %v6823 = vmul.f32 %v6707, %v6817
      %v6824 = vmul.f32 %v6712, %v6817
      %v6825 = vmul.f32 %v6715, %v6817
      %v6826 = vmul.f32 %v6720, %v6817
      %v6827 = vmul.f32 %v6723, %v6817
      %v6828 = vmul.f32 %v6728, %v6817
      %v6829 = vmul.f32 %v6731, %v6817
      %v6830 = vmul.f32 %v6736, %v6817
      %v6831 = vmul.f32 %v6739, %v6817
      %v6832 = vmul.f32 %v6744, %v6817
      %v6833 = vmul.f32 %v6747, %v6817
      %v6834 = vmul.f32 %v6752, %v6817
      %v6835 = vmul.f32 %v6755, %v6817
      %v6836 = vmul.f32 %v6760, %v6817
      %v6837 = vmul.f32 %v6763, %v6817
      %v6838 = vmul.f32 %v6768, %v6817
      %v6839 = vmul.f32 %v6771, %v6817
      %v6840 = vmul.f32 %v6776, %v6817
      %v6841 = vmul.f32 %v6779, %v6817
      %v6842 = vmul.f32 %v6784, %v6817
      %v6843 = vmul.f32 %v6787, %v6817
      %v6844 = vmul.f32 %v6792, %v6817
      %v6845 = vmul.f32 %v6795, %v6817
      %v6846 = vmul.f32 %v6800, %v6817
      %v6847 = vmul.f32 %v6803, %v6817
      %v6848 = vmul.f32 %v6808, %v6817
      %v6849 = vmul.f32 %v6811, %v6817
      %v6850 = vlaneseq
      %v6851 = vshrl.u32 %v6850, 7
      %v6852 = vsub.s32 5, %v6851
      %v6853 = vrot.slane %v3361, %v6852
      %v6854 = vadd.f32 %v6818, %v6853
      %v6855 = vadd.f32 %v6819, %v6853
      %v6856 = vadd.f32 %v6820, %v6853
      %v6857 = vadd.f32 %v6821, %v6853
      %v6858 = vadd.f32 %v6822, %v6853
      %v6859 = vadd.f32 %v6823, %v6853
      %v6860 = vadd.f32 %v6824, %v6853
      %v6861 = vadd.f32 %v6825, %v6853
      %v6862 = vadd.f32 %v6826, %v6853
      %v6863 = vadd.f32 %v6827, %v6853
      %v6864 = vadd.f32 %v6828, %v6853
      %v6865 = vadd.f32 %v6829, %v6853
      %v6866 = vadd.f32 %v6830, %v6853
      %v6867 = vadd.f32 %v6831, %v6853
      %v6868 = vadd.f32 %v6832, %v6853
      %v6869 = vadd.f32 %v6833, %v6853
      %v6870 = vadd.f32 %v6834, %v6853
      %v6871 = vadd.f32 %v6835, %v6853
      %v6872 = vadd.f32 %v6836, %v6853
      %v6873 = vadd.f32 %v6837, %v6853
      %v6874 = vadd.f32 %v6838, %v6853
      %v6875 = vadd.f32 %v6839, %v6853
      %v6876 = vadd.f32 %v6840, %v6853
      %v6877 = vadd.f32 %v6841, %v6853
      %v6878 = vadd.f32 %v6842, %v6853
      %v6879 = vadd.f32 %v6843, %v6853
      %v6880 = vadd.f32 %v6844, %v6853
      %v6881 = vadd.f32 %v6845, %v6853
      %v6882 = vadd.f32 %v6846, %v6853
      %v6883 = vadd.f32 %v6847, %v6853
      %v6884 = vadd.f32 %v6848, %v6853
      %v6885 = vadd.f32 %v6849, %v6853
      %v6886 = vadd.f32 %v6553, %v6854
      %v6887 = vadd.f32 %v6554, %v6855
      %v6888 = vadd.f32 %v6555, %v6856
      %v6889 = vadd.f32 %v6556, %v6857
      %v6890 = vadd.f32 %v6557, %v6858
      %v6891 = vadd.f32 %v6558, %v6859
      %v6892 = vadd.f32 %v6559, %v6860
      %v6893 = vadd.f32 %v6560, %v6861
      %v6894 = vadd.f32 %v6561, %v6862
      %v6895 = vadd.f32 %v6562, %v6863
      %v6896 = vadd.f32 %v6563, %v6864
      %v6897 = vadd.f32 %v6564, %v6865
      %v6898 = vadd.f32 %v6565, %v6866
      %v6899 = vadd.f32 %v6566, %v6867
      %v6900 = vadd.f32 %v6567, %v6868
      %v6901 = vadd.f32 %v6568, %v6869
      %v6902 = vadd.f32 %v6569, %v6870
      %v6903 = vadd.f32 %v6570, %v6871
      %v6904 = vadd.f32 %v6571, %v6872
      %v6905 = vadd.f32 %v6572, %v6873
      %v6906 = vadd.f32 %v6573, %v6874
      %v6907 = vadd.f32 %v6574, %v6875
      %v6908 = vadd.f32 %v6575, %v6876
      %v6909 = vadd.f32 %v6576, %v6877
      %v6910 = vadd.f32 %v6577, %v6878
      %v6911 = vadd.f32 %v6578, %v6879
      %v6912 = vadd.f32 %v6579, %v6880
      %v6913 = vadd.f32 %v6580, %v6881
      %v6914 = vadd.f32 %v6581, %v6882
      %v6915 = vadd.f32 %v6582, %v6883
      %v6916 = vadd.f32 %v6583, %v6884
      %v6917 = vadd.f32 %v6584, %v6885
      %v6918 = vmax.f32 %v6886, 0.0
      %v6919 = vmax.f32 %v6887, 0.0
      %v6920 = vmax.f32 %v6888, 0.0
      %v6921 = vmax.f32 %v6889, 0.0
      %v6922 = vmax.f32 %v6890, 0.0
      %v6923 = vmax.f32 %v6891, 0.0
      %v6924 = vmax.f32 %v6892, 0.0
      %v6925 = vmax.f32 %v6893, 0.0
      %v6926 = vmax.f32 %v6894, 0.0
      %v6927 = vmax.f32 %v6895, 0.0
      %v6928 = vmax.f32 %v6896, 0.0
      %v6929 = vmax.f32 %v6897, 0.0
      %v6930 = vmax.f32 %v6898, 0.0
      %v6931 = vmax.f32 %v6899, 0.0
      %v6932 = vmax.f32 %v6900, 0.0
      %v6933 = vmax.f32 %v6901, 0.0
      %v6934 = vmax.f32 %v6902, 0.0
      %v6935 = vmax.f32 %v6903, 0.0
      %v6936 = vmax.f32 %v6904, 0.0
      %v6937 = vmax.f32 %v6905, 0.0
      %v6938 = vmax.f32 %v6906, 0.0
      %v6939 = vmax.f32 %v6907, 0.0
      %v6940 = vmax.f32 %v6908, 0.0
      %v6941 = vmax.f32 %v6909, 0.0
      %v6942 = vmax.f32 %v6910, 0.0
      %v6943 = vmax.f32 %v6911, 0.0
      %v6944 = vmax.f32 %v6912, 0.0
      %v6945 = vmax.f32 %v6913, 0.0
      %v6946 = vmax.f32 %v6914, 0.0
      %v6947 = vmax.f32 %v6915, 0.0
      %v6948 = vmax.f32 %v6916, 0.0
      %v6949 = vmax.f32 %v6917, 0.0
      %v6950 = vlaneseq
      %v6951 = vshrl.u32 %v6950, 7
      %v6952 = vlaneseq
      %v6953 = vand.u32 %v6952, 127
      %vm6954 = vcmp.eq.s32.totalorder %v6951, %v6953
      %v6955 = vsel %vm6954, 1, 0
      %v6956 = vcvt.s32.f32 %v6955
      %v6958 = vsel %vm2912, %v6956, 0
      %v6961 = vsel %vm2912, %v6918, 0
      %v6964 = vsel %vm2912, %v6919, 0
      %v6967 = vsel %vm2912, %v6920, 0
      %v6970 = vsel %vm2912, %v6921, 0
      %v6973 = vsel %vm2912, %v6922, 0
      %v6976 = vsel %vm2912, %v6923, 0
      %v6979 = vsel %vm2912, %v6924, 0
      %v6982 = vsel %vm2912, %v6925, 0
      %v6985 = vsel %vm2912, %v6926, 0
      %v6988 = vsel %vm2912, %v6927, 0
      %v6991 = vsel %vm2912, %v6928, 0
      %v6994 = vsel %vm2912, %v6929, 0
      %v6997 = vsel %vm2912, %v6930, 0
      %v7000 = vsel %vm2912, %v6931, 0
      %v7003 = vsel %vm2912, %v6932, 0
      %v7006 = vsel %vm2912, %v6933, 0
      %v7009 = vsel %vm2912, %v6934, 0
      %v7012 = vsel %vm2912, %v6935, 0
      %v7015 = vsel %vm2912, %v6936, 0
      %v7018 = vsel %vm2912, %v6937, 0
      %v7021 = vsel %vm2912, %v6938, 0
      %v7024 = vsel %vm2912, %v6939, 0
      %v7027 = vsel %vm2912, %v6940, 0
      %v7030 = vsel %vm2912, %v6941, 0
      %v7033 = vsel %vm2912, %v6942, 0
      %v7036 = vsel %vm2912, %v6943, 0
      %v7039 = vsel %vm2912, %v6944, 0
      %v7042 = vsel %vm2912, %v6945, 0
      %v7045 = vsel %vm2912, %v6946, 0
      %v7048 = vsel %vm2912, %v6947, 0
      %v7051 = vsel %vm2912, %v6948, 0
      %v7054 = vsel %vm2912, %v6949, 0
      %7056 = vmatprep.subr.mxu0 0.0
      %7057 = vmatpush1.xpose.msra.mxu0 %v6961
      %7058 = vmatprep.subr.mxu0 0.0
      %7059 = vmatpush1.xpose.msra.mxu0 %v6964
      %7060 = vmatprep.subr.mxu0 0.0
      %7061 = vmatpush1.xpose.msra.mxu0 %v6967
      %7062 = vmatprep.subr.mxu0 0.0
      %7063 = vmatpush1.xpose.msra.mxu0 %v6970
      %7064 = vmatprep.subr.mxu0 0.0
      %7065 = vmatpush1.xpose.msra.mxu0 %v6973
      %7066 = vmatprep.subr.mxu0 0.0
      %7067 = vmatpush1.xpose.msra.mxu0 %v6976
      %7068 = vmatprep.subr.mxu0 0.0
      %7069 = vmatpush1.xpose.msra.mxu0 %v6979
      %7070 = vmatprep.subr.mxu0 0.0
      %7071 = vmatpush1.xpose.msra.mxu0 %v6982
      %7072 = vmatprep.subr.mxu0 0.0
      %7073 = vmatpush1.xpose.msra.mxu0 %v6985
      %7074 = vmatprep.subr.mxu0 0.0
      %7075 = vmatpush1.xpose.msra.mxu0 %v6988
      %7076 = vmatprep.subr.mxu0 0.0
      %7077 = vmatpush1.xpose.msra.mxu0 %v6991
      %7078 = vmatprep.subr.mxu0 0.0
      %7079 = vmatpush1.xpose.msra.mxu0 %v6994
      %7080 = vmatprep.subr.mxu0 0.0
      %7081 = vmatpush1.xpose.msra.mxu0 %v6997
      %7082 = vmatprep.subr.mxu0 0.0
      %7083 = vmatpush1.xpose.msra.mxu0 %v7000
      %7084 = vmatprep.subr.mxu0 0.0
      %7085 = vmatpush1.xpose.msra.mxu0 %v7003
      %7086 = vmatprep.subr.mxu0 0.0
      %7087 = vmatpush1.xpose.msra.mxu0 %v7006
      %7088 = vmatprep.subr.mxu0 0.0
      %7089 = vmatpush1.xpose.msra.mxu0 %v7009
      %7090 = vmatprep.subr.mxu0 0.0
      %7091 = vmatpush1.xpose.msra.mxu0 %v7012
      %7092 = vmatprep.subr.mxu0 0.0
      %7093 = vmatpush1.xpose.msra.mxu0 %v7015
      %7094 = vmatprep.subr.mxu0 0.0
      %7095 = vmatpush1.xpose.msra.mxu0 %v7018
      %7096 = vmatprep.subr.mxu0 0.0
      %7097 = vmatpush1.xpose.msra.mxu0 %v7021
      %7098 = vmatprep.subr.mxu0 0.0
      %7099 = vmatpush1.xpose.msra.mxu0 %v7024
      %7100 = vmatprep.subr.mxu0 0.0
      %7101 = vmatpush1.xpose.msra.mxu0 %v7027
      %7102 = vmatprep.subr.mxu0 0.0
      %7103 = vmatpush1.xpose.msra.mxu0 %v7030
      %7104 = vmatprep.subr.mxu0 0.0
      %7105 = vmatpush1.xpose.msra.mxu0 %v7033
      %7106 = vmatprep.subr.mxu0 0.0
      %7107 = vmatpush1.xpose.msra.mxu0 %v7036
      %7108 = vmatprep.subr.mxu0 0.0
      %7109 = vmatpush1.xpose.msra.mxu0 %v7039
      %7110 = vmatprep.subr.mxu0 0.0
      %7111 = vmatpush1.xpose.msra.mxu0 %v7042
      %7112 = vmatprep.subr.mxu0 0.0
      %7113 = vmatpush1.xpose.msra.mxu0 %v7045
      %7114 = vmatprep.subr.mxu0 0.0
      %7115 = vmatpush1.xpose.msra.mxu0 %v7048
      %7116 = vmatprep.subr.mxu0 0.0
      %7117 = vmatpush1.xpose.msra.mxu0 %v7051
      %7118 = vmatprep.subr.mxu0 0.0
      %7119 = vmatpush1.xpose.msra.mxu0 %v7054
      %7120 = vmatprep.mubr.f32.mxu0 0.0
      %7121 = vmatmul.mubr.f32.gmra.mrb[0].mxu0 %v6958
      %v7122 = vpop.f32.mrb[0].mxu0
      %v7123 = vadd.f32 0.0, %v7122
      %v7124 = vpop.f32.mrb[0].mxu0
      %v7125 = vadd.f32 0.0, %v7124
      %7126 = vdwg.mxu0
      %7127 = vst [vmem:[%s224] sm:$0xff] %v7123
      %7128 = vst [vmem:[%s224 + $0x8] sm:$0xff] %v7125
      %p7129 = scmp.lt.s32.totalorder %s16, 1
      %s7130 = scalar_select %p7129, %s16, 1
      %s7131 = smul.addr %s7130, 2
      %s7132 = smul.addr %s7131, 8
      %s7133 = scalar_lea.vmem %s5, %s7132
      // Predicated region
      $region41: #{residual_block_pallas.1} parent=39 // pred_check
        %p7134 = pneg %p144
      $region42: #{residual_block_pallas.1} parent=39 // pred_check_branch
        %7136 = sbr.rel (%p7134) target = $region44
      $region43: #{residual_block_pallas.1} parent=39 // pred_region
        _
      $region44: #{residual_block_pallas.1} parent=39 // pred_fallthru
        _
    $region40: #{residual_block_pallas.1} parent=5 // pred_fallthru
      _
    %p7137 = scmp.le.s32.totalorder 2, %s11
    // Predicated region
    $region45: #{residual_block_pallas.1} parent=5 // pred_check
      %p7138 = pneg %p7137
    $region46: #{residual_block_pallas.1} parent=5 // pred_check_branch
      %7140 = sbr.rel (%p7138) target = $region48
    $region47: #{residual_block_pallas.1} parent=5 // pred_region
      %s7141 = ssub.s32 %s11, 2
      // Predicated region
      $region49: #{residual_block_pallas.1} parent=47 // pred_check
        %p7142 = pneg %p150
      $region50: #{residual_block_pallas.1} parent=47 // pred_check_branch
        %7144 = sbr.rel (%p7142) target = $region52
      $region51: #{residual_block_pallas.1} parent=47 // pred_region
        %p7145 = scmp.lt.s32.totalorder %s17, 1
        %s7146 = scalar_select %p7145, %s17, 1
        %s7147 = smul.addr %s7146, 2
        %s7148 = smul.addr %s7147, 8
        %s7149 = scalar_lea.vmem %s5, %s7148
      $region52: #{residual_block_pallas.1} parent=47 // pred_fallthru
        _
    $region48: #{residual_block_pallas.1} parent=5 // pred_fallthru
      _
  $region6: #{residual_block_pallas.1} parent=0 // loop_footer
    %s15 = sadd.s32 1, %s11
  $region7: #{residual_block_pallas.1} parent=0 // loop_footer_branch
    %10 = sbr.rel target = $region3
  $region8: #{residual_block_pallas.1} parent=0 // loop_exit
    _

</llo_original>
